<compile_context>
chip_gen: v7x
topology: tpu7x:2x2x1
jax: 0.10.0
libtpu: 0.0.40
codegen_flags: <defaults>
</compile_context>

<pallas_src>
import jax
import jax.numpy as jnp
from jax import lax
from jax.experimental import pallas as pl
from jax.experimental.pallas import tpu as pltpu


def _round_up(x, m):
    return (x + m - 1) // m * m


def _cdiv(a, b):
    return -(-a // b)


def _cond_aug_kernel(x_ref, w_ref, b_ref, eps_ref, cond_ref, mu_ref, std_ref):
    """Fused Linear + GLU + reparameterization for one batch tile."""
    four_c = w_ref.shape[1]
    two_c = four_c // 2
    c = two_c // 2

    # bf16 x bf16 matmul on the MXU with f32 accumulation; bias added once on
    # the f32 accumulator.
    y = jnp.dot(x_ref[...], w_ref[...], preferred_element_type=jnp.float32)
    y = y + b_ref[...]  # b is (1, 4C) f32, broadcast over the batch tile

    # GLU along features: first half gated by sigmoid(second half).  Splits
    # land on multiples of 128 lanes, so these are full-vreg slices.
    glu = y[:, :two_c] * jax.nn.sigmoid(y[:, two_c:])
    mu = glu[:, :c]
    std = glu[:, c:]

    eps = eps_ref[...].astype(jnp.float32)
    cond_ref[...] = (mu + eps * std).astype(cond_ref.dtype)
    mu_ref[...] = mu.astype(mu_ref.dtype)
    std_ref[...] = std.astype(std_ref.dtype)


def conditioning_augmentation(emb, w, b, key, *, block_batch=256):
    """ConditioningAugmentation forward.

    Args:
      emb:  (B, E) caption embeddings, float32.
      w:    (E, 4*C) Linear weight stored input-major (i.e. PyTorch weight.T).
      b:    (4*C,)   Linear bias.
      key:  jax PRNG key for the Gaussian noise eps ~ N(0, 1).

    Returns:
      (cond, mu, std), each (B, C) float32.
    """
    batch, emb_dim = emb.shape
    four_c = w.shape[1]
    assert w.shape[0] == emb_dim and b.shape == (four_c,)
    assert four_c % 4 == 0
    cond_dim = four_c // 4
    # Keep GLU / mu-std splits lane-aligned (full-vreg slices).
    assert cond_dim % 128 == 0, "cond_dim must be a multiple of 128"
    # TODO(synk): support non-128-multiple cond_dim via lane-masked splits.

    # Batch tile: once batch >= 16 force >= 2 tiles so the "parallel" batch
    # axis can shard across v7x's two TensorCores; cap at block_batch (256
    # rows amortizes per-step overhead on v6e while staying far under VMEM).
    if batch >= 16:
        blk_b = min(_round_up(block_batch, 8), _round_up(_cdiv(batch, 2), 8))
    else:
        blk_b = _round_up(batch, 8)
    b_pad = _round_up(batch, blk_b)
    e_pad = _round_up(emb_dim, 128)

    # bf16 activations/weights: full-rate MXU on v5e/v6e/v7x and half the
    # dominant DMA bytes (resident W + streamed x).  f32 accumulation in the
    # kernel keeps accuracy well inside 2e-2.  In a training loop the weight
    # cast/pad should be hoisted out of the per-step path.
    x_p = emb.astype(jnp.bfloat16)
    w_p = w.astype(jnp.bfloat16)
    # Skip pad copies entirely when shapes are already aligned.
    if b_pad != batch or e_pad != emb_dim:
        x_p = jnp.pad(x_p, ((0, b_pad - batch), (0, e_pad - emb_dim)))
    if e_pad != emb_dim:
        w_p = jnp.pad(w_p, ((0, e_pad - emb_dim), (0, 0)))
    b2d = b.astype(jnp.float32).reshape(1, four_c)

    # eps ~ N(0, 1): generated with jax.random (portable across TPU
    # generations and interpret mode; the TPU hardware PRNG has no CPU
    # lowering).  Padded rows are zero and sliced off below.
    eps = jax.random.normal(key, (batch, cond_dim), jnp.float32)
    if b_pad != batch:
        eps = jnp.pad(eps, ((0, b_pad - batch), (0, 0)))

    grid = (b_pad // blk_b,)
    out_shape = tuple(
        jax.ShapeDtypeStruct((b_pad, cond_dim), jnp.float32) for _ in range(3)
    )

    # Per-tile VMEM at defaults (blk_b=256, E=1024, 4C=512):
    #   x 512 KiB x2 buf + W 1 MiB (single-buffered) + eps/outputs ~1 MiB
    # => ~3 MiB, far under every generation's scoped-VMEM default.
    # TODO(synk): for very large E*4C (W approaching ~1/4 of v7x's 64 MiB
    # VMEM) add a K-reduction grid axis ("arbitrary", last) with an f32
    # accumulator instead of holding all of W resident.
    def _specs(single_buffer_resident):
        if single_buffer_resident and hasattr(pl, "Buffered"):
            def resident(shape):
                # Grid-invariant inputs: no re-fetch, so one VMEM buffer.
                return pl.BlockSpec(shape, lambda i: (0, 0),
                                    pipeline_mode=pl.Buffered(1))
        else:
            def resident(shape):
                return pl.BlockSpec(shape, lambda i: (0, 0))
        in_specs = [
            pl.BlockSpec((blk_b, e_pad), lambda i: (i, 0)),     # x tile (streamed)
            resident((e_pad, four_c)),                          # W resident
            resident((1, four_c)),                              # bias resident
            pl.BlockSpec((blk_b, cond_dim), lambda i: (i, 0)),  # eps tile
        ]
        out_spec = pl.BlockSpec((blk_b, cond_dim), lambda i: (i, 0))
        return in_specs, (out_spec, out_spec, out_spec)

    def _run(single_buffer_resident):
        in_specs, out_specs = _specs(single_buffer_resident)
        return pl.pallas_call(
            _cond_aug_kernel,
            out_shape=out_shape,
            grid=grid,
            in_specs=in_specs,
            out_specs=out_specs,
            compiler_params=pltpu.CompilerParams(
                dimension_semantics=("parallel",)),
        )(x_p, w_p, b2d, eps)

    try:
        cond, mu, std = _run(True)
    except Exception:
        # pipeline_mode / Buffered(1) not supported on this jax version or
        # backend path: fall back to default double-buffered resident inputs.
        cond, mu, std = _run(False)

    return cond[:batch], mu[:batch], std[:batch]


if __name__ == "__main__":
    key = jax.random.PRNGKey(0)
    kx, kw, kb, keps = jax.random.split(key, 4)

    # Module defaults: emb_dim=1024, cond_dim=128; small batch.
    batch, emb_dim, cond_dim = 4, 1024, 128
    emb = jax.random.normal(kx, (batch, emb_dim), jnp.float32)
    # nn.Linear default init U(-1/sqrt(fan_in), 1/sqrt(fan_in)); weight kept
    # transposed as (E, 4C) so the kernel computes emb @ W directly.
    bound = 1.0 / (emb_dim ** 0.5)
    w = jax.random.uniform(kw, (emb_dim, 4 * cond_dim), jnp.float32, -bound, bound)
    b = jax.random.uniform(kb, (4 * cond_dim,), jnp.float32, -bound, bound)

    cond, mu, std = conditioning_augmentation(emb, w, b, keps)
    cond, mu, std = jax.block_until_ready((cond, mu, std))

    # Plain-JAX reference: Linear + GLU + split in f32, with the same eps.
    y = jnp.dot(emb, w, precision=lax.Precision.HIGHEST) + b
    glu = y[:, : 2 * cond_dim] * jax.nn.sigmoid(y[:, 2 * cond_dim:])
    mu_ref, std_ref = glu[:, :cond_dim], glu[:, cond_dim:]
    eps_ref = jax.random.normal(keps, (batch, cond_dim), jnp.float32)
    cond_ref = mu_ref + eps_ref * std_ref

    assert cond.shape == (batch, cond_dim)
    assert mu.shape == (batch, cond_dim) and std.shape == (batch, cond_dim)
    assert bool(jnp.all(jnp.isfinite(cond)))
    assert jnp.allclose(mu, mu_ref, atol=2e-2, rtol=2e-2), "mu mismatch"
    assert jnp.allclose(std, std_ref, atol=2e-2, rtol=2e-2), "std mismatch"
    assert jnp.allclose(cond, cond_ref, atol=3e-2, rtol=3e-2), "cond mismatch"

    print("KERNEL_OK")
</pallas_src>

<mosaic_0001>
module attributes {stable_mosaic.version = 11 : i64} {
  func.func @_cond_aug_kernel(%arg0: i32, %arg1: memref<8x1024xbf16, #tpu.memory_space<vmem>>, %arg2: memref<1024x512xbf16, #tpu.memory_space<vmem>>, %arg3: memref<1x512xf32, #tpu.memory_space<vmem>>, %arg4: memref<8x128xf32, #tpu.memory_space<vmem>>, %arg5: memref<8x128xf32, #tpu.memory_space<vmem>>, %arg6: memref<8x128xf32, #tpu.memory_space<vmem>>, %arg7: memref<8x128xf32, #tpu.memory_space<vmem>>) attributes {dimension_semantics = [#tpu.dimension_semantics<parallel>], iteration_bounds = array<i64: 1>, scalar_prefetch = 0 : i64, scratch_operands = 0 : i64, tpu.core_type = #tpu.core_type<tc>, window_params = [{transform_indices = @transform_0, window_bounds = array<i64: 8, 1024>}, {pipeline_mode = #tpu.pipeline_mode<synchronous>, transform_indices = @transform_1, window_bounds = array<i64: 1024, 512>}, {pipeline_mode = #tpu.pipeline_mode<synchronous>, transform_indices = @transform_2, window_bounds = array<i64: 1, 512>}, {transform_indices = @transform_3, window_bounds = array<i64: 8, 128>}, {transform_indices = @transform_4, window_bounds = array<i64: 8, 128>}, {transform_indices = @transform_5, window_bounds = array<i64: 8, 128>}, {transform_indices = @transform_6, window_bounds = array<i64: 8, 128>}]} {
    %c0 = arith.constant 0 : index
    %c0_0 = arith.constant 0 : index
    %0 = vector.load %arg1[%c0, %c0_0] : memref<8x1024xbf16, #tpu.memory_space<vmem>>, vector<8x1024xbf16>
    %c0_1 = arith.constant 0 : index
    %c0_2 = arith.constant 0 : index
    %1 = vector.load %arg2[%c0_1, %c0_2] : memref<1024x512xbf16, #tpu.memory_space<vmem>>, vector<1024x512xbf16>
    %cst = arith.constant dense<0.000000e+00> : vector<8x512xf32>
    %2 = tpu.matmul %0, %1, %cst {dimension_numbers = #tpu.dot_dimension_numbers<[1], [0], [0], [1], [0, 0, 1, 1], [], []>} : vector<8x1024xbf16>, vector<1024x512xbf16>, vector<8x512xf32> -> vector<8x512xf32>
    %c0_3 = arith.constant 0 : index
    %c0_4 = arith.constant 0 : index
    %3 = vector.load %arg3[%c0_3, %c0_4] : memref<1x512xf32, #tpu.memory_space<vmem>>, vector<1x512xf32>
    %4 = vector.broadcast %3 : vector<1x512xf32> to vector<8x512xf32>
    %5 = arith.addf %2, %4 : vector<8x512xf32>
    %6 = vector.extract_strided_slice %5 {offsets = [0, 0], sizes = [8, 256], strides = [1, 1]} : vector<8x512xf32> to vector<8x256xf32>
    %7 = vector.extract_strided_slice %5 {offsets = [0, 256], sizes = [8, 256], strides = [1, 1]} : vector<8x512xf32> to vector<8x256xf32>
    %8 = arith.negf %7 : vector<8x256xf32>
    %9 = math.exp %8 : vector<8x256xf32>
    %cst_5 = arith.constant 1.000000e+00 : f32
    %10 = vector.broadcast %cst_5 : f32 to vector<8x256xf32>
    %11 = arith.addf %10, %9 : vector<8x256xf32>
    %12 = arith.divf %10, %11 : vector<8x256xf32>
    %13 = arith.mulf %6, %12 : vector<8x256xf32>
    %14 = vector.extract_strided_slice %13 {offsets = [0, 0], sizes = [8, 128], strides = [1, 1]} : vector<8x256xf32> to vector<8x128xf32>
    %15 = vector.extract_strided_slice %13 {offsets = [0, 128], sizes = [8, 128], strides = [1, 1]} : vector<8x256xf32> to vector<8x128xf32>
    %c0_6 = arith.constant 0 : index
    %c0_7 = arith.constant 0 : index
    %16 = vector.load %arg4[%c0_6, %c0_7] : memref<8x128xf32, #tpu.memory_space<vmem>>, vector<8x128xf32>
    %17 = arith.mulf %16, %15 : vector<8x128xf32>
    %18 = arith.addf %14, %17 : vector<8x128xf32>
    %c0_8 = arith.constant 0 : index
    %c0_9 = arith.constant 0 : index
    %19 = vector.load %arg5[%c0_8, %c0_9] : memref<8x128xf32, #tpu.memory_space<vmem>>, vector<8x128xf32>
    tpu.vector_store %arg5[%c0_8, %c0_9], %18 {strides = array<i32>} : memref<8x128xf32, #tpu.memory_space<vmem>>, vector<8x128xf32>,
    %c0_10 = arith.constant 0 : index
    %c0_11 = arith.constant 0 : index
    %20 = vector.load %arg6[%c0_10, %c0_11] : memref<8x128xf32, #tpu.memory_space<vmem>>, vector<8x128xf32>
    tpu.vector_store %arg6[%c0_10, %c0_11], %14 {strides = array<i32>} : memref<8x128xf32, #tpu.memory_space<vmem>>, vector<8x128xf32>,
    %c0_12 = arith.constant 0 : index
    %c0_13 = arith.constant 0 : index
    %21 = vector.load %arg7[%c0_12, %c0_13] : memref<8x128xf32, #tpu.memory_space<vmem>>, vector<8x128xf32>
    tpu.vector_store %arg7[%c0_12, %c0_13], %15 {strides = array<i32>} : memref<8x128xf32, #tpu.memory_space<vmem>>, vector<8x128xf32>,
    return
  }
  func.func @transform_0(%arg0: i32) -> (i32, i32) {
    %c0_i32 = arith.constant 0 : i32
    %c0_i32_0 = arith.constant 0 : i32
    return %arg0, %c0_i32 : i32, i32
  }
  func.func @transform_1(%arg0: i32) -> (i32, i32) {
    %c0_i32 = arith.constant 0 : i32
    %c0_i32_0 = arith.constant 0 : i32
    %c0_i32_1 = arith.constant 0 : i32
    return %c0_i32, %c0_i32_0 : i32, i32
  }
  func.func @transform_2(%arg0: i32) -> (i32, i32) {
    %c0_i32 = arith.constant 0 : i32
    %c0_i32_0 = arith.constant 0 : i32
    %c0_i32_1 = arith.constant 0 : i32
    return %c0_i32, %c0_i32_0 : i32, i32
  }
  func.func @transform_3(%arg0: i32) -> (i32, i32) {
    %c0_i32 = arith.constant 0 : i32
    %c0_i32_0 = arith.constant 0 : i32
    return %arg0, %c0_i32 : i32, i32
  }
  func.func @transform_4(%arg0: i32) -> (i32, i32) {
    %c0_i32 = arith.constant 0 : i32
    %c0_i32_0 = arith.constant 0 : i32
    return %arg0, %c0_i32 : i32, i32
  }
  func.func @transform_5(%arg0: i32) -> (i32, i32) {
    %c0_i32 = arith.constant 0 : i32
    %c0_i32_0 = arith.constant 0 : i32
    return %arg0, %c0_i32 : i32, i32
  }
  func.func @transform_6(%arg0: i32) -> (i32, i32) {
    %c0_i32 = arith.constant 0 : i32
    %c0_i32_0 = arith.constant 0 : i32
    return %arg0, %c0_i32 : i32, i32
  }
}

module attributes {stable_mosaic.version = 11 : i64} {
  func.func @_cond_aug_kernel(%arg0: i32, %arg1: memref<8x1024xbf16, #tpu.memory_space<vmem>>, %arg2: memref<1024x512xbf16, #tpu.memory_space<vmem>>, %arg3: memref<1x512xf32, #tpu.memory_space<vmem>>, %arg4: memref<8x128xf32, #tpu.memory_space<vmem>>, %arg5: memref<8x128xf32, #tpu.memory_space<vmem>>, %arg6: memref<8x128xf32, #tpu.memory_space<vmem>>, %arg7: memref<8x128xf32, #tpu.memory_space<vmem>>) attributes {dimension_semantics = [#tpu.dimension_semantics<parallel>], iteration_bounds = array<i64: 1>, scalar_prefetch = 0 : i64, scratch_operands = 0 : i64, tpu.core_type = #tpu.core_type<tc>, window_params = [{transform_indices = @transform_0, window_bounds = array<i64: 8, 1024>}, {pipeline_mode = #tpu.pipeline_mode<synchronous>, transform_indices = @transform_1, window_bounds = array<i64: 1024, 512>}, {pipeline_mode = #tpu.pipeline_mode<synchronous>, transform_indices = @transform_2, window_bounds = array<i64: 1, 512>}, {transform_indices = @transform_3, window_bounds = array<i64: 8, 128>}, {transform_indices = @transform_4, window_bounds = array<i64: 8, 128>}, {transform_indices = @transform_5, window_bounds = array<i64: 8, 128>}, {transform_indices = @transform_6, window_bounds = array<i64: 8, 128>}]} {
    %c0 = arith.constant 0 : index
    %c0_0 = arith.constant 0 : index
    %0 = vector.load %arg1[%c0, %c0_0] : memref<8x1024xbf16, #tpu.memory_space<vmem>>, vector<8x1024xbf16>
    %c0_1 = arith.constant 0 : index
    %c0_2 = arith.constant 0 : index
    %1 = vector.load %arg2[%c0_1, %c0_2] : memref<1024x512xbf16, #tpu.memory_space<vmem>>, vector<1024x512xbf16>
    %cst = arith.constant dense<0.000000e+00> : vector<8x512xf32>
    %2 = tpu.matmul %0, %1, %cst {dimension_numbers = #tpu.dot_dimension_numbers<[1], [0], [0], [1], [0, 0, 1, 1], [], []>} : vector<8x1024xbf16>, vector<1024x512xbf16>, vector<8x512xf32> -> vector<8x512xf32>
    %c0_3 = arith.constant 0 : index
    %c0_4 = arith.constant 0 : index
    %3 = vector.load %arg3[%c0_3, %c0_4] : memref<1x512xf32, #tpu.memory_space<vmem>>, vector<1x512xf32>
    %4 = vector.broadcast %3 : vector<1x512xf32> to vector<8x512xf32>
    %5 = arith.addf %2, %4 : vector<8x512xf32>
    %6 = vector.extract_strided_slice %5 {offsets = [0, 0], sizes = [8, 256], strides = [1, 1]} : vector<8x512xf32> to vector<8x256xf32>
    %7 = vector.extract_strided_slice %5 {offsets = [0, 256], sizes = [8, 256], strides = [1, 1]} : vector<8x512xf32> to vector<8x256xf32>
    %8 = arith.negf %7 : vector<8x256xf32>
    %9 = math.exp %8 : vector<8x256xf32>
    %cst_5 = arith.constant 1.000000e+00 : f32
    %10 = vector.broadcast %cst_5 : f32 to vector<8x256xf32>
    %11 = arith.addf %10, %9 : vector<8x256xf32>
    %12 = arith.divf %10, %11 : vector<8x256xf32>
    %13 = arith.mulf %6, %12 : vector<8x256xf32>
    %14 = vector.extract_strided_slice %13 {offsets = [0, 0], sizes = [8, 128], strides = [1, 1]} : vector<8x256xf32> to vector<8x128xf32>
    %15 = vector.extract_strided_slice %13 {offsets = [0, 128], sizes = [8, 128], strides = [1, 1]} : vector<8x256xf32> to vector<8x128xf32>
    %c0_6 = arith.constant 0 : index
    %c0_7 = arith.constant 0 : index
    %16 = vector.load %arg4[%c0_6, %c0_7] : memref<8x128xf32, #tpu.memory_space<vmem>>, vector<8x128xf32>
    %17 = arith.mulf %16, %15 : vector<8x128xf32>
    %18 = arith.addf %14, %17 : vector<8x128xf32>
    %c0_8 = arith.constant 0 : index
    %c0_9 = arith.constant 0 : index
    %19 = vector.load %arg5[%c0_8, %c0_9] : memref<8x128xf32, #tpu.memory_space<vmem>>, vector<8x128xf32>
    tpu.vector_store %arg5[%c0_8, %c0_9], %18 {strides = array<i32>} : memref<8x128xf32, #tpu.memory_space<vmem>>, vector<8x128xf32>,
    %c0_10 = arith.constant 0 : index
    %c0_11 = arith.constant 0 : index
    %20 = vector.load %arg6[%c0_10, %c0_11] : memref<8x128xf32, #tpu.memory_space<vmem>>, vector<8x128xf32>
    tpu.vector_store %arg6[%c0_10, %c0_11], %14 {strides = array<i32>} : memref<8x128xf32, #tpu.memory_space<vmem>>, vector<8x128xf32>,
    %c0_12 = arith.constant 0 : index
    %c0_13 = arith.constant 0 : index
    %21 = vector.load %arg7[%c0_12, %c0_13] : memref<8x128xf32, #tpu.memory_space<vmem>>, vector<8x128xf32>
    tpu.vector_store %arg7[%c0_12, %c0_13], %15 {strides = array<i32>} : memref<8x128xf32, #tpu.memory_space<vmem>>, vector<8x128xf32>,
    return
  }
  func.func @transform_0(%arg0: i32) -> (i32, i32) {
    %c0_i32 = arith.constant 0 : i32
    %c0_i32_0 = arith.constant 0 : i32
    return %arg0, %c0_i32 : i32, i32
  }
  func.func @transform_1(%arg0: i32) -> (i32, i32) {
    %c0_i32 = arith.constant 0 : i32
    %c0_i32_0 = arith.constant 0 : i32
    %c0_i32_1 = arith.constant 0 : i32
    return %c0_i32, %c0_i32_0 : i32, i32
  }
  func.func @transform_2(%arg0: i32) -> (i32, i32) {
    %c0_i32 = arith.constant 0 : i32
    %c0_i32_0 = arith.constant 0 : i32
    %c0_i32_1 = arith.constant 0 : i32
    return %c0_i32, %c0_i32_0 : i32, i32
  }
  func.func @transform_3(%arg0: i32) -> (i32, i32) {
    %c0_i32 = arith.constant 0 : i32
    %c0_i32_0 = arith.constant 0 : i32
    return %arg0, %c0_i32 : i32, i32
  }
  func.func @transform_4(%arg0: i32) -> (i32, i32) {
    %c0_i32 = arith.constant 0 : i32
    %c0_i32_0 = arith.constant 0 : i32
    return %arg0, %c0_i32 : i32, i32
  }
  func.func @transform_5(%arg0: i32) -> (i32, i32) {
    %c0_i32 = arith.constant 0 : i32
    %c0_i32_0 = arith.constant 0 : i32
    return %arg0, %c0_i32 : i32, i32
  }
  func.func @transform_6(%arg0: i32) -> (i32, i32) {
    %c0_i32 = arith.constant 0 : i32
    %c0_i32_0 = arith.constant 0 : i32
    return %arg0, %c0_i32 : i32, i32
  }
}

</mosaic_0001>

<llo_original>
// kernel: tpu_custom_call.1
$region0: #{tpu_custom_call.1}
  #allocation0 [shape = 'u32[]', space=smem, size = 0x4, offset = 0x4, fixed_abs, tag = 'smem constant byte address 0x4 - core index']
  #allocation1 [shape = 'u32[144,128]{1,0:T(1,128)}', space=vmem, size = 0x12000, scoped, tag = 'internal scratch']
  %s0 = inlined_call_operand.hbm [shape: bf16[8,1024], index: 0, kind: input, shape index: {}]
  %s1 = inlined_call_operand.hbm [shape: bf16[1024,512], index: 1, kind: input, shape index: {}]
  %s2 = inlined_call_operand.hbm [shape: f32[1,512], index: 2, kind: input, shape index: {}]
  %s3 = inlined_call_operand.vmem [shape: f32[8,128], index: 3, kind: input, shape index: {}]
  %s4 = inlined_call_operand.hbm [shape: f32[8,128], index: 4, kind: output, shape index: {0}]
  %s5 = inlined_call_operand.hbm [shape: f32[8,128], index: 5, kind: output, shape index: {1}]
  %s6 = inlined_call_operand.hbm [shape: f32[8,128], index: 6, kind: output, shape index: {2}]
  %7 = xla_tuple %s4, %s5, %s6
  %s8 = sld [smem:[#allocation0]]
  $region54: #{tpu_custom_call.1} parent=0
    _
  %s10 = ssub.s32 1, %s8
  %s11 = scalar_select 0, %s10, %s8
  $region1: #{tpu_custom_call.1} parent=0
    #allocation2 [shape = 'u8[16384]{0}', space=vmem, size = 0x4000, scoped, tag = 'input window, operand 0, single buffered']
    #allocation3 [shape = 's32[1]{0}', space=sflag, size = 0x4, scoped, tag = 'scoped memory for tpu_custom_call.1']
    #allocation4 [shape = 's32[1]{0}', space=sflag, size = 0x4, scoped, tag = 'scoped memory for tpu_custom_call.1']
    #allocation5 [shape = 'u8[1048576]{0}', space=vmem, size = 0x100000, scoped, tag = 'input window, operand 1, single buffered']
    #allocation6 [shape = 's32[1]{0}', space=sflag, size = 0x4, scoped, tag = 'scoped memory for tpu_custom_call.1']
    #allocation7 [shape = 'u8[2048]{0}', space=vmem, size = 0x800, scoped, tag = 'input window, operand 2, single buffered']
    #allocation8 [shape = 'u8[4096]{0}', space=vmem, size = 0x1000, scoped, tag = 'output window, operand 0, single buffered']
    #allocation9 [shape = 'u8[4096]{0}', space=vmem, size = 0x1000, scoped, tag = 'output window, operand 1, single buffered']
    #allocation10 [shape = 's32[1]{0}', space=sflag, size = 0x4, scoped, tag = 'scoped memory for tpu_custom_call.1']
    #allocation11 [shape = 'u8[4096]{0}', space=vmem, size = 0x1000, scoped, tag = 'output window, operand 2, single buffered']
    %12 = vsyncpa [#allocation3], 0
    %13 = vsyncpa [#allocation6], 0
    %14 = vsyncpa [#allocation4], 0
    %15 = vsyncpa [#allocation10], 0
    // Predicated region
    $region2: #{tpu_custom_call.1} parent=1 // pred_check
      _
    $region3: #{tpu_custom_call.1} parent=1 // pred_check_branch
      %17 = sbr.rel (0) target = $region5
    $region4: #{tpu_custom_call.1} parent=1 // pred_region
      %s19 = ssub.s32 512, 512
      %20 = vsyncadd [#allocation3], %s19
      %s22 = sshll.u32 [#allocation2], 4
      %s23 = int_to_ptr.vmem [resolvable:$true] %s22
      %25 = dma.hbm_to_vmem [thread:$0]  %s0, 512, %s23, [#allocation3]
    $region5: #{tpu_custom_call.1} parent=1 // pred_fallthru
      _
    // Predicated region
    $region6: #{tpu_custom_call.1} parent=1 // pred_check
      _
    $region7: #{tpu_custom_call.1} parent=1 // pred_check_branch
      %27 = sbr.rel (0) target = $region9
    $region8: #{tpu_custom_call.1} parent=1 // pred_region
      %s29 = ssub.s32 32768, 32768
      %30 = vsyncadd [#allocation6], %s29
      %s31 = sshll.u32 [#allocation5], 4
      %s32 = int_to_ptr.vmem [resolvable:$true] %s31
      %37 = dma.hbm_to_vmem [thread:$0]  %s1, 32768, %s32, [#allocation6], 256, 256, 16
    $region9: #{tpu_custom_call.1} parent=1 // pred_fallthru
      _
    // Predicated region
    $region10: #{tpu_custom_call.1} parent=1 // pred_check
      _
    $region11: #{tpu_custom_call.1} parent=1 // pred_check_branch
      %39 = sbr.rel (0) target = $region13
    $region12: #{tpu_custom_call.1} parent=1 // pred_region
      %s41 = ssub.s32 64, 64
      %42 = vsyncadd [#allocation6], %s41
      %s44 = sshll.u32 [#allocation7], 4
      %s45 = int_to_ptr.vmem [resolvable:$true] %s44
      %47 = dma.hbm_to_vmem [thread:$0]  %s2, 64, %s45, [#allocation6]
    $region13: #{tpu_custom_call.1} parent=1 // pred_fallthru
      _
    // Predicated region
    $region14: #{tpu_custom_call.1} parent=1 // pred_check
      _
    $region15: #{tpu_custom_call.1} parent=1 // pred_check_branch
      %49 = sbr.rel (0) target = $region17
    $region16: #{tpu_custom_call.1} parent=1 // pred_region
      _
    $region17: #{tpu_custom_call.1} parent=1 // pred_fallthru
      _
    // Predicated region
    $region18: #{tpu_custom_call.1} parent=1 // pred_check
      _
    $region19: #{tpu_custom_call.1} parent=1 // pred_check_branch
      %51 = sbr.rel (0) target = $region21
    $region20: #{tpu_custom_call.1} parent=1 // pred_region
      %52 = dma.done [#allocation3], 512
    $region21: #{tpu_custom_call.1} parent=1 // pred_fallthru
      _
    // Predicated region
    $region22: #{tpu_custom_call.1} parent=1 // pred_check
      _
    $region23: #{tpu_custom_call.1} parent=1 // pred_check_branch
      %54 = sbr.rel (0) target = $region25
    $region24: #{tpu_custom_call.1} parent=1 // pred_region
      %55 = dma.done [#allocation6], 32768
    $region25: #{tpu_custom_call.1} parent=1 // pred_fallthru
      _
    // Predicated region
    $region26: #{tpu_custom_call.1} parent=1 // pred_check
      _
    $region27: #{tpu_custom_call.1} parent=1 // pred_check_branch
      %57 = sbr.rel (0) target = $region29
    $region28: #{tpu_custom_call.1} parent=1 // pred_region
      %58 = dma.done [#allocation6], 64
    $region29: #{tpu_custom_call.1} parent=1 // pred_fallthru
      _
    %v59 = vld [vmem:[#allocation2] sm:$0xff]
    %v60 = vld [vmem:[#allocation2 + $0x8] sm:$0xff]
    %v61 = vld [vmem:[#allocation2 + $0x10] sm:$0xff]
    %v62 = vld [vmem:[#allocation2 + $0x18] sm:$0xff]
    %v63 = vld [vmem:[#allocation5] sm:$0xff]
    %v64 = vld [vmem:[#allocation5 + $0x8] sm:$0xff]
    %v65 = vld [vmem:[#allocation5 + $0x10] sm:$0xff]
    %v66 = vld [vmem:[#allocation5 + $0x18] sm:$0xff]
    %v67 = vld [vmem:[#allocation5 + $0x20] sm:$0xff]
    %v68 = vld [vmem:[#allocation5 + $0x28] sm:$0xff]
    %v69 = vld [vmem:[#allocation5 + $0x30] sm:$0xff]
    %v70 = vld [vmem:[#allocation5 + $0x38] sm:$0xff]
    %v71 = vld [vmem:[#allocation5 + $0x40] sm:$0xff]
    %v72 = vld [vmem:[#allocation5 + $0x48] sm:$0xff]
    %v73 = vld [vmem:[#allocation5 + $0x50] sm:$0xff]
    %v74 = vld [vmem:[#allocation5 + $0x58] sm:$0xff]
    %v75 = vld [vmem:[#allocation5 + $0x60] sm:$0xff]
    %v76 = vld [vmem:[#allocation5 + $0x68] sm:$0xff]
    %v77 = vld [vmem:[#allocation5 + $0x70] sm:$0xff]
    %v78 = vld [vmem:[#allocation5 + $0x78] sm:$0xff]
    %v79 = vld [vmem:[#allocation5 + $0x80] sm:$0xff]
    %v80 = vld [vmem:[#allocation5 + $0x88] sm:$0xff]
    %v81 = vld [vmem:[#allocation5 + $0x90] sm:$0xff]
    %v82 = vld [vmem:[#allocation5 + $0x98] sm:$0xff]
    %v83 = vld [vmem:[#allocation5 + $0xa0] sm:$0xff]
    %v84 = vld [vmem:[#allocation5 + $0xa8] sm:$0xff]
    %v85 = vld [vmem:[#allocation5 + $0xb0] sm:$0xff]
    %v86 = vld [vmem:[#allocation5 + $0xb8] sm:$0xff]
    %v87 = vld [vmem:[#allocation5 + $0xc0] sm:$0xff]
    %v88 = vld [vmem:[#allocation5 + $0xc8] sm:$0xff]
    %v89 = vld [vmem:[#allocation5 + $0xd0] sm:$0xff]
    %v90 = vld [vmem:[#allocation5 + $0xd8] sm:$0xff]
    %v91 = vld [vmem:[#allocation5 + $0xe0] sm:$0xff]
    %v92 = vld [vmem:[#allocation5 + $0xe8] sm:$0xff]
    %v93 = vld [vmem:[#allocation5 + $0xf0] sm:$0xff]
    %v94 = vld [vmem:[#allocation5 + $0xf8] sm:$0xff]
    %v95 = vld [vmem:[#allocation5 + $0x100] sm:$0xff]
    %v96 = vld [vmem:[#allocation5 + $0x108] sm:$0xff]
    %v97 = vld [vmem:[#allocation5 + $0x110] sm:$0xff]
    %v98 = vld [vmem:[#allocation5 + $0x118] sm:$0xff]
    %v99 = vld [vmem:[#allocation5 + $0x120] sm:$0xff]
    %v100 = vld [vmem:[#allocation5 + $0x128] sm:$0xff]
    %v101 = vld [vmem:[#allocation5 + $0x130] sm:$0xff]
    %v102 = vld [vmem:[#allocation5 + $0x138] sm:$0xff]
    %v103 = vld [vmem:[#allocation5 + $0x140] sm:$0xff]
    %v104 = vld [vmem:[#allocation5 + $0x148] sm:$0xff]
    %v105 = vld [vmem:[#allocation5 + $0x150] sm:$0xff]
    %v106 = vld [vmem:[#allocation5 + $0x158] sm:$0xff]
    %v107 = vld [vmem:[#allocation5 + $0x160] sm:$0xff]
    %v108 = vld [vmem:[#allocation5 + $0x168] sm:$0xff]
    %v109 = vld [vmem:[#allocation5 + $0x170] sm:$0xff]
    %v110 = vld [vmem:[#allocation5 + $0x178] sm:$0xff]
    %v111 = vld [vmem:[#allocation5 + $0x180] sm:$0xff]
    %v112 = vld [vmem:[#allocation5 + $0x188] sm:$0xff]
    %v113 = vld [vmem:[#allocation5 + $0x190] sm:$0xff]
    %v114 = vld [vmem:[#allocation5 + $0x198] sm:$0xff]
    %v115 = vld [vmem:[#allocation5 + $0x1a0] sm:$0xff]
    %v116 = vld [vmem:[#allocation5 + $0x1a8] sm:$0xff]
    %v117 = vld [vmem:[#allocation5 + $0x1b0] sm:$0xff]
    %v118 = vld [vmem:[#allocation5 + $0x1b8] sm:$0xff]
    %v119 = vld [vmem:[#allocation5 + $0x1c0] sm:$0xff]
    %v120 = vld [vmem:[#allocation5 + $0x1c8] sm:$0xff]
    %v121 = vld [vmem:[#allocation5 + $0x1d0] sm:$0xff]
    %v122 = vld [vmem:[#allocation5 + $0x1d8] sm:$0xff]
    %v123 = vld [vmem:[#allocation5 + $0x1e0] sm:$0xff]
    %v124 = vld [vmem:[#allocation5 + $0x1e8] sm:$0xff]
    %v125 = vld [vmem:[#allocation5 + $0x1f0] sm:$0xff]
    %v126 = vld [vmem:[#allocation5 + $0x1f8] sm:$0xff]
    %v127 = vld [vmem:[#allocation5 + $0x200] sm:$0xff]
    %v128 = vld [vmem:[#allocation5 + $0x208] sm:$0xff]
    %v129 = vld [vmem:[#allocation5 + $0x210] sm:$0xff]
    %v130 = vld [vmem:[#allocation5 + $0x218] sm:$0xff]
    %v131 = vld [vmem:[#allocation5 + $0x220] sm:$0xff]
    %v132 = vld [vmem:[#allocation5 + $0x228] sm:$0xff]
    %v133 = vld [vmem:[#allocation5 + $0x230] sm:$0xff]
    %v134 = vld [vmem:[#allocation5 + $0x238] sm:$0xff]
    %v135 = vld [vmem:[#allocation5 + $0x240] sm:$0xff]
    %v136 = vld [vmem:[#allocation5 + $0x248] sm:$0xff]
    %v137 = vld [vmem:[#allocation5 + $0x250] sm:$0xff]
    %v138 = vld [vmem:[#allocation5 + $0x258] sm:$0xff]
    %v139 = vld [vmem:[#allocation5 + $0x260] sm:$0xff]
    %v140 = vld [vmem:[#allocation5 + $0x268] sm:$0xff]
    %v141 = vld [vmem:[#allocation5 + $0x270] sm:$0xff]
    %v142 = vld [vmem:[#allocation5 + $0x278] sm:$0xff]
    %v143 = vld [vmem:[#allocation5 + $0x280] sm:$0xff]
    %v144 = vld [vmem:[#allocation5 + $0x288] sm:$0xff]
    %v145 = vld [vmem:[#allocation5 + $0x290] sm:$0xff]
    %v146 = vld [vmem:[#allocation5 + $0x298] sm:$0xff]
    %v147 = vld [vmem:[#allocation5 + $0x2a0] sm:$0xff]
    %v148 = vld [vmem:[#allocation5 + $0x2a8] sm:$0xff]
    %v149 = vld [vmem:[#allocation5 + $0x2b0] sm:$0xff]
    %v150 = vld [vmem:[#allocation5 + $0x2b8] sm:$0xff]
    %v151 = vld [vmem:[#allocation5 + $0x2c0] sm:$0xff]
    %v152 = vld [vmem:[#allocation5 + $0x2c8] sm:$0xff]
    %v153 = vld [vmem:[#allocation5 + $0x2d0] sm:$0xff]
    %v154 = vld [vmem:[#allocation5 + $0x2d8] sm:$0xff]
    %v155 = vld [vmem:[#allocation5 + $0x2e0] sm:$0xff]
    %v156 = vld [vmem:[#allocation5 + $0x2e8] sm:$0xff]
    %v157 = vld [vmem:[#allocation5 + $0x2f0] sm:$0xff]
    %v158 = vld [vmem:[#allocation5 + $0x2f8] sm:$0xff]
    %v159 = vld [vmem:[#allocation5 + $0x300] sm:$0xff]
    %v160 = vld [vmem:[#allocation5 + $0x308] sm:$0xff]
    %v161 = vld [vmem:[#allocation5 + $0x310] sm:$0xff]
    %v162 = vld [vmem:[#allocation5 + $0x318] sm:$0xff]
    %v163 = vld [vmem:[#allocation5 + $0x320] sm:$0xff]
    %v164 = vld [vmem:[#allocation5 + $0x328] sm:$0xff]
    %v165 = vld [vmem:[#allocation5 + $0x330] sm:$0xff]
    %v166 = vld [vmem:[#allocation5 + $0x338] sm:$0xff]
    %v167 = vld [vmem:[#allocation5 + $0x340] sm:$0xff]
    %v168 = vld [vmem:[#allocation5 + $0x348] sm:$0xff]
    %v169 = vld [vmem:[#allocation5 + $0x350] sm:$0xff]
    %v170 = vld [vmem:[#allocation5 + $0x358] sm:$0xff]
    %v171 = vld [vmem:[#allocation5 + $0x360] sm:$0xff]
    %v172 = vld [vmem:[#allocation5 + $0x368] sm:$0xff]
    %v173 = vld [vmem:[#allocation5 + $0x370] sm:$0xff]
    %v174 = vld [vmem:[#allocation5 + $0x378] sm:$0xff]
    %v175 = vld [vmem:[#allocation5 + $0x380] sm:$0xff]
    %v176 = vld [vmem:[#allocation5 + $0x388] sm:$0xff]
    %v177 = vld [vmem:[#allocation5 + $0x390] sm:$0xff]
    %v178 = vld [vmem:[#allocation5 + $0x398] sm:$0xff]
    %v179 = vld [vmem:[#allocation5 + $0x3a0] sm:$0xff]
    %v180 = vld [vmem:[#allocation5 + $0x3a8] sm:$0xff]
    %v181 = vld [vmem:[#allocation5 + $0x3b0] sm:$0xff]
    %v182 = vld [vmem:[#allocation5 + $0x3b8] sm:$0xff]
    %v183 = vld [vmem:[#allocation5 + $0x3c0] sm:$0xff]
    %v184 = vld [vmem:[#allocation5 + $0x3c8] sm:$0xff]
    %v185 = vld [vmem:[#allocation5 + $0x3d0] sm:$0xff]
    %v186 = vld [vmem:[#allocation5 + $0x3d8] sm:$0xff]
    %v187 = vld [vmem:[#allocation5 + $0x3e0] sm:$0xff]
    %v188 = vld [vmem:[#allocation5 + $0x3e8] sm:$0xff]
    %v189 = vld [vmem:[#allocation5 + $0x3f0] sm:$0xff]
    %v190 = vld [vmem:[#allocation5 + $0x3f8] sm:$0xff]
    %v191 = vld [vmem:[#allocation5 + $0x400] sm:$0xff]
    %v192 = vld [vmem:[#allocation5 + $0x408] sm:$0xff]
    %v193 = vld [vmem:[#allocation5 + $0x410] sm:$0xff]
    %v194 = vld [vmem:[#allocation5 + $0x418] sm:$0xff]
    %v195 = vld [vmem:[#allocation5 + $0x420] sm:$0xff]
    %v196 = vld [vmem:[#allocation5 + $0x428] sm:$0xff]
    %v197 = vld [vmem:[#allocation5 + $0x430] sm:$0xff]
    %v198 = vld [vmem:[#allocation5 + $0x438] sm:$0xff]
    %v199 = vld [vmem:[#allocation5 + $0x440] sm:$0xff]
    %v200 = vld [vmem:[#allocation5 + $0x448] sm:$0xff]
    %v201 = vld [vmem:[#allocation5 + $0x450] sm:$0xff]
    %v202 = vld [vmem:[#allocation5 + $0x458] sm:$0xff]
    %v203 = vld [vmem:[#allocation5 + $0x460] sm:$0xff]
    %v204 = vld [vmem:[#allocation5 + $0x468] sm:$0xff]
    %v205 = vld [vmem:[#allocation5 + $0x470] sm:$0xff]
    %v206 = vld [vmem:[#allocation5 + $0x478] sm:$0xff]
    %v207 = vld [vmem:[#allocation5 + $0x480] sm:$0xff]
    %v208 = vld [vmem:[#allocation5 + $0x488] sm:$0xff]
    %v209 = vld [vmem:[#allocation5 + $0x490] sm:$0xff]
    %v210 = vld [vmem:[#allocation5 + $0x498] sm:$0xff]
    %v211 = vld [vmem:[#allocation5 + $0x4a0] sm:$0xff]
    %v212 = vld [vmem:[#allocation5 + $0x4a8] sm:$0xff]
    %v213 = vld [vmem:[#allocation5 + $0x4b0] sm:$0xff]
    %v214 = vld [vmem:[#allocation5 + $0x4b8] sm:$0xff]
    %v215 = vld [vmem:[#allocation5 + $0x4c0] sm:$0xff]
    %v216 = vld [vmem:[#allocation5 + $0x4c8] sm:$0xff]
    %v217 = vld [vmem:[#allocation5 + $0x4d0] sm:$0xff]
    %v218 = vld [vmem:[#allocation5 + $0x4d8] sm:$0xff]
    %v219 = vld [vmem:[#allocation5 + $0x4e0] sm:$0xff]
    %v220 = vld [vmem:[#allocation5 + $0x4e8] sm:$0xff]
    %v221 = vld [vmem:[#allocation5 + $0x4f0] sm:$0xff]
    %v222 = vld [vmem:[#allocation5 + $0x4f8] sm:$0xff]
    %v223 = vld [vmem:[#allocation5 + $0x500] sm:$0xff]
    %v224 = vld [vmem:[#allocation5 + $0x508] sm:$0xff]
    %v225 = vld [vmem:[#allocation5 + $0x510] sm:$0xff]
    %v226 = vld [vmem:[#allocation5 + $0x518] sm:$0xff]
    %v227 = vld [vmem:[#allocation5 + $0x520] sm:$0xff]
    %v228 = vld [vmem:[#allocation5 + $0x528] sm:$0xff]
    %v229 = vld [vmem:[#allocation5 + $0x530] sm:$0xff]
    %v230 = vld [vmem:[#allocation5 + $0x538] sm:$0xff]
    %v231 = vld [vmem:[#allocation5 + $0x540] sm:$0xff]
    %v232 = vld [vmem:[#allocation5 + $0x548] sm:$0xff]
    %v233 = vld [vmem:[#allocation5 + $0x550] sm:$0xff]
    %v234 = vld [vmem:[#allocation5 + $0x558] sm:$0xff]
    %v235 = vld [vmem:[#allocation5 + $0x560] sm:$0xff]
    %v236 = vld [vmem:[#allocation5 + $0x568] sm:$0xff]
    %v237 = vld [vmem:[#allocation5 + $0x570] sm:$0xff]
    %v238 = vld [vmem:[#allocation5 + $0x578] sm:$0xff]
    %v239 = vld [vmem:[#allocation5 + $0x580] sm:$0xff]
    %v240 = vld [vmem:[#allocation5 + $0x588] sm:$0xff]
    %v241 = vld [vmem:[#allocation5 + $0x590] sm:$0xff]
    %v242 = vld [vmem:[#allocation5 + $0x598] sm:$0xff]
    %v243 = vld [vmem:[#allocation5 + $0x5a0] sm:$0xff]
    %v244 = vld [vmem:[#allocation5 + $0x5a8] sm:$0xff]
    %v245 = vld [vmem:[#allocation5 + $0x5b0] sm:$0xff]
    %v246 = vld [vmem:[#allocation5 + $0x5b8] sm:$0xff]
    %v247 = vld [vmem:[#allocation5 + $0x5c0] sm:$0xff]
    %v248 = vld [vmem:[#allocation5 + $0x5c8] sm:$0xff]
    %v249 = vld [vmem:[#allocation5 + $0x5d0] sm:$0xff]
    %v250 = vld [vmem:[#allocation5 + $0x5d8] sm:$0xff]
    %v251 = vld [vmem:[#allocation5 + $0x5e0] sm:$0xff]
    %v252 = vld [vmem:[#allocation5 + $0x5e8] sm:$0xff]
    %v253 = vld [vmem:[#allocation5 + $0x5f0] sm:$0xff]
    %v254 = vld [vmem:[#allocation5 + $0x5f8] sm:$0xff]
    %v255 = vld [vmem:[#allocation5 + $0x600] sm:$0xff]
    %v256 = vld [vmem:[#allocation5 + $0x608] sm:$0xff]
    %v257 = vld [vmem:[#allocation5 + $0x610] sm:$0xff]
    %v258 = vld [vmem:[#allocation5 + $0x618] sm:$0xff]
    %v259 = vld [vmem:[#allocation5 + $0x620] sm:$0xff]
    %v260 = vld [vmem:[#allocation5 + $0x628] sm:$0xff]
    %v261 = vld [vmem:[#allocation5 + $0x630] sm:$0xff]
    %v262 = vld [vmem:[#allocation5 + $0x638] sm:$0xff]
    %v263 = vld [vmem:[#allocation5 + $0x640] sm:$0xff]
    %v264 = vld [vmem:[#allocation5 + $0x648] sm:$0xff]
    %v265 = vld [vmem:[#allocation5 + $0x650] sm:$0xff]
    %v266 = vld [vmem:[#allocation5 + $0x658] sm:$0xff]
    %v267 = vld [vmem:[#allocation5 + $0x660] sm:$0xff]
    %v268 = vld [vmem:[#allocation5 + $0x668] sm:$0xff]
    %v269 = vld [vmem:[#allocation5 + $0x670] sm:$0xff]
    %v270 = vld [vmem:[#allocation5 + $0x678] sm:$0xff]
    %v271 = vld [vmem:[#allocation5 + $0x680] sm:$0xff]
    %v272 = vld [vmem:[#allocation5 + $0x688] sm:$0xff]
    %v273 = vld [vmem:[#allocation5 + $0x690] sm:$0xff]
    %v274 = vld [vmem:[#allocation5 + $0x698] sm:$0xff]
    %v275 = vld [vmem:[#allocation5 + $0x6a0] sm:$0xff]
    %v276 = vld [vmem:[#allocation5 + $0x6a8] sm:$0xff]
    %v277 = vld [vmem:[#allocation5 + $0x6b0] sm:$0xff]
    %v278 = vld [vmem:[#allocation5 + $0x6b8] sm:$0xff]
    %v279 = vld [vmem:[#allocation5 + $0x6c0] sm:$0xff]
    %v280 = vld [vmem:[#allocation5 + $0x6c8] sm:$0xff]
    %v281 = vld [vmem:[#allocation5 + $0x6d0] sm:$0xff]
    %v282 = vld [vmem:[#allocation5 + $0x6d8] sm:$0xff]
    %v283 = vld [vmem:[#allocation5 + $0x6e0] sm:$0xff]
    %v284 = vld [vmem:[#allocation5 + $0x6e8] sm:$0xff]
    %v285 = vld [vmem:[#allocation5 + $0x6f0] sm:$0xff]
    %v286 = vld [vmem:[#allocation5 + $0x6f8] sm:$0xff]
    %v287 = vld [vmem:[#allocation5 + $0x700] sm:$0xff]
    %v288 = vld [vmem:[#allocation5 + $0x708] sm:$0xff]
    %v289 = vld [vmem:[#allocation5 + $0x710] sm:$0xff]
    %v290 = vld [vmem:[#allocation5 + $0x718] sm:$0xff]
    %v291 = vld [vmem:[#allocation5 + $0x720] sm:$0xff]
    %v292 = vld [vmem:[#allocation5 + $0x728] sm:$0xff]
    %v293 = vld [vmem:[#allocation5 + $0x730] sm:$0xff]
    %v294 = vld [vmem:[#allocation5 + $0x738] sm:$0xff]
    %v295 = vld [vmem:[#allocation5 + $0x740] sm:$0xff]
    %v296 = vld [vmem:[#allocation5 + $0x748] sm:$0xff]
    %v297 = vld [vmem:[#allocation5 + $0x750] sm:$0xff]
    %v298 = vld [vmem:[#allocation5 + $0x758] sm:$0xff]
    %v299 = vld [vmem:[#allocation5 + $0x760] sm:$0xff]
    %v300 = vld [vmem:[#allocation5 + $0x768] sm:$0xff]
    %v301 = vld [vmem:[#allocation5 + $0x770] sm:$0xff]
    %v302 = vld [vmem:[#allocation5 + $0x778] sm:$0xff]
    %v303 = vld [vmem:[#allocation5 + $0x780] sm:$0xff]
    %v304 = vld [vmem:[#allocation5 + $0x788] sm:$0xff]
    %v305 = vld [vmem:[#allocation5 + $0x790] sm:$0xff]
    %v306 = vld [vmem:[#allocation5 + $0x798] sm:$0xff]
    %v307 = vld [vmem:[#allocation5 + $0x7a0] sm:$0xff]
    %v308 = vld [vmem:[#allocation5 + $0x7a8] sm:$0xff]
    %v309 = vld [vmem:[#allocation5 + $0x7b0] sm:$0xff]
    %v310 = vld [vmem:[#allocation5 + $0x7b8] sm:$0xff]
    %v311 = vld [vmem:[#allocation5 + $0x7c0] sm:$0xff]
    %v312 = vld [vmem:[#allocation5 + $0x7c8] sm:$0xff]
    %v313 = vld [vmem:[#allocation5 + $0x7d0] sm:$0xff]
    %v314 = vld [vmem:[#allocation5 + $0x7d8] sm:$0xff]
    %v315 = vld [vmem:[#allocation5 + $0x7e0] sm:$0xff]
    %v316 = vld [vmem:[#allocation5 + $0x7e8] sm:$0xff]
    %v317 = vld [vmem:[#allocation5 + $0x7f0] sm:$0xff]
    %v318 = vld [vmem:[#allocation5 + $0x7f8] sm:$0xff]
    %v319 = vld [vmem:[#allocation7] sm:$0xf]
    %v321 = vlaneseq
    %v322 = vshrl.u32 %v321, 7
    %v323 = vsub.s32 0, %v322
    %v324 = vrot.slane %v319, %v323
    %v325 = vlaneseq
    %v326 = vshrl.u32 %v325, 7
    %v327 = vsub.s32 1, %v326
    %v328 = vrot.slane %v319, %v327
    %v329 = vlaneseq
    %v330 = vshrl.u32 %v329, 7
    %v331 = vsub.s32 2, %v330
    %v332 = vrot.slane %v319, %v331
    %v333 = vlaneseq
    %v334 = vshrl.u32 %v333, 7
    %v335 = vsub.s32 3, %v334
    %v336 = vrot.slane %v319, %v335
    %v345 = vunpack.c.l.b16 %v59
    %v346 = vunpack.c.h.b16 %v59
    %v347 = vunpack.c.l.b16 %v60
    %v348 = vunpack.c.h.b16 %v60
    %v349 = vunpack.c.l.b16 %v61
    %v350 = vunpack.c.h.b16 %v61
    %v351 = vunpack.c.l.b16 %v62
    %v352 = vunpack.c.h.b16 %v62
    %v353 = vpack.c.b16 %v345, %v345
    %v354 = vpack.c.b16 %v346, %v346
    %v355 = vpack.c.b16 %v347, %v347
    %v356 = vpack.c.b16 %v348, %v348
    %v357 = vpack.c.b16 %v349, %v349
    %v358 = vpack.c.b16 %v350, %v350
    %v359 = vpack.c.b16 %v351, %v351
    %v360 = vpack.c.b16 %v352, %v352
    %v625 = vunpack.c.l.b16 %v63
    %v626 = vunpack.c.h.b16 %v63
    %v627 = vunpack.c.l.b16 %v64
    %v628 = vunpack.c.h.b16 %v64
    %v629 = vunpack.c.l.b16 %v65
    %v630 = vunpack.c.h.b16 %v65
    %v631 = vunpack.c.l.b16 %v66
    %v632 = vunpack.c.h.b16 %v66
    %v633 = vunpack.c.l.b16 %v67
    %v634 = vunpack.c.h.b16 %v67
    %v635 = vunpack.c.l.b16 %v68
    %v636 = vunpack.c.h.b16 %v68
    %v637 = vunpack.c.l.b16 %v69
    %v638 = vunpack.c.h.b16 %v69
    %v639 = vunpack.c.l.b16 %v70
    %v640 = vunpack.c.h.b16 %v70
    %v641 = vunpack.c.l.b16 %v71
    %v642 = vunpack.c.h.b16 %v71
    %v643 = vunpack.c.l.b16 %v72
    %v644 = vunpack.c.h.b16 %v72
    %v645 = vunpack.c.l.b16 %v73
    %v646 = vunpack.c.h.b16 %v73
    %v647 = vunpack.c.l.b16 %v74
    %v648 = vunpack.c.h.b16 %v74
    %v649 = vunpack.c.l.b16 %v75
    %v650 = vunpack.c.h.b16 %v75
    %v651 = vunpack.c.l.b16 %v76
    %v652 = vunpack.c.h.b16 %v76
    %v653 = vunpack.c.l.b16 %v77
    %v654 = vunpack.c.h.b16 %v77
    %v655 = vunpack.c.l.b16 %v78
    %v656 = vunpack.c.h.b16 %v78
    %v657 = vunpack.c.l.b16 %v79
    %v658 = vunpack.c.h.b16 %v79
    %v659 = vunpack.c.l.b16 %v80
    %v660 = vunpack.c.h.b16 %v80
    %v661 = vunpack.c.l.b16 %v81
    %v662 = vunpack.c.h.b16 %v81
    %v663 = vunpack.c.l.b16 %v82
    %v664 = vunpack.c.h.b16 %v82
    %v665 = vunpack.c.l.b16 %v83
    %v666 = vunpack.c.h.b16 %v83
    %v667 = vunpack.c.l.b16 %v84
    %v668 = vunpack.c.h.b16 %v84
    %v669 = vunpack.c.l.b16 %v85
    %v670 = vunpack.c.h.b16 %v85
    %v671 = vunpack.c.l.b16 %v86
    %v672 = vunpack.c.h.b16 %v86
    %v673 = vunpack.c.l.b16 %v87
    %v674 = vunpack.c.h.b16 %v87
    %v675 = vunpack.c.l.b16 %v88
    %v676 = vunpack.c.h.b16 %v88
    %v677 = vunpack.c.l.b16 %v89
    %v678 = vunpack.c.h.b16 %v89
    %v679 = vunpack.c.l.b16 %v90
    %v680 = vunpack.c.h.b16 %v90
    %v681 = vunpack.c.l.b16 %v91
    %v682 = vunpack.c.h.b16 %v91
    %v683 = vunpack.c.l.b16 %v92
    %v684 = vunpack.c.h.b16 %v92
    %v685 = vunpack.c.l.b16 %v93
    %v686 = vunpack.c.h.b16 %v93
    %v687 = vunpack.c.l.b16 %v94
    %v688 = vunpack.c.h.b16 %v94
    %v689 = vunpack.c.l.b16 %v95
    %v690 = vunpack.c.h.b16 %v95
    %v691 = vunpack.c.l.b16 %v96
    %v692 = vunpack.c.h.b16 %v96
    %v693 = vunpack.c.l.b16 %v97
    %v694 = vunpack.c.h.b16 %v97
    %v695 = vunpack.c.l.b16 %v98
    %v696 = vunpack.c.h.b16 %v98
    %v697 = vunpack.c.l.b16 %v99
    %v698 = vunpack.c.h.b16 %v99
    %v699 = vunpack.c.l.b16 %v100
    %v700 = vunpack.c.h.b16 %v100
    %v701 = vunpack.c.l.b16 %v101
    %v702 = vunpack.c.h.b16 %v101
    %v703 = vunpack.c.l.b16 %v102
    %v704 = vunpack.c.h.b16 %v102
    %v705 = vunpack.c.l.b16 %v103
    %v706 = vunpack.c.h.b16 %v103
    %v707 = vunpack.c.l.b16 %v104
    %v708 = vunpack.c.h.b16 %v104
    %v709 = vunpack.c.l.b16 %v105
    %v710 = vunpack.c.h.b16 %v105
    %v711 = vunpack.c.l.b16 %v106
    %v712 = vunpack.c.h.b16 %v106
    %v713 = vunpack.c.l.b16 %v107
    %v714 = vunpack.c.h.b16 %v107
    %v715 = vunpack.c.l.b16 %v108
    %v716 = vunpack.c.h.b16 %v108
    %v717 = vunpack.c.l.b16 %v109
    %v718 = vunpack.c.h.b16 %v109
    %v719 = vunpack.c.l.b16 %v110
    %v720 = vunpack.c.h.b16 %v110
    %v721 = vunpack.c.l.b16 %v111
    %v722 = vunpack.c.h.b16 %v111
    %v723 = vunpack.c.l.b16 %v112
    %v724 = vunpack.c.h.b16 %v112
    %v725 = vunpack.c.l.b16 %v113
    %v726 = vunpack.c.h.b16 %v113
    %v727 = vunpack.c.l.b16 %v114
    %v728 = vunpack.c.h.b16 %v114
    %v729 = vunpack.c.l.b16 %v115
    %v730 = vunpack.c.h.b16 %v115
    %v731 = vunpack.c.l.b16 %v116
    %v732 = vunpack.c.h.b16 %v116
    %v733 = vunpack.c.l.b16 %v117
    %v734 = vunpack.c.h.b16 %v117
    %v735 = vunpack.c.l.b16 %v118
    %v736 = vunpack.c.h.b16 %v118
    %v737 = vunpack.c.l.b16 %v119
    %v738 = vunpack.c.h.b16 %v119
    %v739 = vunpack.c.l.b16 %v120
    %v740 = vunpack.c.h.b16 %v120
    %v741 = vunpack.c.l.b16 %v121
    %v742 = vunpack.c.h.b16 %v121
    %v743 = vunpack.c.l.b16 %v122
    %v744 = vunpack.c.h.b16 %v122
    %v745 = vunpack.c.l.b16 %v123
    %v746 = vunpack.c.h.b16 %v123
    %v747 = vunpack.c.l.b16 %v124
    %v748 = vunpack.c.h.b16 %v124
    %v749 = vunpack.c.l.b16 %v125
    %v750 = vunpack.c.h.b16 %v125
    %v751 = vunpack.c.l.b16 %v126
    %v752 = vunpack.c.h.b16 %v126
    %v753 = vunpack.c.l.b16 %v127
    %v754 = vunpack.c.h.b16 %v127
    %v755 = vunpack.c.l.b16 %v128
    %v756 = vunpack.c.h.b16 %v128
    %v757 = vunpack.c.l.b16 %v129
    %v758 = vunpack.c.h.b16 %v129
    %v759 = vunpack.c.l.b16 %v130
    %v760 = vunpack.c.h.b16 %v130
    %v761 = vunpack.c.l.b16 %v131
    %v762 = vunpack.c.h.b16 %v131
    %v763 = vunpack.c.l.b16 %v132
    %v764 = vunpack.c.h.b16 %v132
    %v765 = vunpack.c.l.b16 %v133
    %v766 = vunpack.c.h.b16 %v133
    %v767 = vunpack.c.l.b16 %v134
    %v768 = vunpack.c.h.b16 %v134
    %v769 = vunpack.c.l.b16 %v135
    %v770 = vunpack.c.h.b16 %v135
    %v771 = vunpack.c.l.b16 %v136
    %v772 = vunpack.c.h.b16 %v136
    %v773 = vunpack.c.l.b16 %v137
    %v774 = vunpack.c.h.b16 %v137
    %v775 = vunpack.c.l.b16 %v138
    %v776 = vunpack.c.h.b16 %v138
    %v777 = vunpack.c.l.b16 %v139
    %v778 = vunpack.c.h.b16 %v139
    %v779 = vunpack.c.l.b16 %v140
    %v780 = vunpack.c.h.b16 %v140
    %v781 = vunpack.c.l.b16 %v141
    %v782 = vunpack.c.h.b16 %v141
    %v783 = vunpack.c.l.b16 %v142
    %v784 = vunpack.c.h.b16 %v142
    %v785 = vunpack.c.l.b16 %v143
    %v786 = vunpack.c.h.b16 %v143
    %v787 = vunpack.c.l.b16 %v144
    %v788 = vunpack.c.h.b16 %v144
    %v789 = vunpack.c.l.b16 %v145
    %v790 = vunpack.c.h.b16 %v145
    %v791 = vunpack.c.l.b16 %v146
    %v792 = vunpack.c.h.b16 %v146
    %v793 = vunpack.c.l.b16 %v147
    %v794 = vunpack.c.h.b16 %v147
    %v795 = vunpack.c.l.b16 %v148
    %v796 = vunpack.c.h.b16 %v148
    %v797 = vunpack.c.l.b16 %v149
    %v798 = vunpack.c.h.b16 %v149
    %v799 = vunpack.c.l.b16 %v150
    %v800 = vunpack.c.h.b16 %v150
    %v801 = vunpack.c.l.b16 %v151
    %v802 = vunpack.c.h.b16 %v151
    %v803 = vunpack.c.l.b16 %v152
    %v804 = vunpack.c.h.b16 %v152
    %v805 = vunpack.c.l.b16 %v153
    %v806 = vunpack.c.h.b16 %v153
    %v807 = vunpack.c.l.b16 %v154
    %v808 = vunpack.c.h.b16 %v154
    %v809 = vunpack.c.l.b16 %v155
    %v810 = vunpack.c.h.b16 %v155
    %v811 = vunpack.c.l.b16 %v156
    %v812 = vunpack.c.h.b16 %v156
    %v813 = vunpack.c.l.b16 %v157
    %v814 = vunpack.c.h.b16 %v157
    %v815 = vunpack.c.l.b16 %v158
    %v816 = vunpack.c.h.b16 %v158
    %v817 = vunpack.c.l.b16 %v159
    %v818 = vunpack.c.h.b16 %v159
    %v819 = vunpack.c.l.b16 %v160
    %v820 = vunpack.c.h.b16 %v160
    %v821 = vunpack.c.l.b16 %v161
    %v822 = vunpack.c.h.b16 %v161
    %v823 = vunpack.c.l.b16 %v162
    %v824 = vunpack.c.h.b16 %v162
    %v825 = vunpack.c.l.b16 %v163
    %v826 = vunpack.c.h.b16 %v163
    %v827 = vunpack.c.l.b16 %v164
    %v828 = vunpack.c.h.b16 %v164
    %v829 = vunpack.c.l.b16 %v165
    %v830 = vunpack.c.h.b16 %v165
    %v831 = vunpack.c.l.b16 %v166
    %v832 = vunpack.c.h.b16 %v166
    %v833 = vunpack.c.l.b16 %v167
    %v834 = vunpack.c.h.b16 %v167
    %v835 = vunpack.c.l.b16 %v168
    %v836 = vunpack.c.h.b16 %v168
    %v837 = vunpack.c.l.b16 %v169
    %v838 = vunpack.c.h.b16 %v169
    %v839 = vunpack.c.l.b16 %v170
    %v840 = vunpack.c.h.b16 %v170
    %v841 = vunpack.c.l.b16 %v171
    %v842 = vunpack.c.h.b16 %v171
    %v843 = vunpack.c.l.b16 %v172
    %v844 = vunpack.c.h.b16 %v172
    %v845 = vunpack.c.l.b16 %v173
    %v846 = vunpack.c.h.b16 %v173
    %v847 = vunpack.c.l.b16 %v174
    %v848 = vunpack.c.h.b16 %v174
    %v849 = vunpack.c.l.b16 %v175
    %v850 = vunpack.c.h.b16 %v175
    %v851 = vunpack.c.l.b16 %v176
    %v852 = vunpack.c.h.b16 %v176
    %v853 = vunpack.c.l.b16 %v177
    %v854 = vunpack.c.h.b16 %v177
    %v855 = vunpack.c.l.b16 %v178
    %v856 = vunpack.c.h.b16 %v178
    %v857 = vunpack.c.l.b16 %v179
    %v858 = vunpack.c.h.b16 %v179
    %v859 = vunpack.c.l.b16 %v180
    %v860 = vunpack.c.h.b16 %v180
    %v861 = vunpack.c.l.b16 %v181
    %v862 = vunpack.c.h.b16 %v181
    %v863 = vunpack.c.l.b16 %v182
    %v864 = vunpack.c.h.b16 %v182
    %v865 = vunpack.c.l.b16 %v183
    %v866 = vunpack.c.h.b16 %v183
    %v867 = vunpack.c.l.b16 %v184
    %v868 = vunpack.c.h.b16 %v184
    %v869 = vunpack.c.l.b16 %v185
    %v870 = vunpack.c.h.b16 %v185
    %v871 = vunpack.c.l.b16 %v186
    %v872 = vunpack.c.h.b16 %v186
    %v873 = vunpack.c.l.b16 %v187
    %v874 = vunpack.c.h.b16 %v187
    %v875 = vunpack.c.l.b16 %v188
    %v876 = vunpack.c.h.b16 %v188
    %v877 = vunpack.c.l.b16 %v189
    %v878 = vunpack.c.h.b16 %v189
    %v879 = vunpack.c.l.b16 %v190
    %v880 = vunpack.c.h.b16 %v190
    %v881 = vunpack.c.l.b16 %v191
    %v882 = vunpack.c.h.b16 %v191
    %v883 = vunpack.c.l.b16 %v192
    %v884 = vunpack.c.h.b16 %v192
    %v885 = vunpack.c.l.b16 %v193
    %v886 = vunpack.c.h.b16 %v193
    %v887 = vunpack.c.l.b16 %v194
    %v888 = vunpack.c.h.b16 %v194
    %v889 = vunpack.c.l.b16 %v195
    %v890 = vunpack.c.h.b16 %v195
    %v891 = vunpack.c.l.b16 %v196
    %v892 = vunpack.c.h.b16 %v196
    %v893 = vunpack.c.l.b16 %v197
    %v894 = vunpack.c.h.b16 %v197
    %v895 = vunpack.c.l.b16 %v198
    %v896 = vunpack.c.h.b16 %v198
    %v897 = vunpack.c.l.b16 %v199
    %v898 = vunpack.c.h.b16 %v199
    %v899 = vunpack.c.l.b16 %v200
    %v900 = vunpack.c.h.b16 %v200
    %v901 = vunpack.c.l.b16 %v201
    %v902 = vunpack.c.h.b16 %v201
    %v903 = vunpack.c.l.b16 %v202
    %v904 = vunpack.c.h.b16 %v202
    %v905 = vunpack.c.l.b16 %v203
    %v906 = vunpack.c.h.b16 %v203
    %v907 = vunpack.c.l.b16 %v204
    %v908 = vunpack.c.h.b16 %v204
    %v909 = vunpack.c.l.b16 %v205
    %v910 = vunpack.c.h.b16 %v205
    %v911 = vunpack.c.l.b16 %v206
    %v912 = vunpack.c.h.b16 %v206
    %v913 = vunpack.c.l.b16 %v207
    %v914 = vunpack.c.h.b16 %v207
    %v915 = vunpack.c.l.b16 %v208
    %v916 = vunpack.c.h.b16 %v208
    %v917 = vunpack.c.l.b16 %v209
    %v918 = vunpack.c.h.b16 %v209
    %v919 = vunpack.c.l.b16 %v210
    %v920 = vunpack.c.h.b16 %v210
    %v921 = vunpack.c.l.b16 %v211
    %v922 = vunpack.c.h.b16 %v211
    %v923 = vunpack.c.l.b16 %v212
    %v924 = vunpack.c.h.b16 %v212
    %v925 = vunpack.c.l.b16 %v213
    %v926 = vunpack.c.h.b16 %v213
    %v927 = vunpack.c.l.b16 %v214
    %v928 = vunpack.c.h.b16 %v214
    %v929 = vunpack.c.l.b16 %v215
    %v930 = vunpack.c.h.b16 %v215
    %v931 = vunpack.c.l.b16 %v216
    %v932 = vunpack.c.h.b16 %v216
    %v933 = vunpack.c.l.b16 %v217
    %v934 = vunpack.c.h.b16 %v217
    %v935 = vunpack.c.l.b16 %v218
    %v936 = vunpack.c.h.b16 %v218
    %v937 = vunpack.c.l.b16 %v219
    %v938 = vunpack.c.h.b16 %v219
    %v939 = vunpack.c.l.b16 %v220
    %v940 = vunpack.c.h.b16 %v220
    %v941 = vunpack.c.l.b16 %v221
    %v942 = vunpack.c.h.b16 %v221
    %v943 = vunpack.c.l.b16 %v222
    %v944 = vunpack.c.h.b16 %v222
    %v945 = vunpack.c.l.b16 %v223
    %v946 = vunpack.c.h.b16 %v223
    %v947 = vunpack.c.l.b16 %v224
    %v948 = vunpack.c.h.b16 %v224
    %v949 = vunpack.c.l.b16 %v225
    %v950 = vunpack.c.h.b16 %v225
    %v951 = vunpack.c.l.b16 %v226
    %v952 = vunpack.c.h.b16 %v226
    %v953 = vunpack.c.l.b16 %v227
    %v954 = vunpack.c.h.b16 %v227
    %v955 = vunpack.c.l.b16 %v228
    %v956 = vunpack.c.h.b16 %v228
    %v957 = vunpack.c.l.b16 %v229
    %v958 = vunpack.c.h.b16 %v229
    %v959 = vunpack.c.l.b16 %v230
    %v960 = vunpack.c.h.b16 %v230
    %v961 = vunpack.c.l.b16 %v231
    %v962 = vunpack.c.h.b16 %v231
    %v963 = vunpack.c.l.b16 %v232
    %v964 = vunpack.c.h.b16 %v232
    %v965 = vunpack.c.l.b16 %v233
    %v966 = vunpack.c.h.b16 %v233
    %v967 = vunpack.c.l.b16 %v234
    %v968 = vunpack.c.h.b16 %v234
    %v969 = vunpack.c.l.b16 %v235
    %v970 = vunpack.c.h.b16 %v235
    %v971 = vunpack.c.l.b16 %v236
    %v972 = vunpack.c.h.b16 %v236
    %v973 = vunpack.c.l.b16 %v237
    %v974 = vunpack.c.h.b16 %v237
    %v975 = vunpack.c.l.b16 %v238
    %v976 = vunpack.c.h.b16 %v238
    %v977 = vunpack.c.l.b16 %v239
    %v978 = vunpack.c.h.b16 %v239
    %v979 = vunpack.c.l.b16 %v240
    %v980 = vunpack.c.h.b16 %v240
    %v981 = vunpack.c.l.b16 %v241
    %v982 = vunpack.c.h.b16 %v241
    %v983 = vunpack.c.l.b16 %v242
    %v984 = vunpack.c.h.b16 %v242
    %v985 = vunpack.c.l.b16 %v243
    %v986 = vunpack.c.h.b16 %v243
    %v987 = vunpack.c.l.b16 %v244
    %v988 = vunpack.c.h.b16 %v244
    %v989 = vunpack.c.l.b16 %v245
    %v990 = vunpack.c.h.b16 %v245
    %v991 = vunpack.c.l.b16 %v246
    %v992 = vunpack.c.h.b16 %v246
    %v993 = vunpack.c.l.b16 %v247
    %v994 = vunpack.c.h.b16 %v247
    %v995 = vunpack.c.l.b16 %v248
    %v996 = vunpack.c.h.b16 %v248
    %v997 = vunpack.c.l.b16 %v249
    %v998 = vunpack.c.h.b16 %v249
    %v999 = vunpack.c.l.b16 %v250
    %v1000 = vunpack.c.h.b16 %v250
    %v1001 = vunpack.c.l.b16 %v251
    %v1002 = vunpack.c.h.b16 %v251
    %v1003 = vunpack.c.l.b16 %v252
    %v1004 = vunpack.c.h.b16 %v252
    %v1005 = vunpack.c.l.b16 %v253
    %v1006 = vunpack.c.h.b16 %v253
    %v1007 = vunpack.c.l.b16 %v254
    %v1008 = vunpack.c.h.b16 %v254
    %v1009 = vunpack.c.l.b16 %v255
    %v1010 = vunpack.c.h.b16 %v255
    %v1011 = vunpack.c.l.b16 %v256
    %v1012 = vunpack.c.h.b16 %v256
    %v1013 = vunpack.c.l.b16 %v257
    %v1014 = vunpack.c.h.b16 %v257
    %v1015 = vunpack.c.l.b16 %v258
    %v1016 = vunpack.c.h.b16 %v258
    %v1017 = vunpack.c.l.b16 %v259
    %v1018 = vunpack.c.h.b16 %v259
    %v1019 = vunpack.c.l.b16 %v260
    %v1020 = vunpack.c.h.b16 %v260
    %v1021 = vunpack.c.l.b16 %v261
    %v1022 = vunpack.c.h.b16 %v261
    %v1023 = vunpack.c.l.b16 %v262
    %v1024 = vunpack.c.h.b16 %v262
    %v1025 = vunpack.c.l.b16 %v263
    %v1026 = vunpack.c.h.b16 %v263
    %v1027 = vunpack.c.l.b16 %v264
    %v1028 = vunpack.c.h.b16 %v264
    %v1029 = vunpack.c.l.b16 %v265
    %v1030 = vunpack.c.h.b16 %v265
    %v1031 = vunpack.c.l.b16 %v266
    %v1032 = vunpack.c.h.b16 %v266
    %v1033 = vunpack.c.l.b16 %v267
    %v1034 = vunpack.c.h.b16 %v267
    %v1035 = vunpack.c.l.b16 %v268
    %v1036 = vunpack.c.h.b16 %v268
    %v1037 = vunpack.c.l.b16 %v269
    %v1038 = vunpack.c.h.b16 %v269
    %v1039 = vunpack.c.l.b16 %v270
    %v1040 = vunpack.c.h.b16 %v270
    %v1041 = vunpack.c.l.b16 %v271
    %v1042 = vunpack.c.h.b16 %v271
    %v1043 = vunpack.c.l.b16 %v272
    %v1044 = vunpack.c.h.b16 %v272
    %v1045 = vunpack.c.l.b16 %v273
    %v1046 = vunpack.c.h.b16 %v273
    %v1047 = vunpack.c.l.b16 %v274
    %v1048 = vunpack.c.h.b16 %v274
    %v1049 = vunpack.c.l.b16 %v275
    %v1050 = vunpack.c.h.b16 %v275
    %v1051 = vunpack.c.l.b16 %v276
    %v1052 = vunpack.c.h.b16 %v276
    %v1053 = vunpack.c.l.b16 %v277
    %v1054 = vunpack.c.h.b16 %v277
    %v1055 = vunpack.c.l.b16 %v278
    %v1056 = vunpack.c.h.b16 %v278
    %v1057 = vunpack.c.l.b16 %v279
    %v1058 = vunpack.c.h.b16 %v279
    %v1059 = vunpack.c.l.b16 %v280
    %v1060 = vunpack.c.h.b16 %v280
    %v1061 = vunpack.c.l.b16 %v281
    %v1062 = vunpack.c.h.b16 %v281
    %v1063 = vunpack.c.l.b16 %v282
    %v1064 = vunpack.c.h.b16 %v282
    %v1065 = vunpack.c.l.b16 %v283
    %v1066 = vunpack.c.h.b16 %v283
    %v1067 = vunpack.c.l.b16 %v284
    %v1068 = vunpack.c.h.b16 %v284
    %v1069 = vunpack.c.l.b16 %v285
    %v1070 = vunpack.c.h.b16 %v285
    %v1071 = vunpack.c.l.b16 %v286
    %v1072 = vunpack.c.h.b16 %v286
    %v1073 = vunpack.c.l.b16 %v287
    %v1074 = vunpack.c.h.b16 %v287
    %v1075 = vunpack.c.l.b16 %v288
    %v1076 = vunpack.c.h.b16 %v288
    %v1077 = vunpack.c.l.b16 %v289
    %v1078 = vunpack.c.h.b16 %v289
    %v1079 = vunpack.c.l.b16 %v290
    %v1080 = vunpack.c.h.b16 %v290
    %v1081 = vunpack.c.l.b16 %v291
    %v1082 = vunpack.c.h.b16 %v291
    %v1083 = vunpack.c.l.b16 %v292
    %v1084 = vunpack.c.h.b16 %v292
    %v1085 = vunpack.c.l.b16 %v293
    %v1086 = vunpack.c.h.b16 %v293
    %v1087 = vunpack.c.l.b16 %v294
    %v1088 = vunpack.c.h.b16 %v294
    %v1089 = vunpack.c.l.b16 %v295
    %v1090 = vunpack.c.h.b16 %v295
    %v1091 = vunpack.c.l.b16 %v296
    %v1092 = vunpack.c.h.b16 %v296
    %v1093 = vunpack.c.l.b16 %v297
    %v1094 = vunpack.c.h.b16 %v297
    %v1095 = vunpack.c.l.b16 %v298
    %v1096 = vunpack.c.h.b16 %v298
    %v1097 = vunpack.c.l.b16 %v299
    %v1098 = vunpack.c.h.b16 %v299
    %v1099 = vunpack.c.l.b16 %v300
    %v1100 = vunpack.c.h.b16 %v300
    %v1101 = vunpack.c.l.b16 %v301
    %v1102 = vunpack.c.h.b16 %v301
    %v1103 = vunpack.c.l.b16 %v302
    %v1104 = vunpack.c.h.b16 %v302
    %v1105 = vunpack.c.l.b16 %v303
    %v1106 = vunpack.c.h.b16 %v303
    %v1107 = vunpack.c.l.b16 %v304
    %v1108 = vunpack.c.h.b16 %v304
    %v1109 = vunpack.c.l.b16 %v305
    %v1110 = vunpack.c.h.b16 %v305
    %v1111 = vunpack.c.l.b16 %v306
    %v1112 = vunpack.c.h.b16 %v306
    %v1113 = vunpack.c.l.b16 %v307
    %v1114 = vunpack.c.h.b16 %v307
    %v1115 = vunpack.c.l.b16 %v308
    %v1116 = vunpack.c.h.b16 %v308
    %v1117 = vunpack.c.l.b16 %v309
    %v1118 = vunpack.c.h.b16 %v309
    %v1119 = vunpack.c.l.b16 %v310
    %v1120 = vunpack.c.h.b16 %v310
    %v1121 = vunpack.c.l.b16 %v311
    %v1122 = vunpack.c.h.b16 %v311
    %v1123 = vunpack.c.l.b16 %v312
    %v1124 = vunpack.c.h.b16 %v312
    %v1125 = vunpack.c.l.b16 %v313
    %v1126 = vunpack.c.h.b16 %v313
    %v1127 = vunpack.c.l.b16 %v314
    %v1128 = vunpack.c.h.b16 %v314
    %v1129 = vunpack.c.l.b16 %v315
    %v1130 = vunpack.c.h.b16 %v315
    %v1131 = vunpack.c.l.b16 %v316
    %v1132 = vunpack.c.h.b16 %v316
    %v1133 = vunpack.c.l.b16 %v317
    %v1134 = vunpack.c.h.b16 %v317
    %v1135 = vunpack.c.l.b16 %v318
    %v1136 = vunpack.c.h.b16 %v318
    %v1137 = vpack.c.b16 %v629, %v625
    %v1138 = vpack.c.b16 %v630, %v626
    %v1139 = vpack.c.b16 %v631, %v627
    %v1140 = vpack.c.b16 %v632, %v628
    %v1141 = vpack.c.b16 %v637, %v633
    %v1142 = vpack.c.b16 %v638, %v634
    %v1143 = vpack.c.b16 %v639, %v635
    %v1144 = vpack.c.b16 %v640, %v636
    %v1145 = vpack.c.b16 %v645, %v641
    %v1146 = vpack.c.b16 %v646, %v642
    %v1147 = vpack.c.b16 %v647, %v643
    %v1148 = vpack.c.b16 %v648, %v644
    %v1149 = vpack.c.b16 %v653, %v649
    %v1150 = vpack.c.b16 %v654, %v650
    %v1151 = vpack.c.b16 %v655, %v651
    %v1152 = vpack.c.b16 %v656, %v652
    %v1153 = vpack.c.b16 %v661, %v657
    %v1154 = vpack.c.b16 %v662, %v658
    %v1155 = vpack.c.b16 %v663, %v659
    %v1156 = vpack.c.b16 %v664, %v660
    %v1157 = vpack.c.b16 %v669, %v665
    %v1158 = vpack.c.b16 %v670, %v666
    %v1159 = vpack.c.b16 %v671, %v667
    %v1160 = vpack.c.b16 %v672, %v668
    %v1161 = vpack.c.b16 %v677, %v673
    %v1162 = vpack.c.b16 %v678, %v674
    %v1163 = vpack.c.b16 %v679, %v675
    %v1164 = vpack.c.b16 %v680, %v676
    %v1165 = vpack.c.b16 %v685, %v681
    %v1166 = vpack.c.b16 %v686, %v682
    %v1167 = vpack.c.b16 %v687, %v683
    %v1168 = vpack.c.b16 %v688, %v684
    %v1169 = vpack.c.b16 %v693, %v689
    %v1170 = vpack.c.b16 %v694, %v690
    %v1171 = vpack.c.b16 %v695, %v691
    %v1172 = vpack.c.b16 %v696, %v692
    %v1173 = vpack.c.b16 %v701, %v697
    %v1174 = vpack.c.b16 %v702, %v698
    %v1175 = vpack.c.b16 %v703, %v699
    %v1176 = vpack.c.b16 %v704, %v700
    %v1177 = vpack.c.b16 %v709, %v705
    %v1178 = vpack.c.b16 %v710, %v706
    %v1179 = vpack.c.b16 %v711, %v707
    %v1180 = vpack.c.b16 %v712, %v708
    %v1181 = vpack.c.b16 %v717, %v713
    %v1182 = vpack.c.b16 %v718, %v714
    %v1183 = vpack.c.b16 %v719, %v715
    %v1184 = vpack.c.b16 %v720, %v716
    %v1185 = vpack.c.b16 %v725, %v721
    %v1186 = vpack.c.b16 %v726, %v722
    %v1187 = vpack.c.b16 %v727, %v723
    %v1188 = vpack.c.b16 %v728, %v724
    %v1189 = vpack.c.b16 %v733, %v729
    %v1190 = vpack.c.b16 %v734, %v730
    %v1191 = vpack.c.b16 %v735, %v731
    %v1192 = vpack.c.b16 %v736, %v732
    %v1193 = vpack.c.b16 %v741, %v737
    %v1194 = vpack.c.b16 %v742, %v738
    %v1195 = vpack.c.b16 %v743, %v739
    %v1196 = vpack.c.b16 %v744, %v740
    %v1197 = vpack.c.b16 %v749, %v745
    %v1198 = vpack.c.b16 %v750, %v746
    %v1199 = vpack.c.b16 %v751, %v747
    %v1200 = vpack.c.b16 %v752, %v748
    %v1201 = vpack.c.b16 %v757, %v753
    %v1202 = vpack.c.b16 %v758, %v754
    %v1203 = vpack.c.b16 %v759, %v755
    %v1204 = vpack.c.b16 %v760, %v756
    %v1205 = vpack.c.b16 %v765, %v761
    %v1206 = vpack.c.b16 %v766, %v762
    %v1207 = vpack.c.b16 %v767, %v763
    %v1208 = vpack.c.b16 %v768, %v764
    %v1209 = vpack.c.b16 %v773, %v769
    %v1210 = vpack.c.b16 %v774, %v770
    %v1211 = vpack.c.b16 %v775, %v771
    %v1212 = vpack.c.b16 %v776, %v772
    %v1213 = vpack.c.b16 %v781, %v777
    %v1214 = vpack.c.b16 %v782, %v778
    %v1215 = vpack.c.b16 %v783, %v779
    %v1216 = vpack.c.b16 %v784, %v780
    %v1217 = vpack.c.b16 %v789, %v785
    %v1218 = vpack.c.b16 %v790, %v786
    %v1219 = vpack.c.b16 %v791, %v787
    %v1220 = vpack.c.b16 %v792, %v788
    %v1221 = vpack.c.b16 %v797, %v793
    %v1222 = vpack.c.b16 %v798, %v794
    %v1223 = vpack.c.b16 %v799, %v795
    %v1224 = vpack.c.b16 %v800, %v796
    %v1225 = vpack.c.b16 %v805, %v801
    %v1226 = vpack.c.b16 %v806, %v802
    %v1227 = vpack.c.b16 %v807, %v803
    %v1228 = vpack.c.b16 %v808, %v804
    %v1229 = vpack.c.b16 %v813, %v809
    %v1230 = vpack.c.b16 %v814, %v810
    %v1231 = vpack.c.b16 %v815, %v811
    %v1232 = vpack.c.b16 %v816, %v812
    %v1233 = vpack.c.b16 %v821, %v817
    %v1234 = vpack.c.b16 %v822, %v818
    %v1235 = vpack.c.b16 %v823, %v819
    %v1236 = vpack.c.b16 %v824, %v820
    %v1237 = vpack.c.b16 %v829, %v825
    %v1238 = vpack.c.b16 %v830, %v826
    %v1239 = vpack.c.b16 %v831, %v827
    %v1240 = vpack.c.b16 %v832, %v828
    %v1241 = vpack.c.b16 %v837, %v833
    %v1242 = vpack.c.b16 %v838, %v834
    %v1243 = vpack.c.b16 %v839, %v835
    %v1244 = vpack.c.b16 %v840, %v836
    %v1245 = vpack.c.b16 %v845, %v841
    %v1246 = vpack.c.b16 %v846, %v842
    %v1247 = vpack.c.b16 %v847, %v843
    %v1248 = vpack.c.b16 %v848, %v844
    %v1249 = vpack.c.b16 %v853, %v849
    %v1250 = vpack.c.b16 %v854, %v850
    %v1251 = vpack.c.b16 %v855, %v851
    %v1252 = vpack.c.b16 %v856, %v852
    %v1253 = vpack.c.b16 %v861, %v857
    %v1254 = vpack.c.b16 %v862, %v858
    %v1255 = vpack.c.b16 %v863, %v859
    %v1256 = vpack.c.b16 %v864, %v860
    %v1257 = vpack.c.b16 %v869, %v865
    %v1258 = vpack.c.b16 %v870, %v866
    %v1259 = vpack.c.b16 %v871, %v867
    %v1260 = vpack.c.b16 %v872, %v868
    %v1261 = vpack.c.b16 %v877, %v873
    %v1262 = vpack.c.b16 %v878, %v874
    %v1263 = vpack.c.b16 %v879, %v875
    %v1264 = vpack.c.b16 %v880, %v876
    %v1265 = vpack.c.b16 %v885, %v881
    %v1266 = vpack.c.b16 %v886, %v882
    %v1267 = vpack.c.b16 %v887, %v883
    %v1268 = vpack.c.b16 %v888, %v884
    %v1269 = vpack.c.b16 %v893, %v889
    %v1270 = vpack.c.b16 %v894, %v890
    %v1271 = vpack.c.b16 %v895, %v891
    %v1272 = vpack.c.b16 %v896, %v892
    %v1273 = vpack.c.b16 %v901, %v897
    %v1274 = vpack.c.b16 %v902, %v898
    %v1275 = vpack.c.b16 %v903, %v899
    %v1276 = vpack.c.b16 %v904, %v900
    %v1277 = vpack.c.b16 %v909, %v905
    %v1278 = vpack.c.b16 %v910, %v906
    %v1279 = vpack.c.b16 %v911, %v907
    %v1280 = vpack.c.b16 %v912, %v908
    %v1281 = vpack.c.b16 %v917, %v913
    %v1282 = vpack.c.b16 %v918, %v914
    %v1283 = vpack.c.b16 %v919, %v915
    %v1284 = vpack.c.b16 %v920, %v916
    %v1285 = vpack.c.b16 %v925, %v921
    %v1286 = vpack.c.b16 %v926, %v922
    %v1287 = vpack.c.b16 %v927, %v923
    %v1288 = vpack.c.b16 %v928, %v924
    %v1289 = vpack.c.b16 %v933, %v929
    %v1290 = vpack.c.b16 %v934, %v930
    %v1291 = vpack.c.b16 %v935, %v931
    %v1292 = vpack.c.b16 %v936, %v932
    %v1293 = vpack.c.b16 %v941, %v937
    %v1294 = vpack.c.b16 %v942, %v938
    %v1295 = vpack.c.b16 %v943, %v939
    %v1296 = vpack.c.b16 %v944, %v940
    %v1297 = vpack.c.b16 %v949, %v945
    %v1298 = vpack.c.b16 %v950, %v946
    %v1299 = vpack.c.b16 %v951, %v947
    %v1300 = vpack.c.b16 %v952, %v948
    %v1301 = vpack.c.b16 %v957, %v953
    %v1302 = vpack.c.b16 %v958, %v954
    %v1303 = vpack.c.b16 %v959, %v955
    %v1304 = vpack.c.b16 %v960, %v956
    %v1305 = vpack.c.b16 %v965, %v961
    %v1306 = vpack.c.b16 %v966, %v962
    %v1307 = vpack.c.b16 %v967, %v963
    %v1308 = vpack.c.b16 %v968, %v964
    %v1309 = vpack.c.b16 %v973, %v969
    %v1310 = vpack.c.b16 %v974, %v970
    %v1311 = vpack.c.b16 %v975, %v971
    %v1312 = vpack.c.b16 %v976, %v972
    %v1313 = vpack.c.b16 %v981, %v977
    %v1314 = vpack.c.b16 %v982, %v978
    %v1315 = vpack.c.b16 %v983, %v979
    %v1316 = vpack.c.b16 %v984, %v980
    %v1317 = vpack.c.b16 %v989, %v985
    %v1318 = vpack.c.b16 %v990, %v986
    %v1319 = vpack.c.b16 %v991, %v987
    %v1320 = vpack.c.b16 %v992, %v988
    %v1321 = vpack.c.b16 %v997, %v993
    %v1322 = vpack.c.b16 %v998, %v994
    %v1323 = vpack.c.b16 %v999, %v995
    %v1324 = vpack.c.b16 %v1000, %v996
    %v1325 = vpack.c.b16 %v1005, %v1001
    %v1326 = vpack.c.b16 %v1006, %v1002
    %v1327 = vpack.c.b16 %v1007, %v1003
    %v1328 = vpack.c.b16 %v1008, %v1004
    %v1329 = vpack.c.b16 %v1013, %v1009
    %v1330 = vpack.c.b16 %v1014, %v1010
    %v1331 = vpack.c.b16 %v1015, %v1011
    %v1332 = vpack.c.b16 %v1016, %v1012
    %v1333 = vpack.c.b16 %v1021, %v1017
    %v1334 = vpack.c.b16 %v1022, %v1018
    %v1335 = vpack.c.b16 %v1023, %v1019
    %v1336 = vpack.c.b16 %v1024, %v1020
    %v1337 = vpack.c.b16 %v1029, %v1025
    %v1338 = vpack.c.b16 %v1030, %v1026
    %v1339 = vpack.c.b16 %v1031, %v1027
    %v1340 = vpack.c.b16 %v1032, %v1028
    %v1341 = vpack.c.b16 %v1037, %v1033
    %v1342 = vpack.c.b16 %v1038, %v1034
    %v1343 = vpack.c.b16 %v1039, %v1035
    %v1344 = vpack.c.b16 %v1040, %v1036
    %v1345 = vpack.c.b16 %v1045, %v1041
    %v1346 = vpack.c.b16 %v1046, %v1042
    %v1347 = vpack.c.b16 %v1047, %v1043
    %v1348 = vpack.c.b16 %v1048, %v1044
    %v1349 = vpack.c.b16 %v1053, %v1049
    %v1350 = vpack.c.b16 %v1054, %v1050
    %v1351 = vpack.c.b16 %v1055, %v1051
    %v1352 = vpack.c.b16 %v1056, %v1052
    %v1353 = vpack.c.b16 %v1061, %v1057
    %v1354 = vpack.c.b16 %v1062, %v1058
    %v1355 = vpack.c.b16 %v1063, %v1059
    %v1356 = vpack.c.b16 %v1064, %v1060
    %v1357 = vpack.c.b16 %v1069, %v1065
    %v1358 = vpack.c.b16 %v1070, %v1066
    %v1359 = vpack.c.b16 %v1071, %v1067
    %v1360 = vpack.c.b16 %v1072, %v1068
    %v1361 = vpack.c.b16 %v1077, %v1073
    %v1362 = vpack.c.b16 %v1078, %v1074
    %v1363 = vpack.c.b16 %v1079, %v1075
    %v1364 = vpack.c.b16 %v1080, %v1076
    %v1365 = vpack.c.b16 %v1085, %v1081
    %v1366 = vpack.c.b16 %v1086, %v1082
    %v1367 = vpack.c.b16 %v1087, %v1083
    %v1368 = vpack.c.b16 %v1088, %v1084
    %v1369 = vpack.c.b16 %v1093, %v1089
    %v1370 = vpack.c.b16 %v1094, %v1090
    %v1371 = vpack.c.b16 %v1095, %v1091
    %v1372 = vpack.c.b16 %v1096, %v1092
    %v1373 = vpack.c.b16 %v1101, %v1097
    %v1374 = vpack.c.b16 %v1102, %v1098
    %v1375 = vpack.c.b16 %v1103, %v1099
    %v1376 = vpack.c.b16 %v1104, %v1100
    %v1377 = vpack.c.b16 %v1109, %v1105
    %v1378 = vpack.c.b16 %v1110, %v1106
    %v1379 = vpack.c.b16 %v1111, %v1107
    %v1380 = vpack.c.b16 %v1112, %v1108
    %v1381 = vpack.c.b16 %v1117, %v1113
    %v1382 = vpack.c.b16 %v1118, %v1114
    %v1383 = vpack.c.b16 %v1119, %v1115
    %v1384 = vpack.c.b16 %v1120, %v1116
    %v1385 = vpack.c.b16 %v1125, %v1121
    %v1386 = vpack.c.b16 %v1126, %v1122
    %v1387 = vpack.c.b16 %v1127, %v1123
    %v1388 = vpack.c.b16 %v1128, %v1124
    %v1389 = vpack.c.b16 %v1133, %v1129
    %v1390 = vpack.c.b16 %v1134, %v1130
    %v1391 = vpack.c.b16 %v1135, %v1131
    %v1392 = vpack.c.b16 %v1136, %v1132
    %1649 = vmatprep.subr.bf16.mxu0 %v1138
    %1650 = vmatpush1.bf16.msra.mxu0 %v1137
    %1651 = vmatprep.subr.bf16.mxu0 %v1142
    %1652 = vmatpush1.bf16.msra.mxu0 %v1141
    %1653 = vmatprep.subr.bf16.mxu0 %v1146
    %1654 = vmatpush1.bf16.msra.mxu0 %v1145
    %1655 = vmatprep.subr.bf16.mxu0 %v1150
    %1656 = vmatpush1.bf16.msra.mxu0 %v1149
    %1657 = vmatprep.subr.bf16.mxu0 %v1154
    %1658 = vmatpush1.bf16.msra.mxu0 %v1153
    %1659 = vmatprep.subr.bf16.mxu0 %v1158
    %1660 = vmatpush1.bf16.msra.mxu0 %v1157
    %1661 = vmatprep.subr.bf16.mxu0 %v1162
    %1662 = vmatpush1.bf16.msra.mxu0 %v1161
    %1663 = vmatprep.subr.bf16.mxu0 %v1166
    %1664 = vmatpush1.bf16.msra.mxu0 %v1165
    %1665 = vmatprep.subr.bf16.mxu0 %v1170
    %1666 = vmatpush1.bf16.msra.mxu0 %v1169
    %1667 = vmatprep.subr.bf16.mxu0 %v1174
    %1668 = vmatpush1.bf16.msra.mxu0 %v1173
    %1669 = vmatprep.subr.bf16.mxu0 %v1178
    %1670 = vmatpush1.bf16.msra.mxu0 %v1177
    %1671 = vmatprep.subr.bf16.mxu0 %v1182
    %1672 = vmatpush1.bf16.msra.mxu0 %v1181
    %1673 = vmatprep.subr.bf16.mxu0 %v1186
    %1674 = vmatpush1.bf16.msra.mxu0 %v1185
    %1675 = vmatprep.subr.bf16.mxu0 %v1190
    %1676 = vmatpush1.bf16.msra.mxu0 %v1189
    %1677 = vmatprep.subr.bf16.mxu0 %v1194
    %1678 = vmatpush1.bf16.msra.mxu0 %v1193
    %1679 = vmatprep.subr.bf16.mxu0 %v1198
    %1680 = vmatpush1.bf16.msra.mxu0 %v1197
    %1681 = vmatprep.mubr.bf16.mxu0 %v354
    %1682 = vmatmul.mubr.bf16.gmra.mrb[0].mxu0 %v353
    %v1683 = vpop.f32.mrb[0].mxu0
    %v1684 = vadd.f32 %v324, %v1683
    %v1685 = vpop.f32.mrb[0].mxu0
    %v1686 = vadd.f32 %v328, %v1685
    %v1687 = vpop.f32.mrb[0].mxu0
    %v1688 = vpop.f32.mrb[0].mxu0
    %1689 = vdwg.mxu0
    %1690 = vmatprep.subr.bf16.mxu0 %v1202
    %1691 = vmatpush1.bf16.msra.mxu0 %v1201
    %1692 = vmatprep.subr.bf16.mxu0 %v1206
    %1693 = vmatpush1.bf16.msra.mxu0 %v1205
    %1694 = vmatprep.subr.bf16.mxu0 %v1210
    %1695 = vmatpush1.bf16.msra.mxu0 %v1209
    %1696 = vmatprep.subr.bf16.mxu0 %v1214
    %1697 = vmatpush1.bf16.msra.mxu0 %v1213
    %1698 = vmatprep.subr.bf16.mxu0 %v1218
    %1699 = vmatpush1.bf16.msra.mxu0 %v1217
    %1700 = vmatprep.subr.bf16.mxu0 %v1222
    %1701 = vmatpush1.bf16.msra.mxu0 %v1221
    %1702 = vmatprep.subr.bf16.mxu0 %v1226
    %1703 = vmatpush1.bf16.msra.mxu0 %v1225
    %1704 = vmatprep.subr.bf16.mxu0 %v1230
    %1705 = vmatpush1.bf16.msra.mxu0 %v1229
    %1706 = vmatprep.subr.bf16.mxu0 %v1234
    %1707 = vmatpush1.bf16.msra.mxu0 %v1233
    %1708 = vmatprep.subr.bf16.mxu0 %v1238
    %1709 = vmatpush1.bf16.msra.mxu0 %v1237
    %1710 = vmatprep.subr.bf16.mxu0 %v1242
    %1711 = vmatpush1.bf16.msra.mxu0 %v1241
    %1712 = vmatprep.subr.bf16.mxu0 %v1246
    %1713 = vmatpush1.bf16.msra.mxu0 %v1245
    %1714 = vmatprep.subr.bf16.mxu0 %v1250
    %1715 = vmatpush1.bf16.msra.mxu0 %v1249
    %1716 = vmatprep.subr.bf16.mxu0 %v1254
    %1717 = vmatpush1.bf16.msra.mxu0 %v1253
    %1718 = vmatprep.subr.bf16.mxu0 %v1258
    %1719 = vmatpush1.bf16.msra.mxu0 %v1257
    %1720 = vmatprep.subr.bf16.mxu0 %v1262
    %1721 = vmatpush1.bf16.msra.mxu0 %v1261
    %1722 = vmatprep.mubr.bf16.mxu0 %v356
    %1723 = vmatmul.mubr.bf16.gmra.mrb[0].mxu0 %v355
    %v1724 = vpop.f32.mrb[0].mxu0
    %v1725 = vadd.f32 %v1684, %v1724
    %v1726 = vpop.f32.mrb[0].mxu0
    %v1727 = vadd.f32 %v1686, %v1726
    %v1728 = vpop.f32.mrb[0].mxu0
    %v1729 = vpop.f32.mrb[0].mxu0
    %1730 = vdwg.mxu0
    %1731 = vmatprep.subr.bf16.mxu0 %v1266
    %1732 = vmatpush1.bf16.msra.mxu0 %v1265
    %1733 = vmatprep.subr.bf16.mxu0 %v1270
    %1734 = vmatpush1.bf16.msra.mxu0 %v1269
    %1735 = vmatprep.subr.bf16.mxu0 %v1274
    %1736 = vmatpush1.bf16.msra.mxu0 %v1273
    %1737 = vmatprep.subr.bf16.mxu0 %v1278
    %1738 = vmatpush1.bf16.msra.mxu0 %v1277
    %1739 = vmatprep.subr.bf16.mxu0 %v1282
    %1740 = vmatpush1.bf16.msra.mxu0 %v1281
    %1741 = vmatprep.subr.bf16.mxu0 %v1286
    %1742 = vmatpush1.bf16.msra.mxu0 %v1285
    %1743 = vmatprep.subr.bf16.mxu0 %v1290
    %1744 = vmatpush1.bf16.msra.mxu0 %v1289
    %1745 = vmatprep.subr.bf16.mxu0 %v1294
    %1746 = vmatpush1.bf16.msra.mxu0 %v1293
    %1747 = vmatprep.subr.bf16.mxu0 %v1298
    %1748 = vmatpush1.bf16.msra.mxu0 %v1297
    %1749 = vmatprep.subr.bf16.mxu0 %v1302
    %1750 = vmatpush1.bf16.msra.mxu0 %v1301
    %1751 = vmatprep.subr.bf16.mxu0 %v1306
    %1752 = vmatpush1.bf16.msra.mxu0 %v1305
    %1753 = vmatprep.subr.bf16.mxu0 %v1310
    %1754 = vmatpush1.bf16.msra.mxu0 %v1309
    %1755 = vmatprep.subr.bf16.mxu0 %v1314
    %1756 = vmatpush1.bf16.msra.mxu0 %v1313
    %1757 = vmatprep.subr.bf16.mxu0 %v1318
    %1758 = vmatpush1.bf16.msra.mxu0 %v1317
    %1759 = vmatprep.subr.bf16.mxu0 %v1322
    %1760 = vmatpush1.bf16.msra.mxu0 %v1321
    %1761 = vmatprep.subr.bf16.mxu0 %v1326
    %1762 = vmatpush1.bf16.msra.mxu0 %v1325
    %1763 = vmatprep.mubr.bf16.mxu0 %v358
    %1764 = vmatmul.mubr.bf16.gmra.mrb[0].mxu0 %v357
    %v1765 = vpop.f32.mrb[0].mxu0
    %v1766 = vadd.f32 %v1725, %v1765
    %v1767 = vpop.f32.mrb[0].mxu0
    %v1768 = vadd.f32 %v1727, %v1767
    %v1769 = vpop.f32.mrb[0].mxu0
    %v1770 = vpop.f32.mrb[0].mxu0
    %1771 = vdwg.mxu0
    %1772 = vmatprep.subr.bf16.mxu0 %v1330
    %1773 = vmatpush1.bf16.msra.mxu0 %v1329
    %1774 = vmatprep.subr.bf16.mxu0 %v1334
    %1775 = vmatpush1.bf16.msra.mxu0 %v1333
    %1776 = vmatprep.subr.bf16.mxu0 %v1338
    %1777 = vmatpush1.bf16.msra.mxu0 %v1337
    %1778 = vmatprep.subr.bf16.mxu0 %v1342
    %1779 = vmatpush1.bf16.msra.mxu0 %v1341
    %1780 = vmatprep.subr.bf16.mxu0 %v1346
    %1781 = vmatpush1.bf16.msra.mxu0 %v1345
    %1782 = vmatprep.subr.bf16.mxu0 %v1350
    %1783 = vmatpush1.bf16.msra.mxu0 %v1349
    %1784 = vmatprep.subr.bf16.mxu0 %v1354
    %1785 = vmatpush1.bf16.msra.mxu0 %v1353
    %1786 = vmatprep.subr.bf16.mxu0 %v1358
    %1787 = vmatpush1.bf16.msra.mxu0 %v1357
    %1788 = vmatprep.subr.bf16.mxu0 %v1362
    %1789 = vmatpush1.bf16.msra.mxu0 %v1361
    %1790 = vmatprep.subr.bf16.mxu0 %v1366
    %1791 = vmatpush1.bf16.msra.mxu0 %v1365
    %1792 = vmatprep.subr.bf16.mxu0 %v1370
    %1793 = vmatpush1.bf16.msra.mxu0 %v1369
    %1794 = vmatprep.subr.bf16.mxu0 %v1374
    %1795 = vmatpush1.bf16.msra.mxu0 %v1373
    %1796 = vmatprep.subr.bf16.mxu0 %v1378
    %1797 = vmatpush1.bf16.msra.mxu0 %v1377
    %1798 = vmatprep.subr.bf16.mxu0 %v1382
    %1799 = vmatpush1.bf16.msra.mxu0 %v1381
    %1800 = vmatprep.subr.bf16.mxu0 %v1386
    %1801 = vmatpush1.bf16.msra.mxu0 %v1385
    %1802 = vmatprep.subr.bf16.mxu0 %v1390
    %1803 = vmatpush1.bf16.msra.mxu0 %v1389
    %1804 = vmatprep.mubr.bf16.mxu0 %v360
    %1805 = vmatmul.mubr.bf16.gmra.mrb[0].mxu0 %v359
    %v1806 = vpop.f32.mrb[0].mxu0
    %v1807 = vadd.f32 %v1766, %v1806
    %v1808 = vpop.f32.mrb[0].mxu0
    %v1809 = vadd.f32 %v1768, %v1808
    %v1810 = vpop.f32.mrb[0].mxu0
    %v1811 = vpop.f32.mrb[0].mxu0
    %1812 = vdwg.mxu0
    %1813 = vmatprep.subr.bf16.mxu0 %v1140
    %1814 = vmatpush1.bf16.msra.mxu0 %v1139
    %1815 = vmatprep.subr.bf16.mxu0 %v1144
    %1816 = vmatpush1.bf16.msra.mxu0 %v1143
    %1817 = vmatprep.subr.bf16.mxu0 %v1148
    %1818 = vmatpush1.bf16.msra.mxu0 %v1147
    %1819 = vmatprep.subr.bf16.mxu0 %v1152
    %1820 = vmatpush1.bf16.msra.mxu0 %v1151
    %1821 = vmatprep.subr.bf16.mxu0 %v1156
    %1822 = vmatpush1.bf16.msra.mxu0 %v1155
    %1823 = vmatprep.subr.bf16.mxu0 %v1160
    %1824 = vmatpush1.bf16.msra.mxu0 %v1159
    %1825 = vmatprep.subr.bf16.mxu0 %v1164
    %1826 = vmatpush1.bf16.msra.mxu0 %v1163
    %1827 = vmatprep.subr.bf16.mxu0 %v1168
    %1828 = vmatpush1.bf16.msra.mxu0 %v1167
    %1829 = vmatprep.subr.bf16.mxu0 %v1172
    %1830 = vmatpush1.bf16.msra.mxu0 %v1171
    %1831 = vmatprep.subr.bf16.mxu0 %v1176
    %1832 = vmatpush1.bf16.msra.mxu0 %v1175
    %1833 = vmatprep.subr.bf16.mxu0 %v1180
    %1834 = vmatpush1.bf16.msra.mxu0 %v1179
    %1835 = vmatprep.subr.bf16.mxu0 %v1184
    %1836 = vmatpush1.bf16.msra.mxu0 %v1183
    %1837 = vmatprep.subr.bf16.mxu0 %v1188
    %1838 = vmatpush1.bf16.msra.mxu0 %v1187
    %1839 = vmatprep.subr.bf16.mxu0 %v1192
    %1840 = vmatpush1.bf16.msra.mxu0 %v1191
    %1841 = vmatprep.subr.bf16.mxu0 %v1196
    %1842 = vmatpush1.bf16.msra.mxu0 %v1195
    %1843 = vmatprep.subr.bf16.mxu0 %v1200
    %1844 = vmatpush1.bf16.msra.mxu0 %v1199
    %1845 = vmatprep.mubr.bf16.mxu0 %v354
    %1846 = vmatmul.mubr.bf16.gmra.mrb[0].mxu0 %v353
    %v1847 = vpop.f32.mrb[0].mxu0
    %v1848 = vadd.f32 %v332, %v1847
    %v1849 = vpop.f32.mrb[0].mxu0
    %v1850 = vadd.f32 %v336, %v1849
    %v1851 = vpop.f32.mrb[0].mxu0
    %v1852 = vpop.f32.mrb[0].mxu0
    %1853 = vdwg.mxu0
    %1854 = vmatprep.subr.bf16.mxu0 %v1204
    %1855 = vmatpush1.bf16.msra.mxu0 %v1203
    %1856 = vmatprep.subr.bf16.mxu0 %v1208
    %1857 = vmatpush1.bf16.msra.mxu0 %v1207
    %1858 = vmatprep.subr.bf16.mxu0 %v1212
    %1859 = vmatpush1.bf16.msra.mxu0 %v1211
    %1860 = vmatprep.subr.bf16.mxu0 %v1216
    %1861 = vmatpush1.bf16.msra.mxu0 %v1215
    %1862 = vmatprep.subr.bf16.mxu0 %v1220
    %1863 = vmatpush1.bf16.msra.mxu0 %v1219
    %1864 = vmatprep.subr.bf16.mxu0 %v1224
    %1865 = vmatpush1.bf16.msra.mxu0 %v1223
    %1866 = vmatprep.subr.bf16.mxu0 %v1228
    %1867 = vmatpush1.bf16.msra.mxu0 %v1227
    %1868 = vmatprep.subr.bf16.mxu0 %v1232
    %1869 = vmatpush1.bf16.msra.mxu0 %v1231
    %1870 = vmatprep.subr.bf16.mxu0 %v1236
    %1871 = vmatpush1.bf16.msra.mxu0 %v1235
    %1872 = vmatprep.subr.bf16.mxu0 %v1240
    %1873 = vmatpush1.bf16.msra.mxu0 %v1239
    %1874 = vmatprep.subr.bf16.mxu0 %v1244
    %1875 = vmatpush1.bf16.msra.mxu0 %v1243
    %1876 = vmatprep.subr.bf16.mxu0 %v1248
    %1877 = vmatpush1.bf16.msra.mxu0 %v1247
    %1878 = vmatprep.subr.bf16.mxu0 %v1252
    %1879 = vmatpush1.bf16.msra.mxu0 %v1251
    %1880 = vmatprep.subr.bf16.mxu0 %v1256
    %1881 = vmatpush1.bf16.msra.mxu0 %v1255
    %1882 = vmatprep.subr.bf16.mxu0 %v1260
    %1883 = vmatpush1.bf16.msra.mxu0 %v1259
    %1884 = vmatprep.subr.bf16.mxu0 %v1264
    %1885 = vmatpush1.bf16.msra.mxu0 %v1263
    %1886 = vmatprep.mubr.bf16.mxu0 %v356
    %1887 = vmatmul.mubr.bf16.gmra.mrb[0].mxu0 %v355
    %v1888 = vpop.f32.mrb[0].mxu0
    %v1889 = vadd.f32 %v1848, %v1888
    %v1890 = vpop.f32.mrb[0].mxu0
    %v1891 = vadd.f32 %v1850, %v1890
    %v1892 = vpop.f32.mrb[0].mxu0
    %v1893 = vpop.f32.mrb[0].mxu0
    %1894 = vdwg.mxu0
    %1895 = vmatprep.subr.bf16.mxu0 %v1268
    %1896 = vmatpush1.bf16.msra.mxu0 %v1267
    %1897 = vmatprep.subr.bf16.mxu0 %v1272
    %1898 = vmatpush1.bf16.msra.mxu0 %v1271
    %1899 = vmatprep.subr.bf16.mxu0 %v1276
    %1900 = vmatpush1.bf16.msra.mxu0 %v1275
    %1901 = vmatprep.subr.bf16.mxu0 %v1280
    %1902 = vmatpush1.bf16.msra.mxu0 %v1279
    %1903 = vmatprep.subr.bf16.mxu0 %v1284
    %1904 = vmatpush1.bf16.msra.mxu0 %v1283
    %1905 = vmatprep.subr.bf16.mxu0 %v1288
    %1906 = vmatpush1.bf16.msra.mxu0 %v1287
    %1907 = vmatprep.subr.bf16.mxu0 %v1292
    %1908 = vmatpush1.bf16.msra.mxu0 %v1291
    %1909 = vmatprep.subr.bf16.mxu0 %v1296
    %1910 = vmatpush1.bf16.msra.mxu0 %v1295
    %1911 = vmatprep.subr.bf16.mxu0 %v1300
    %1912 = vmatpush1.bf16.msra.mxu0 %v1299
    %1913 = vmatprep.subr.bf16.mxu0 %v1304
    %1914 = vmatpush1.bf16.msra.mxu0 %v1303
    %1915 = vmatprep.subr.bf16.mxu0 %v1308
    %1916 = vmatpush1.bf16.msra.mxu0 %v1307
    %1917 = vmatprep.subr.bf16.mxu0 %v1312
    %1918 = vmatpush1.bf16.msra.mxu0 %v1311
    %1919 = vmatprep.subr.bf16.mxu0 %v1316
    %1920 = vmatpush1.bf16.msra.mxu0 %v1315
    %1921 = vmatprep.subr.bf16.mxu0 %v1320
    %1922 = vmatpush1.bf16.msra.mxu0 %v1319
    %1923 = vmatprep.subr.bf16.mxu0 %v1324
    %1924 = vmatpush1.bf16.msra.mxu0 %v1323
    %1925 = vmatprep.subr.bf16.mxu0 %v1328
    %1926 = vmatpush1.bf16.msra.mxu0 %v1327
    %1927 = vmatprep.mubr.bf16.mxu0 %v358
    %1928 = vmatmul.mubr.bf16.gmra.mrb[0].mxu0 %v357
    %v1929 = vpop.f32.mrb[0].mxu0
    %v1930 = vadd.f32 %v1889, %v1929
    %v1931 = vpop.f32.mrb[0].mxu0
    %v1932 = vadd.f32 %v1891, %v1931
    %v1933 = vpop.f32.mrb[0].mxu0
    %v1934 = vpop.f32.mrb[0].mxu0
    %1935 = vdwg.mxu0
    %1936 = vmatprep.subr.bf16.mxu0 %v1332
    %1937 = vmatpush1.bf16.msra.mxu0 %v1331
    %1938 = vmatprep.subr.bf16.mxu0 %v1336
    %1939 = vmatpush1.bf16.msra.mxu0 %v1335
    %1940 = vmatprep.subr.bf16.mxu0 %v1340
    %1941 = vmatpush1.bf16.msra.mxu0 %v1339
    %1942 = vmatprep.subr.bf16.mxu0 %v1344
    %1943 = vmatpush1.bf16.msra.mxu0 %v1343
    %1944 = vmatprep.subr.bf16.mxu0 %v1348
    %1945 = vmatpush1.bf16.msra.mxu0 %v1347
    %1946 = vmatprep.subr.bf16.mxu0 %v1352
    %1947 = vmatpush1.bf16.msra.mxu0 %v1351
    %1948 = vmatprep.subr.bf16.mxu0 %v1356
    %1949 = vmatpush1.bf16.msra.mxu0 %v1355
    %1950 = vmatprep.subr.bf16.mxu0 %v1360
    %1951 = vmatpush1.bf16.msra.mxu0 %v1359
    %1952 = vmatprep.subr.bf16.mxu0 %v1364
    %1953 = vmatpush1.bf16.msra.mxu0 %v1363
    %1954 = vmatprep.subr.bf16.mxu0 %v1368
    %1955 = vmatpush1.bf16.msra.mxu0 %v1367
    %1956 = vmatprep.subr.bf16.mxu0 %v1372
    %1957 = vmatpush1.bf16.msra.mxu0 %v1371
    %1958 = vmatprep.subr.bf16.mxu0 %v1376
    %1959 = vmatpush1.bf16.msra.mxu0 %v1375
    %1960 = vmatprep.subr.bf16.mxu0 %v1380
    %1961 = vmatpush1.bf16.msra.mxu0 %v1379
    %1962 = vmatprep.subr.bf16.mxu0 %v1384
    %1963 = vmatpush1.bf16.msra.mxu0 %v1383
    %1964 = vmatprep.subr.bf16.mxu0 %v1388
    %1965 = vmatpush1.bf16.msra.mxu0 %v1387
    %1966 = vmatprep.subr.bf16.mxu0 %v1392
    %1967 = vmatpush1.bf16.msra.mxu0 %v1391
    %1968 = vmatprep.mubr.bf16.mxu0 %v360
    %1969 = vmatmul.mubr.bf16.gmra.mrb[0].mxu0 %v359
    %v1970 = vpop.f32.mrb[0].mxu0
    %v1971 = vadd.f32 %v1930, %v1970
    %v1972 = vpop.f32.mrb[0].mxu0
    %v1973 = vadd.f32 %v1932, %v1972
    %v1974 = vpop.f32.mrb[0].mxu0
    %v1975 = vpop.f32.mrb[0].mxu0
    %1976 = vdwg.mxu0
    %v1977 = vxor.u32 %v1971, 2147483648
    %v1978 = vxor.u32 %v1973, 2147483648
    %v1979 = vmul.f32 %v1977, 1.442695
    %v1980 = vpow.pop %v1979
    %v1981 = vmul.f32 %v1978, 1.442695
    %v1982 = vpow.pop %v1981
    %v1983 = vadd.f32 %v1980, 1.0
    %v1984 = vadd.f32 %v1982, 1.0
    %v1985 = vrcp.pop %v1983
    %v1986 = vmul.f32 1.0, %v1985
    %v1987 = vrcp.pop %v1984
    %v1988 = vmul.f32 1.0, %v1987
    %v1989 = vmul.f32 %v1807, %v1986
    %v1990 = vmul.f32 %v1809, %v1988
    %v1991 = vld [vmem:[%s3] sm:$0xff]
    %v1992 = vmul.f32 %v1991, %v1990
    %v1993 = vadd.f32 %v1989, %v1992
    %1994 = vst [vmem:[#allocation8] sm:$0xff] %v1993
    %1995 = vst [vmem:[#allocation9] sm:$0xff] %v1989
    %1996 = vst [vmem:[#allocation11] sm:$0xff] %v1990
    // Predicated region
    $region30: #{tpu_custom_call.1} parent=1 // pred_check
      _
    $region31: #{tpu_custom_call.1} parent=1 // pred_check_branch
      %1998 = sbr.rel (0) target = $region33
    $region32: #{tpu_custom_call.1} parent=1 // pred_region
      %s2000 = ssub.s32 128, 128
      %2001 = vsyncadd [#allocation4], %s2000
      %s2003 = sshll.u32 [#allocation8], 4
      %s2004 = int_to_ptr.vmem [resolvable:$true] %s2003
      %2006 = dma.vmem_to_hbm [thread:$0]  %s2004, 128, %s4, [#allocation4]
    $region33: #{tpu_custom_call.1} parent=1 // pred_fallthru
      _
    // Predicated region
    $region34: #{tpu_custom_call.1} parent=1 // pred_check
      _
    $region35: #{tpu_custom_call.1} parent=1 // pred_check_branch
      %2008 = sbr.rel (0) target = $region37
    $region36: #{tpu_custom_call.1} parent=1 // pred_region
      %s2010 = ssub.s32 128, 128
      %2011 = vsyncadd [#allocation10], %s2010
      %s2013 = sshll.u32 [#allocation9], 4
      %s2014 = int_to_ptr.vmem [resolvable:$true] %s2013
      %2016 = dma.vmem_to_hbm [thread:$0]  %s2014, 128, %s5, [#allocation10]
    $region37: #{tpu_custom_call.1} parent=1 // pred_fallthru
      _
    // Predicated region
    $region38: #{tpu_custom_call.1} parent=1 // pred_check
      _
    $region39: #{tpu_custom_call.1} parent=1 // pred_check_branch
      %2018 = sbr.rel (0) target = $region41
    $region40: #{tpu_custom_call.1} parent=1 // pred_region
      %s2020 = ssub.s32 128, 128
      %2021 = vsyncadd [#allocation10], %s2020
      %s2023 = sshll.u32 [#allocation11], 4
      %s2024 = int_to_ptr.vmem [resolvable:$true] %s2023
      %2026 = dma.vmem_to_hbm [thread:$0]  %s2024, 128, %s6, [#allocation10]
    $region41: #{tpu_custom_call.1} parent=1 // pred_fallthru
      _
    // Predicated region
    $region42: #{tpu_custom_call.1} parent=1 // pred_check
      _
    $region43: #{tpu_custom_call.1} parent=1 // pred_check_branch
      %2028 = sbr.rel (0) target = $region45
    $region44: #{tpu_custom_call.1} parent=1 // pred_region
      %2029 = dma.done [#allocation4], 128
    $region45: #{tpu_custom_call.1} parent=1 // pred_fallthru
      _
    // Predicated region
    $region46: #{tpu_custom_call.1} parent=1 // pred_check
      _
    $region47: #{tpu_custom_call.1} parent=1 // pred_check_branch
      %2031 = sbr.rel (0) target = $region49
    $region48: #{tpu_custom_call.1} parent=1 // pred_region
      %2032 = dma.done [#allocation10], 128
    $region49: #{tpu_custom_call.1} parent=1 // pred_fallthru
      _
    // Predicated region
    $region50: #{tpu_custom_call.1} parent=1 // pred_check
      _
    $region51: #{tpu_custom_call.1} parent=1 // pred_check_branch
      %2034 = sbr.rel (0) target = $region53
    $region52: #{tpu_custom_call.1} parent=1 // pred_region
      %2035 = dma.done [#allocation10], 128
    $region53: #{tpu_custom_call.1} parent=1 // pred_fallthru
      _
    %2036 = vsyncpa [#allocation3], 1
    %2037 = vsyncpa [#allocation6], 1
    %2038 = vsyncpa [#allocation4], 1
    %2039 = vsyncpa [#allocation10], 1

// kernel: tpu_custom_call.1
$region0: #{tpu_custom_call.1}
  #allocation0 [shape = 'u32[]', space=smem, size = 0x4, offset = 0x4, fixed_abs, tag = 'smem constant byte address 0x4 - core index']
  #allocation1 [shape = 'u32[144,128]{1,0:T(1,128)}', space=vmem, size = 0x12000, scoped, tag = 'internal scratch']
  %s0 = inlined_call_operand.hbm [shape: bf16[8,1024], index: 0, kind: input, shape index: {}]
  %s1 = inlined_call_operand.hbm [shape: bf16[1024,512], index: 1, kind: input, shape index: {}]
  %s2 = inlined_call_operand.hbm [shape: f32[1,512], index: 2, kind: input, shape index: {}]
  %s3 = inlined_call_operand.vmem [shape: f32[8,128], index: 3, kind: input, shape index: {}]
  %s4 = inlined_call_operand.hbm [shape: f32[8,128], index: 4, kind: output, shape index: {0}]
  %s5 = inlined_call_operand.hbm [shape: f32[8,128], index: 5, kind: output, shape index: {1}]
  %s6 = inlined_call_operand.hbm [shape: f32[8,128], index: 6, kind: output, shape index: {2}]
  %7 = xla_tuple %s4, %s5, %s6
  %s8 = sld [smem:[#allocation0]]
  $region54: #{tpu_custom_call.1} parent=0
    _
  %s10 = ssub.s32 1, %s8
  %s11 = scalar_select 0, %s10, %s8
  $region1: #{tpu_custom_call.1} parent=0
    #allocation2 [shape = 'u8[16384]{0}', space=vmem, size = 0x4000, scoped, tag = 'input window, operand 0, single buffered']
    #allocation3 [shape = 's32[1]{0}', space=sflag, size = 0x4, scoped, tag = 'scoped memory for tpu_custom_call.1']
    #allocation4 [shape = 's32[1]{0}', space=sflag, size = 0x4, scoped, tag = 'scoped memory for tpu_custom_call.1']
    #allocation5 [shape = 'u8[1048576]{0}', space=vmem, size = 0x100000, scoped, tag = 'input window, operand 1, single buffered']
    #allocation6 [shape = 's32[1]{0}', space=sflag, size = 0x4, scoped, tag = 'scoped memory for tpu_custom_call.1']
    #allocation7 [shape = 'u8[2048]{0}', space=vmem, size = 0x800, scoped, tag = 'input window, operand 2, single buffered']
    #allocation8 [shape = 'u8[4096]{0}', space=vmem, size = 0x1000, scoped, tag = 'output window, operand 0, single buffered']
    #allocation9 [shape = 'u8[4096]{0}', space=vmem, size = 0x1000, scoped, tag = 'output window, operand 1, single buffered']
    #allocation10 [shape = 's32[1]{0}', space=sflag, size = 0x4, scoped, tag = 'scoped memory for tpu_custom_call.1']
    #allocation11 [shape = 'u8[4096]{0}', space=vmem, size = 0x1000, scoped, tag = 'output window, operand 2, single buffered']
    %12 = vsyncpa [#allocation3], 0
    %13 = vsyncpa [#allocation6], 0
    %14 = vsyncpa [#allocation4], 0
    %15 = vsyncpa [#allocation10], 0
    // Predicated region
    $region2: #{tpu_custom_call.1} parent=1 // pred_check
      _
    $region3: #{tpu_custom_call.1} parent=1 // pred_check_branch
      %17 = sbr.rel (0) target = $region5
    $region4: #{tpu_custom_call.1} parent=1 // pred_region
      %s19 = ssub.s32 512, 512
      %20 = vsyncadd [#allocation3], %s19
      %s22 = sshll.u32 [#allocation2], 4
      %s23 = int_to_ptr.vmem [resolvable:$true] %s22
      %25 = dma.hbm_to_vmem [thread:$0]  %s0, 512, %s23, [#allocation3]
    $region5: #{tpu_custom_call.1} parent=1 // pred_fallthru
      _
    // Predicated region
    $region6: #{tpu_custom_call.1} parent=1 // pred_check
      _
    $region7: #{tpu_custom_call.1} parent=1 // pred_check_branch
      %27 = sbr.rel (0) target = $region9
    $region8: #{tpu_custom_call.1} parent=1 // pred_region
      %s29 = ssub.s32 32768, 32768
      %30 = vsyncadd [#allocation6], %s29
      %s31 = sshll.u32 [#allocation5], 4
      %s32 = int_to_ptr.vmem [resolvable:$true] %s31
      %37 = dma.hbm_to_vmem [thread:$0]  %s1, 32768, %s32, [#allocation6], 256, 256, 16
    $region9: #{tpu_custom_call.1} parent=1 // pred_fallthru
      _
    // Predicated region
    $region10: #{tpu_custom_call.1} parent=1 // pred_check
      _
    $region11: #{tpu_custom_call.1} parent=1 // pred_check_branch
      %39 = sbr.rel (0) target = $region13
    $region12: #{tpu_custom_call.1} parent=1 // pred_region
      %s41 = ssub.s32 64, 64
      %42 = vsyncadd [#allocation6], %s41
      %s44 = sshll.u32 [#allocation7], 4
      %s45 = int_to_ptr.vmem [resolvable:$true] %s44
      %47 = dma.hbm_to_vmem [thread:$0]  %s2, 64, %s45, [#allocation6]
    $region13: #{tpu_custom_call.1} parent=1 // pred_fallthru
      _
    // Predicated region
    $region14: #{tpu_custom_call.1} parent=1 // pred_check
      _
    $region15: #{tpu_custom_call.1} parent=1 // pred_check_branch
      %49 = sbr.rel (0) target = $region17
    $region16: #{tpu_custom_call.1} parent=1 // pred_region
      _
    $region17: #{tpu_custom_call.1} parent=1 // pred_fallthru
      _
    // Predicated region
    $region18: #{tpu_custom_call.1} parent=1 // pred_check
      _
    $region19: #{tpu_custom_call.1} parent=1 // pred_check_branch
      %51 = sbr.rel (0) target = $region21
    $region20: #{tpu_custom_call.1} parent=1 // pred_region
      %52 = dma.done [#allocation3], 512
    $region21: #{tpu_custom_call.1} parent=1 // pred_fallthru
      _
    // Predicated region
    $region22: #{tpu_custom_call.1} parent=1 // pred_check
      _
    $region23: #{tpu_custom_call.1} parent=1 // pred_check_branch
      %54 = sbr.rel (0) target = $region25
    $region24: #{tpu_custom_call.1} parent=1 // pred_region
      %55 = dma.done [#allocation6], 32768
    $region25: #{tpu_custom_call.1} parent=1 // pred_fallthru
      _
    // Predicated region
    $region26: #{tpu_custom_call.1} parent=1 // pred_check
      _
    $region27: #{tpu_custom_call.1} parent=1 // pred_check_branch
      %57 = sbr.rel (0) target = $region29
    $region28: #{tpu_custom_call.1} parent=1 // pred_region
      %58 = dma.done [#allocation6], 64
    $region29: #{tpu_custom_call.1} parent=1 // pred_fallthru
      _
    %v59 = vld [vmem:[#allocation2] sm:$0xff]
    %v60 = vld [vmem:[#allocation2 + $0x8] sm:$0xff]
    %v61 = vld [vmem:[#allocation2 + $0x10] sm:$0xff]
    %v62 = vld [vmem:[#allocation2 + $0x18] sm:$0xff]
    %v63 = vld [vmem:[#allocation5] sm:$0xff]
    %v64 = vld [vmem:[#allocation5 + $0x8] sm:$0xff]
    %v65 = vld [vmem:[#allocation5 + $0x10] sm:$0xff]
    %v66 = vld [vmem:[#allocation5 + $0x18] sm:$0xff]
    %v67 = vld [vmem:[#allocation5 + $0x20] sm:$0xff]
    %v68 = vld [vmem:[#allocation5 + $0x28] sm:$0xff]
    %v69 = vld [vmem:[#allocation5 + $0x30] sm:$0xff]
    %v70 = vld [vmem:[#allocation5 + $0x38] sm:$0xff]
    %v71 = vld [vmem:[#allocation5 + $0x40] sm:$0xff]
    %v72 = vld [vmem:[#allocation5 + $0x48] sm:$0xff]
    %v73 = vld [vmem:[#allocation5 + $0x50] sm:$0xff]
    %v74 = vld [vmem:[#allocation5 + $0x58] sm:$0xff]
    %v75 = vld [vmem:[#allocation5 + $0x60] sm:$0xff]
    %v76 = vld [vmem:[#allocation5 + $0x68] sm:$0xff]
    %v77 = vld [vmem:[#allocation5 + $0x70] sm:$0xff]
    %v78 = vld [vmem:[#allocation5 + $0x78] sm:$0xff]
    %v79 = vld [vmem:[#allocation5 + $0x80] sm:$0xff]
    %v80 = vld [vmem:[#allocation5 + $0x88] sm:$0xff]
    %v81 = vld [vmem:[#allocation5 + $0x90] sm:$0xff]
    %v82 = vld [vmem:[#allocation5 + $0x98] sm:$0xff]
    %v83 = vld [vmem:[#allocation5 + $0xa0] sm:$0xff]
    %v84 = vld [vmem:[#allocation5 + $0xa8] sm:$0xff]
    %v85 = vld [vmem:[#allocation5 + $0xb0] sm:$0xff]
    %v86 = vld [vmem:[#allocation5 + $0xb8] sm:$0xff]
    %v87 = vld [vmem:[#allocation5 + $0xc0] sm:$0xff]
    %v88 = vld [vmem:[#allocation5 + $0xc8] sm:$0xff]
    %v89 = vld [vmem:[#allocation5 + $0xd0] sm:$0xff]
    %v90 = vld [vmem:[#allocation5 + $0xd8] sm:$0xff]
    %v91 = vld [vmem:[#allocation5 + $0xe0] sm:$0xff]
    %v92 = vld [vmem:[#allocation5 + $0xe8] sm:$0xff]
    %v93 = vld [vmem:[#allocation5 + $0xf0] sm:$0xff]
    %v94 = vld [vmem:[#allocation5 + $0xf8] sm:$0xff]
    %v95 = vld [vmem:[#allocation5 + $0x100] sm:$0xff]
    %v96 = vld [vmem:[#allocation5 + $0x108] sm:$0xff]
    %v97 = vld [vmem:[#allocation5 + $0x110] sm:$0xff]
    %v98 = vld [vmem:[#allocation5 + $0x118] sm:$0xff]
    %v99 = vld [vmem:[#allocation5 + $0x120] sm:$0xff]
    %v100 = vld [vmem:[#allocation5 + $0x128] sm:$0xff]
    %v101 = vld [vmem:[#allocation5 + $0x130] sm:$0xff]
    %v102 = vld [vmem:[#allocation5 + $0x138] sm:$0xff]
    %v103 = vld [vmem:[#allocation5 + $0x140] sm:$0xff]
    %v104 = vld [vmem:[#allocation5 + $0x148] sm:$0xff]
    %v105 = vld [vmem:[#allocation5 + $0x150] sm:$0xff]
    %v106 = vld [vmem:[#allocation5 + $0x158] sm:$0xff]
    %v107 = vld [vmem:[#allocation5 + $0x160] sm:$0xff]
    %v108 = vld [vmem:[#allocation5 + $0x168] sm:$0xff]
    %v109 = vld [vmem:[#allocation5 + $0x170] sm:$0xff]
    %v110 = vld [vmem:[#allocation5 + $0x178] sm:$0xff]
    %v111 = vld [vmem:[#allocation5 + $0x180] sm:$0xff]
    %v112 = vld [vmem:[#allocation5 + $0x188] sm:$0xff]
    %v113 = vld [vmem:[#allocation5 + $0x190] sm:$0xff]
    %v114 = vld [vmem:[#allocation5 + $0x198] sm:$0xff]
    %v115 = vld [vmem:[#allocation5 + $0x1a0] sm:$0xff]
    %v116 = vld [vmem:[#allocation5 + $0x1a8] sm:$0xff]
    %v117 = vld [vmem:[#allocation5 + $0x1b0] sm:$0xff]
    %v118 = vld [vmem:[#allocation5 + $0x1b8] sm:$0xff]
    %v119 = vld [vmem:[#allocation5 + $0x1c0] sm:$0xff]
    %v120 = vld [vmem:[#allocation5 + $0x1c8] sm:$0xff]
    %v121 = vld [vmem:[#allocation5 + $0x1d0] sm:$0xff]
    %v122 = vld [vmem:[#allocation5 + $0x1d8] sm:$0xff]
    %v123 = vld [vmem:[#allocation5 + $0x1e0] sm:$0xff]
    %v124 = vld [vmem:[#allocation5 + $0x1e8] sm:$0xff]
    %v125 = vld [vmem:[#allocation5 + $0x1f0] sm:$0xff]
    %v126 = vld [vmem:[#allocation5 + $0x1f8] sm:$0xff]
    %v127 = vld [vmem:[#allocation5 + $0x200] sm:$0xff]
    %v128 = vld [vmem:[#allocation5 + $0x208] sm:$0xff]
    %v129 = vld [vmem:[#allocation5 + $0x210] sm:$0xff]
    %v130 = vld [vmem:[#allocation5 + $0x218] sm:$0xff]
    %v131 = vld [vmem:[#allocation5 + $0x220] sm:$0xff]
    %v132 = vld [vmem:[#allocation5 + $0x228] sm:$0xff]
    %v133 = vld [vmem:[#allocation5 + $0x230] sm:$0xff]
    %v134 = vld [vmem:[#allocation5 + $0x238] sm:$0xff]
    %v135 = vld [vmem:[#allocation5 + $0x240] sm:$0xff]
    %v136 = vld [vmem:[#allocation5 + $0x248] sm:$0xff]
    %v137 = vld [vmem:[#allocation5 + $0x250] sm:$0xff]
    %v138 = vld [vmem:[#allocation5 + $0x258] sm:$0xff]
    %v139 = vld [vmem:[#allocation5 + $0x260] sm:$0xff]
    %v140 = vld [vmem:[#allocation5 + $0x268] sm:$0xff]
    %v141 = vld [vmem:[#allocation5 + $0x270] sm:$0xff]
    %v142 = vld [vmem:[#allocation5 + $0x278] sm:$0xff]
    %v143 = vld [vmem:[#allocation5 + $0x280] sm:$0xff]
    %v144 = vld [vmem:[#allocation5 + $0x288] sm:$0xff]
    %v145 = vld [vmem:[#allocation5 + $0x290] sm:$0xff]
    %v146 = vld [vmem:[#allocation5 + $0x298] sm:$0xff]
    %v147 = vld [vmem:[#allocation5 + $0x2a0] sm:$0xff]
    %v148 = vld [vmem:[#allocation5 + $0x2a8] sm:$0xff]
    %v149 = vld [vmem:[#allocation5 + $0x2b0] sm:$0xff]
    %v150 = vld [vmem:[#allocation5 + $0x2b8] sm:$0xff]
    %v151 = vld [vmem:[#allocation5 + $0x2c0] sm:$0xff]
    %v152 = vld [vmem:[#allocation5 + $0x2c8] sm:$0xff]
    %v153 = vld [vmem:[#allocation5 + $0x2d0] sm:$0xff]
    %v154 = vld [vmem:[#allocation5 + $0x2d8] sm:$0xff]
    %v155 = vld [vmem:[#allocation5 + $0x2e0] sm:$0xff]
    %v156 = vld [vmem:[#allocation5 + $0x2e8] sm:$0xff]
    %v157 = vld [vmem:[#allocation5 + $0x2f0] sm:$0xff]
    %v158 = vld [vmem:[#allocation5 + $0x2f8] sm:$0xff]
    %v159 = vld [vmem:[#allocation5 + $0x300] sm:$0xff]
    %v160 = vld [vmem:[#allocation5 + $0x308] sm:$0xff]
    %v161 = vld [vmem:[#allocation5 + $0x310] sm:$0xff]
    %v162 = vld [vmem:[#allocation5 + $0x318] sm:$0xff]
    %v163 = vld [vmem:[#allocation5 + $0x320] sm:$0xff]
    %v164 = vld [vmem:[#allocation5 + $0x328] sm:$0xff]
    %v165 = vld [vmem:[#allocation5 + $0x330] sm:$0xff]
    %v166 = vld [vmem:[#allocation5 + $0x338] sm:$0xff]
    %v167 = vld [vmem:[#allocation5 + $0x340] sm:$0xff]
    %v168 = vld [vmem:[#allocation5 + $0x348] sm:$0xff]
    %v169 = vld [vmem:[#allocation5 + $0x350] sm:$0xff]
    %v170 = vld [vmem:[#allocation5 + $0x358] sm:$0xff]
    %v171 = vld [vmem:[#allocation5 + $0x360] sm:$0xff]
    %v172 = vld [vmem:[#allocation5 + $0x368] sm:$0xff]
    %v173 = vld [vmem:[#allocation5 + $0x370] sm:$0xff]
    %v174 = vld [vmem:[#allocation5 + $0x378] sm:$0xff]
    %v175 = vld [vmem:[#allocation5 + $0x380] sm:$0xff]
    %v176 = vld [vmem:[#allocation5 + $0x388] sm:$0xff]
    %v177 = vld [vmem:[#allocation5 + $0x390] sm:$0xff]
    %v178 = vld [vmem:[#allocation5 + $0x398] sm:$0xff]
    %v179 = vld [vmem:[#allocation5 + $0x3a0] sm:$0xff]
    %v180 = vld [vmem:[#allocation5 + $0x3a8] sm:$0xff]
    %v181 = vld [vmem:[#allocation5 + $0x3b0] sm:$0xff]
    %v182 = vld [vmem:[#allocation5 + $0x3b8] sm:$0xff]
    %v183 = vld [vmem:[#allocation5 + $0x3c0] sm:$0xff]
    %v184 = vld [vmem:[#allocation5 + $0x3c8] sm:$0xff]
    %v185 = vld [vmem:[#allocation5 + $0x3d0] sm:$0xff]
    %v186 = vld [vmem:[#allocation5 + $0x3d8] sm:$0xff]
    %v187 = vld [vmem:[#allocation5 + $0x3e0] sm:$0xff]
    %v188 = vld [vmem:[#allocation5 + $0x3e8] sm:$0xff]
    %v189 = vld [vmem:[#allocation5 + $0x3f0] sm:$0xff]
    %v190 = vld [vmem:[#allocation5 + $0x3f8] sm:$0xff]
    %v191 = vld [vmem:[#allocation5 + $0x400] sm:$0xff]
    %v192 = vld [vmem:[#allocation5 + $0x408] sm:$0xff]
    %v193 = vld [vmem:[#allocation5 + $0x410] sm:$0xff]
    %v194 = vld [vmem:[#allocation5 + $0x418] sm:$0xff]
    %v195 = vld [vmem:[#allocation5 + $0x420] sm:$0xff]
    %v196 = vld [vmem:[#allocation5 + $0x428] sm:$0xff]
    %v197 = vld [vmem:[#allocation5 + $0x430] sm:$0xff]
    %v198 = vld [vmem:[#allocation5 + $0x438] sm:$0xff]
    %v199 = vld [vmem:[#allocation5 + $0x440] sm:$0xff]
    %v200 = vld [vmem:[#allocation5 + $0x448] sm:$0xff]
    %v201 = vld [vmem:[#allocation5 + $0x450] sm:$0xff]
    %v202 = vld [vmem:[#allocation5 + $0x458] sm:$0xff]
    %v203 = vld [vmem:[#allocation5 + $0x460] sm:$0xff]
    %v204 = vld [vmem:[#allocation5 + $0x468] sm:$0xff]
    %v205 = vld [vmem:[#allocation5 + $0x470] sm:$0xff]
    %v206 = vld [vmem:[#allocation5 + $0x478] sm:$0xff]
    %v207 = vld [vmem:[#allocation5 + $0x480] sm:$0xff]
    %v208 = vld [vmem:[#allocation5 + $0x488] sm:$0xff]
    %v209 = vld [vmem:[#allocation5 + $0x490] sm:$0xff]
    %v210 = vld [vmem:[#allocation5 + $0x498] sm:$0xff]
    %v211 = vld [vmem:[#allocation5 + $0x4a0] sm:$0xff]
    %v212 = vld [vmem:[#allocation5 + $0x4a8] sm:$0xff]
    %v213 = vld [vmem:[#allocation5 + $0x4b0] sm:$0xff]
    %v214 = vld [vmem:[#allocation5 + $0x4b8] sm:$0xff]
    %v215 = vld [vmem:[#allocation5 + $0x4c0] sm:$0xff]
    %v216 = vld [vmem:[#allocation5 + $0x4c8] sm:$0xff]
    %v217 = vld [vmem:[#allocation5 + $0x4d0] sm:$0xff]
    %v218 = vld [vmem:[#allocation5 + $0x4d8] sm:$0xff]
    %v219 = vld [vmem:[#allocation5 + $0x4e0] sm:$0xff]
    %v220 = vld [vmem:[#allocation5 + $0x4e8] sm:$0xff]
    %v221 = vld [vmem:[#allocation5 + $0x4f0] sm:$0xff]
    %v222 = vld [vmem:[#allocation5 + $0x4f8] sm:$0xff]
    %v223 = vld [vmem:[#allocation5 + $0x500] sm:$0xff]
    %v224 = vld [vmem:[#allocation5 + $0x508] sm:$0xff]
    %v225 = vld [vmem:[#allocation5 + $0x510] sm:$0xff]
    %v226 = vld [vmem:[#allocation5 + $0x518] sm:$0xff]
    %v227 = vld [vmem:[#allocation5 + $0x520] sm:$0xff]
    %v228 = vld [vmem:[#allocation5 + $0x528] sm:$0xff]
    %v229 = vld [vmem:[#allocation5 + $0x530] sm:$0xff]
    %v230 = vld [vmem:[#allocation5 + $0x538] sm:$0xff]
    %v231 = vld [vmem:[#allocation5 + $0x540] sm:$0xff]
    %v232 = vld [vmem:[#allocation5 + $0x548] sm:$0xff]
    %v233 = vld [vmem:[#allocation5 + $0x550] sm:$0xff]
    %v234 = vld [vmem:[#allocation5 + $0x558] sm:$0xff]
    %v235 = vld [vmem:[#allocation5 + $0x560] sm:$0xff]
    %v236 = vld [vmem:[#allocation5 + $0x568] sm:$0xff]
    %v237 = vld [vmem:[#allocation5 + $0x570] sm:$0xff]
    %v238 = vld [vmem:[#allocation5 + $0x578] sm:$0xff]
    %v239 = vld [vmem:[#allocation5 + $0x580] sm:$0xff]
    %v240 = vld [vmem:[#allocation5 + $0x588] sm:$0xff]
    %v241 = vld [vmem:[#allocation5 + $0x590] sm:$0xff]
    %v242 = vld [vmem:[#allocation5 + $0x598] sm:$0xff]
    %v243 = vld [vmem:[#allocation5 + $0x5a0] sm:$0xff]
    %v244 = vld [vmem:[#allocation5 + $0x5a8] sm:$0xff]
    %v245 = vld [vmem:[#allocation5 + $0x5b0] sm:$0xff]
    %v246 = vld [vmem:[#allocation5 + $0x5b8] sm:$0xff]
    %v247 = vld [vmem:[#allocation5 + $0x5c0] sm:$0xff]
    %v248 = vld [vmem:[#allocation5 + $0x5c8] sm:$0xff]
    %v249 = vld [vmem:[#allocation5 + $0x5d0] sm:$0xff]
    %v250 = vld [vmem:[#allocation5 + $0x5d8] sm:$0xff]
    %v251 = vld [vmem:[#allocation5 + $0x5e0] sm:$0xff]
    %v252 = vld [vmem:[#allocation5 + $0x5e8] sm:$0xff]
    %v253 = vld [vmem:[#allocation5 + $0x5f0] sm:$0xff]
    %v254 = vld [vmem:[#allocation5 + $0x5f8] sm:$0xff]
    %v255 = vld [vmem:[#allocation5 + $0x600] sm:$0xff]
    %v256 = vld [vmem:[#allocation5 + $0x608] sm:$0xff]
    %v257 = vld [vmem:[#allocation5 + $0x610] sm:$0xff]
    %v258 = vld [vmem:[#allocation5 + $0x618] sm:$0xff]
    %v259 = vld [vmem:[#allocation5 + $0x620] sm:$0xff]
    %v260 = vld [vmem:[#allocation5 + $0x628] sm:$0xff]
    %v261 = vld [vmem:[#allocation5 + $0x630] sm:$0xff]
    %v262 = vld [vmem:[#allocation5 + $0x638] sm:$0xff]
    %v263 = vld [vmem:[#allocation5 + $0x640] sm:$0xff]
    %v264 = vld [vmem:[#allocation5 + $0x648] sm:$0xff]
    %v265 = vld [vmem:[#allocation5 + $0x650] sm:$0xff]
    %v266 = vld [vmem:[#allocation5 + $0x658] sm:$0xff]
    %v267 = vld [vmem:[#allocation5 + $0x660] sm:$0xff]
    %v268 = vld [vmem:[#allocation5 + $0x668] sm:$0xff]
    %v269 = vld [vmem:[#allocation5 + $0x670] sm:$0xff]
    %v270 = vld [vmem:[#allocation5 + $0x678] sm:$0xff]
    %v271 = vld [vmem:[#allocation5 + $0x680] sm:$0xff]
    %v272 = vld [vmem:[#allocation5 + $0x688] sm:$0xff]
    %v273 = vld [vmem:[#allocation5 + $0x690] sm:$0xff]
    %v274 = vld [vmem:[#allocation5 + $0x698] sm:$0xff]
    %v275 = vld [vmem:[#allocation5 + $0x6a0] sm:$0xff]
    %v276 = vld [vmem:[#allocation5 + $0x6a8] sm:$0xff]
    %v277 = vld [vmem:[#allocation5 + $0x6b0] sm:$0xff]
    %v278 = vld [vmem:[#allocation5 + $0x6b8] sm:$0xff]
    %v279 = vld [vmem:[#allocation5 + $0x6c0] sm:$0xff]
    %v280 = vld [vmem:[#allocation5 + $0x6c8] sm:$0xff]
    %v281 = vld [vmem:[#allocation5 + $0x6d0] sm:$0xff]
    %v282 = vld [vmem:[#allocation5 + $0x6d8] sm:$0xff]
    %v283 = vld [vmem:[#allocation5 + $0x6e0] sm:$0xff]
    %v284 = vld [vmem:[#allocation5 + $0x6e8] sm:$0xff]
    %v285 = vld [vmem:[#allocation5 + $0x6f0] sm:$0xff]
    %v286 = vld [vmem:[#allocation5 + $0x6f8] sm:$0xff]
    %v287 = vld [vmem:[#allocation5 + $0x700] sm:$0xff]
    %v288 = vld [vmem:[#allocation5 + $0x708] sm:$0xff]
    %v289 = vld [vmem:[#allocation5 + $0x710] sm:$0xff]
    %v290 = vld [vmem:[#allocation5 + $0x718] sm:$0xff]
    %v291 = vld [vmem:[#allocation5 + $0x720] sm:$0xff]
    %v292 = vld [vmem:[#allocation5 + $0x728] sm:$0xff]
    %v293 = vld [vmem:[#allocation5 + $0x730] sm:$0xff]
    %v294 = vld [vmem:[#allocation5 + $0x738] sm:$0xff]
    %v295 = vld [vmem:[#allocation5 + $0x740] sm:$0xff]
    %v296 = vld [vmem:[#allocation5 + $0x748] sm:$0xff]
    %v297 = vld [vmem:[#allocation5 + $0x750] sm:$0xff]
    %v298 = vld [vmem:[#allocation5 + $0x758] sm:$0xff]
    %v299 = vld [vmem:[#allocation5 + $0x760] sm:$0xff]
    %v300 = vld [vmem:[#allocation5 + $0x768] sm:$0xff]
    %v301 = vld [vmem:[#allocation5 + $0x770] sm:$0xff]
    %v302 = vld [vmem:[#allocation5 + $0x778] sm:$0xff]
    %v303 = vld [vmem:[#allocation5 + $0x780] sm:$0xff]
    %v304 = vld [vmem:[#allocation5 + $0x788] sm:$0xff]
    %v305 = vld [vmem:[#allocation5 + $0x790] sm:$0xff]
    %v306 = vld [vmem:[#allocation5 + $0x798] sm:$0xff]
    %v307 = vld [vmem:[#allocation5 + $0x7a0] sm:$0xff]
    %v308 = vld [vmem:[#allocation5 + $0x7a8] sm:$0xff]
    %v309 = vld [vmem:[#allocation5 + $0x7b0] sm:$0xff]
    %v310 = vld [vmem:[#allocation5 + $0x7b8] sm:$0xff]
    %v311 = vld [vmem:[#allocation5 + $0x7c0] sm:$0xff]
    %v312 = vld [vmem:[#allocation5 + $0x7c8] sm:$0xff]
    %v313 = vld [vmem:[#allocation5 + $0x7d0] sm:$0xff]
    %v314 = vld [vmem:[#allocation5 + $0x7d8] sm:$0xff]
    %v315 = vld [vmem:[#allocation5 + $0x7e0] sm:$0xff]
    %v316 = vld [vmem:[#allocation5 + $0x7e8] sm:$0xff]
    %v317 = vld [vmem:[#allocation5 + $0x7f0] sm:$0xff]
    %v318 = vld [vmem:[#allocation5 + $0x7f8] sm:$0xff]
    %v319 = vld [vmem:[#allocation7] sm:$0xf]
    %v321 = vlaneseq
    %v322 = vshrl.u32 %v321, 7
    %v323 = vsub.s32 0, %v322
    %v324 = vrot.slane %v319, %v323
    %v325 = vlaneseq
    %v326 = vshrl.u32 %v325, 7
    %v327 = vsub.s32 1, %v326
    %v328 = vrot.slane %v319, %v327
    %v329 = vlaneseq
    %v330 = vshrl.u32 %v329, 7
    %v331 = vsub.s32 2, %v330
    %v332 = vrot.slane %v319, %v331
    %v333 = vlaneseq
    %v334 = vshrl.u32 %v333, 7
    %v335 = vsub.s32 3, %v334
    %v336 = vrot.slane %v319, %v335
    %v345 = vunpack.c.l.b16 %v59
    %v346 = vunpack.c.h.b16 %v59
    %v347 = vunpack.c.l.b16 %v60
    %v348 = vunpack.c.h.b16 %v60
    %v349 = vunpack.c.l.b16 %v61
    %v350 = vunpack.c.h.b16 %v61
    %v351 = vunpack.c.l.b16 %v62
    %v352 = vunpack.c.h.b16 %v62
    %v353 = vpack.c.b16 %v345, %v345
    %v354 = vpack.c.b16 %v346, %v346
    %v355 = vpack.c.b16 %v347, %v347
    %v356 = vpack.c.b16 %v348, %v348
    %v357 = vpack.c.b16 %v349, %v349
    %v358 = vpack.c.b16 %v350, %v350
    %v359 = vpack.c.b16 %v351, %v351
    %v360 = vpack.c.b16 %v352, %v352
    %v625 = vunpack.c.l.b16 %v63
    %v626 = vunpack.c.h.b16 %v63
    %v627 = vunpack.c.l.b16 %v64
    %v628 = vunpack.c.h.b16 %v64
    %v629 = vunpack.c.l.b16 %v65
    %v630 = vunpack.c.h.b16 %v65
    %v631 = vunpack.c.l.b16 %v66
    %v632 = vunpack.c.h.b16 %v66
    %v633 = vunpack.c.l.b16 %v67
    %v634 = vunpack.c.h.b16 %v67
    %v635 = vunpack.c.l.b16 %v68
    %v636 = vunpack.c.h.b16 %v68
    %v637 = vunpack.c.l.b16 %v69
    %v638 = vunpack.c.h.b16 %v69
    %v639 = vunpack.c.l.b16 %v70
    %v640 = vunpack.c.h.b16 %v70
    %v641 = vunpack.c.l.b16 %v71
    %v642 = vunpack.c.h.b16 %v71
    %v643 = vunpack.c.l.b16 %v72
    %v644 = vunpack.c.h.b16 %v72
    %v645 = vunpack.c.l.b16 %v73
    %v646 = vunpack.c.h.b16 %v73
    %v647 = vunpack.c.l.b16 %v74
    %v648 = vunpack.c.h.b16 %v74
    %v649 = vunpack.c.l.b16 %v75
    %v650 = vunpack.c.h.b16 %v75
    %v651 = vunpack.c.l.b16 %v76
    %v652 = vunpack.c.h.b16 %v76
    %v653 = vunpack.c.l.b16 %v77
    %v654 = vunpack.c.h.b16 %v77
    %v655 = vunpack.c.l.b16 %v78
    %v656 = vunpack.c.h.b16 %v78
    %v657 = vunpack.c.l.b16 %v79
    %v658 = vunpack.c.h.b16 %v79
    %v659 = vunpack.c.l.b16 %v80
    %v660 = vunpack.c.h.b16 %v80
    %v661 = vunpack.c.l.b16 %v81
    %v662 = vunpack.c.h.b16 %v81
    %v663 = vunpack.c.l.b16 %v82
    %v664 = vunpack.c.h.b16 %v82
    %v665 = vunpack.c.l.b16 %v83
    %v666 = vunpack.c.h.b16 %v83
    %v667 = vunpack.c.l.b16 %v84
    %v668 = vunpack.c.h.b16 %v84
    %v669 = vunpack.c.l.b16 %v85
    %v670 = vunpack.c.h.b16 %v85
    %v671 = vunpack.c.l.b16 %v86
    %v672 = vunpack.c.h.b16 %v86
    %v673 = vunpack.c.l.b16 %v87
    %v674 = vunpack.c.h.b16 %v87
    %v675 = vunpack.c.l.b16 %v88
    %v676 = vunpack.c.h.b16 %v88
    %v677 = vunpack.c.l.b16 %v89
    %v678 = vunpack.c.h.b16 %v89
    %v679 = vunpack.c.l.b16 %v90
    %v680 = vunpack.c.h.b16 %v90
    %v681 = vunpack.c.l.b16 %v91
    %v682 = vunpack.c.h.b16 %v91
    %v683 = vunpack.c.l.b16 %v92
    %v684 = vunpack.c.h.b16 %v92
    %v685 = vunpack.c.l.b16 %v93
    %v686 = vunpack.c.h.b16 %v93
    %v687 = vunpack.c.l.b16 %v94
    %v688 = vunpack.c.h.b16 %v94
    %v689 = vunpack.c.l.b16 %v95
    %v690 = vunpack.c.h.b16 %v95
    %v691 = vunpack.c.l.b16 %v96
    %v692 = vunpack.c.h.b16 %v96
    %v693 = vunpack.c.l.b16 %v97
    %v694 = vunpack.c.h.b16 %v97
    %v695 = vunpack.c.l.b16 %v98
    %v696 = vunpack.c.h.b16 %v98
    %v697 = vunpack.c.l.b16 %v99
    %v698 = vunpack.c.h.b16 %v99
    %v699 = vunpack.c.l.b16 %v100
    %v700 = vunpack.c.h.b16 %v100
    %v701 = vunpack.c.l.b16 %v101
    %v702 = vunpack.c.h.b16 %v101
    %v703 = vunpack.c.l.b16 %v102
    %v704 = vunpack.c.h.b16 %v102
    %v705 = vunpack.c.l.b16 %v103
    %v706 = vunpack.c.h.b16 %v103
    %v707 = vunpack.c.l.b16 %v104
    %v708 = vunpack.c.h.b16 %v104
    %v709 = vunpack.c.l.b16 %v105
    %v710 = vunpack.c.h.b16 %v105
    %v711 = vunpack.c.l.b16 %v106
    %v712 = vunpack.c.h.b16 %v106
    %v713 = vunpack.c.l.b16 %v107
    %v714 = vunpack.c.h.b16 %v107
    %v715 = vunpack.c.l.b16 %v108
    %v716 = vunpack.c.h.b16 %v108
    %v717 = vunpack.c.l.b16 %v109
    %v718 = vunpack.c.h.b16 %v109
    %v719 = vunpack.c.l.b16 %v110
    %v720 = vunpack.c.h.b16 %v110
    %v721 = vunpack.c.l.b16 %v111
    %v722 = vunpack.c.h.b16 %v111
    %v723 = vunpack.c.l.b16 %v112
    %v724 = vunpack.c.h.b16 %v112
    %v725 = vunpack.c.l.b16 %v113
    %v726 = vunpack.c.h.b16 %v113
    %v727 = vunpack.c.l.b16 %v114
    %v728 = vunpack.c.h.b16 %v114
    %v729 = vunpack.c.l.b16 %v115
    %v730 = vunpack.c.h.b16 %v115
    %v731 = vunpack.c.l.b16 %v116
    %v732 = vunpack.c.h.b16 %v116
    %v733 = vunpack.c.l.b16 %v117
    %v734 = vunpack.c.h.b16 %v117
    %v735 = vunpack.c.l.b16 %v118
    %v736 = vunpack.c.h.b16 %v118
    %v737 = vunpack.c.l.b16 %v119
    %v738 = vunpack.c.h.b16 %v119
    %v739 = vunpack.c.l.b16 %v120
    %v740 = vunpack.c.h.b16 %v120
    %v741 = vunpack.c.l.b16 %v121
    %v742 = vunpack.c.h.b16 %v121
    %v743 = vunpack.c.l.b16 %v122
    %v744 = vunpack.c.h.b16 %v122
    %v745 = vunpack.c.l.b16 %v123
    %v746 = vunpack.c.h.b16 %v123
    %v747 = vunpack.c.l.b16 %v124
    %v748 = vunpack.c.h.b16 %v124
    %v749 = vunpack.c.l.b16 %v125
    %v750 = vunpack.c.h.b16 %v125
    %v751 = vunpack.c.l.b16 %v126
    %v752 = vunpack.c.h.b16 %v126
    %v753 = vunpack.c.l.b16 %v127
    %v754 = vunpack.c.h.b16 %v127
    %v755 = vunpack.c.l.b16 %v128
    %v756 = vunpack.c.h.b16 %v128
    %v757 = vunpack.c.l.b16 %v129
    %v758 = vunpack.c.h.b16 %v129
    %v759 = vunpack.c.l.b16 %v130
    %v760 = vunpack.c.h.b16 %v130
    %v761 = vunpack.c.l.b16 %v131
    %v762 = vunpack.c.h.b16 %v131
    %v763 = vunpack.c.l.b16 %v132
    %v764 = vunpack.c.h.b16 %v132
    %v765 = vunpack.c.l.b16 %v133
    %v766 = vunpack.c.h.b16 %v133
    %v767 = vunpack.c.l.b16 %v134
    %v768 = vunpack.c.h.b16 %v134
    %v769 = vunpack.c.l.b16 %v135
    %v770 = vunpack.c.h.b16 %v135
    %v771 = vunpack.c.l.b16 %v136
    %v772 = vunpack.c.h.b16 %v136
    %v773 = vunpack.c.l.b16 %v137
    %v774 = vunpack.c.h.b16 %v137
    %v775 = vunpack.c.l.b16 %v138
    %v776 = vunpack.c.h.b16 %v138
    %v777 = vunpack.c.l.b16 %v139
    %v778 = vunpack.c.h.b16 %v139
    %v779 = vunpack.c.l.b16 %v140
    %v780 = vunpack.c.h.b16 %v140
    %v781 = vunpack.c.l.b16 %v141
    %v782 = vunpack.c.h.b16 %v141
    %v783 = vunpack.c.l.b16 %v142
    %v784 = vunpack.c.h.b16 %v142
    %v785 = vunpack.c.l.b16 %v143
    %v786 = vunpack.c.h.b16 %v143
    %v787 = vunpack.c.l.b16 %v144
    %v788 = vunpack.c.h.b16 %v144
    %v789 = vunpack.c.l.b16 %v145
    %v790 = vunpack.c.h.b16 %v145
    %v791 = vunpack.c.l.b16 %v146
    %v792 = vunpack.c.h.b16 %v146
    %v793 = vunpack.c.l.b16 %v147
    %v794 = vunpack.c.h.b16 %v147
    %v795 = vunpack.c.l.b16 %v148
    %v796 = vunpack.c.h.b16 %v148
    %v797 = vunpack.c.l.b16 %v149
    %v798 = vunpack.c.h.b16 %v149
    %v799 = vunpack.c.l.b16 %v150
    %v800 = vunpack.c.h.b16 %v150
    %v801 = vunpack.c.l.b16 %v151
    %v802 = vunpack.c.h.b16 %v151
    %v803 = vunpack.c.l.b16 %v152
    %v804 = vunpack.c.h.b16 %v152
    %v805 = vunpack.c.l.b16 %v153
    %v806 = vunpack.c.h.b16 %v153
    %v807 = vunpack.c.l.b16 %v154
    %v808 = vunpack.c.h.b16 %v154
    %v809 = vunpack.c.l.b16 %v155
    %v810 = vunpack.c.h.b16 %v155
    %v811 = vunpack.c.l.b16 %v156
    %v812 = vunpack.c.h.b16 %v156
    %v813 = vunpack.c.l.b16 %v157
    %v814 = vunpack.c.h.b16 %v157
    %v815 = vunpack.c.l.b16 %v158
    %v816 = vunpack.c.h.b16 %v158
    %v817 = vunpack.c.l.b16 %v159
    %v818 = vunpack.c.h.b16 %v159
    %v819 = vunpack.c.l.b16 %v160
    %v820 = vunpack.c.h.b16 %v160
    %v821 = vunpack.c.l.b16 %v161
    %v822 = vunpack.c.h.b16 %v161
    %v823 = vunpack.c.l.b16 %v162
    %v824 = vunpack.c.h.b16 %v162
    %v825 = vunpack.c.l.b16 %v163
    %v826 = vunpack.c.h.b16 %v163
    %v827 = vunpack.c.l.b16 %v164
    %v828 = vunpack.c.h.b16 %v164
    %v829 = vunpack.c.l.b16 %v165
    %v830 = vunpack.c.h.b16 %v165
    %v831 = vunpack.c.l.b16 %v166
    %v832 = vunpack.c.h.b16 %v166
    %v833 = vunpack.c.l.b16 %v167
    %v834 = vunpack.c.h.b16 %v167
    %v835 = vunpack.c.l.b16 %v168
    %v836 = vunpack.c.h.b16 %v168
    %v837 = vunpack.c.l.b16 %v169
    %v838 = vunpack.c.h.b16 %v169
    %v839 = vunpack.c.l.b16 %v170
    %v840 = vunpack.c.h.b16 %v170
    %v841 = vunpack.c.l.b16 %v171
    %v842 = vunpack.c.h.b16 %v171
    %v843 = vunpack.c.l.b16 %v172
    %v844 = vunpack.c.h.b16 %v172
    %v845 = vunpack.c.l.b16 %v173
    %v846 = vunpack.c.h.b16 %v173
    %v847 = vunpack.c.l.b16 %v174
    %v848 = vunpack.c.h.b16 %v174
    %v849 = vunpack.c.l.b16 %v175
    %v850 = vunpack.c.h.b16 %v175
    %v851 = vunpack.c.l.b16 %v176
    %v852 = vunpack.c.h.b16 %v176
    %v853 = vunpack.c.l.b16 %v177
    %v854 = vunpack.c.h.b16 %v177
    %v855 = vunpack.c.l.b16 %v178
    %v856 = vunpack.c.h.b16 %v178
    %v857 = vunpack.c.l.b16 %v179
    %v858 = vunpack.c.h.b16 %v179
    %v859 = vunpack.c.l.b16 %v180
    %v860 = vunpack.c.h.b16 %v180
    %v861 = vunpack.c.l.b16 %v181
    %v862 = vunpack.c.h.b16 %v181
    %v863 = vunpack.c.l.b16 %v182
    %v864 = vunpack.c.h.b16 %v182
    %v865 = vunpack.c.l.b16 %v183
    %v866 = vunpack.c.h.b16 %v183
    %v867 = vunpack.c.l.b16 %v184
    %v868 = vunpack.c.h.b16 %v184
    %v869 = vunpack.c.l.b16 %v185
    %v870 = vunpack.c.h.b16 %v185
    %v871 = vunpack.c.l.b16 %v186
    %v872 = vunpack.c.h.b16 %v186
    %v873 = vunpack.c.l.b16 %v187
    %v874 = vunpack.c.h.b16 %v187
    %v875 = vunpack.c.l.b16 %v188
    %v876 = vunpack.c.h.b16 %v188
    %v877 = vunpack.c.l.b16 %v189
    %v878 = vunpack.c.h.b16 %v189
    %v879 = vunpack.c.l.b16 %v190
    %v880 = vunpack.c.h.b16 %v190
    %v881 = vunpack.c.l.b16 %v191
    %v882 = vunpack.c.h.b16 %v191
    %v883 = vunpack.c.l.b16 %v192
    %v884 = vunpack.c.h.b16 %v192
    %v885 = vunpack.c.l.b16 %v193
    %v886 = vunpack.c.h.b16 %v193
    %v887 = vunpack.c.l.b16 %v194
    %v888 = vunpack.c.h.b16 %v194
    %v889 = vunpack.c.l.b16 %v195
    %v890 = vunpack.c.h.b16 %v195
    %v891 = vunpack.c.l.b16 %v196
    %v892 = vunpack.c.h.b16 %v196
    %v893 = vunpack.c.l.b16 %v197
    %v894 = vunpack.c.h.b16 %v197
    %v895 = vunpack.c.l.b16 %v198
    %v896 = vunpack.c.h.b16 %v198
    %v897 = vunpack.c.l.b16 %v199
    %v898 = vunpack.c.h.b16 %v199
    %v899 = vunpack.c.l.b16 %v200
    %v900 = vunpack.c.h.b16 %v200
    %v901 = vunpack.c.l.b16 %v201
    %v902 = vunpack.c.h.b16 %v201
    %v903 = vunpack.c.l.b16 %v202
    %v904 = vunpack.c.h.b16 %v202
    %v905 = vunpack.c.l.b16 %v203
    %v906 = vunpack.c.h.b16 %v203
    %v907 = vunpack.c.l.b16 %v204
    %v908 = vunpack.c.h.b16 %v204
    %v909 = vunpack.c.l.b16 %v205
    %v910 = vunpack.c.h.b16 %v205
    %v911 = vunpack.c.l.b16 %v206
    %v912 = vunpack.c.h.b16 %v206
    %v913 = vunpack.c.l.b16 %v207
    %v914 = vunpack.c.h.b16 %v207
    %v915 = vunpack.c.l.b16 %v208
    %v916 = vunpack.c.h.b16 %v208
    %v917 = vunpack.c.l.b16 %v209
    %v918 = vunpack.c.h.b16 %v209
    %v919 = vunpack.c.l.b16 %v210
    %v920 = vunpack.c.h.b16 %v210
    %v921 = vunpack.c.l.b16 %v211
    %v922 = vunpack.c.h.b16 %v211
    %v923 = vunpack.c.l.b16 %v212
    %v924 = vunpack.c.h.b16 %v212
    %v925 = vunpack.c.l.b16 %v213
    %v926 = vunpack.c.h.b16 %v213
    %v927 = vunpack.c.l.b16 %v214
    %v928 = vunpack.c.h.b16 %v214
    %v929 = vunpack.c.l.b16 %v215
    %v930 = vunpack.c.h.b16 %v215
    %v931 = vunpack.c.l.b16 %v216
    %v932 = vunpack.c.h.b16 %v216
    %v933 = vunpack.c.l.b16 %v217
    %v934 = vunpack.c.h.b16 %v217
    %v935 = vunpack.c.l.b16 %v218
    %v936 = vunpack.c.h.b16 %v218
    %v937 = vunpack.c.l.b16 %v219
    %v938 = vunpack.c.h.b16 %v219
    %v939 = vunpack.c.l.b16 %v220
    %v940 = vunpack.c.h.b16 %v220
    %v941 = vunpack.c.l.b16 %v221
    %v942 = vunpack.c.h.b16 %v221
    %v943 = vunpack.c.l.b16 %v222
    %v944 = vunpack.c.h.b16 %v222
    %v945 = vunpack.c.l.b16 %v223
    %v946 = vunpack.c.h.b16 %v223
    %v947 = vunpack.c.l.b16 %v224
    %v948 = vunpack.c.h.b16 %v224
    %v949 = vunpack.c.l.b16 %v225
    %v950 = vunpack.c.h.b16 %v225
    %v951 = vunpack.c.l.b16 %v226
    %v952 = vunpack.c.h.b16 %v226
    %v953 = vunpack.c.l.b16 %v227
    %v954 = vunpack.c.h.b16 %v227
    %v955 = vunpack.c.l.b16 %v228
    %v956 = vunpack.c.h.b16 %v228
    %v957 = vunpack.c.l.b16 %v229
    %v958 = vunpack.c.h.b16 %v229
    %v959 = vunpack.c.l.b16 %v230
    %v960 = vunpack.c.h.b16 %v230
    %v961 = vunpack.c.l.b16 %v231
    %v962 = vunpack.c.h.b16 %v231
    %v963 = vunpack.c.l.b16 %v232
    %v964 = vunpack.c.h.b16 %v232
    %v965 = vunpack.c.l.b16 %v233
    %v966 = vunpack.c.h.b16 %v233
    %v967 = vunpack.c.l.b16 %v234
    %v968 = vunpack.c.h.b16 %v234
    %v969 = vunpack.c.l.b16 %v235
    %v970 = vunpack.c.h.b16 %v235
    %v971 = vunpack.c.l.b16 %v236
    %v972 = vunpack.c.h.b16 %v236
    %v973 = vunpack.c.l.b16 %v237
    %v974 = vunpack.c.h.b16 %v237
    %v975 = vunpack.c.l.b16 %v238
    %v976 = vunpack.c.h.b16 %v238
    %v977 = vunpack.c.l.b16 %v239
    %v978 = vunpack.c.h.b16 %v239
    %v979 = vunpack.c.l.b16 %v240
    %v980 = vunpack.c.h.b16 %v240
    %v981 = vunpack.c.l.b16 %v241
    %v982 = vunpack.c.h.b16 %v241
    %v983 = vunpack.c.l.b16 %v242
    %v984 = vunpack.c.h.b16 %v242
    %v985 = vunpack.c.l.b16 %v243
    %v986 = vunpack.c.h.b16 %v243
    %v987 = vunpack.c.l.b16 %v244
    %v988 = vunpack.c.h.b16 %v244
    %v989 = vunpack.c.l.b16 %v245
    %v990 = vunpack.c.h.b16 %v245
    %v991 = vunpack.c.l.b16 %v246
    %v992 = vunpack.c.h.b16 %v246
    %v993 = vunpack.c.l.b16 %v247
    %v994 = vunpack.c.h.b16 %v247
    %v995 = vunpack.c.l.b16 %v248
    %v996 = vunpack.c.h.b16 %v248
    %v997 = vunpack.c.l.b16 %v249
    %v998 = vunpack.c.h.b16 %v249
    %v999 = vunpack.c.l.b16 %v250
    %v1000 = vunpack.c.h.b16 %v250
    %v1001 = vunpack.c.l.b16 %v251
    %v1002 = vunpack.c.h.b16 %v251
    %v1003 = vunpack.c.l.b16 %v252
    %v1004 = vunpack.c.h.b16 %v252
    %v1005 = vunpack.c.l.b16 %v253
    %v1006 = vunpack.c.h.b16 %v253
    %v1007 = vunpack.c.l.b16 %v254
    %v1008 = vunpack.c.h.b16 %v254
    %v1009 = vunpack.c.l.b16 %v255
    %v1010 = vunpack.c.h.b16 %v255
    %v1011 = vunpack.c.l.b16 %v256
    %v1012 = vunpack.c.h.b16 %v256
    %v1013 = vunpack.c.l.b16 %v257
    %v1014 = vunpack.c.h.b16 %v257
    %v1015 = vunpack.c.l.b16 %v258
    %v1016 = vunpack.c.h.b16 %v258
    %v1017 = vunpack.c.l.b16 %v259
    %v1018 = vunpack.c.h.b16 %v259
    %v1019 = vunpack.c.l.b16 %v260
    %v1020 = vunpack.c.h.b16 %v260
    %v1021 = vunpack.c.l.b16 %v261
    %v1022 = vunpack.c.h.b16 %v261
    %v1023 = vunpack.c.l.b16 %v262
    %v1024 = vunpack.c.h.b16 %v262
    %v1025 = vunpack.c.l.b16 %v263
    %v1026 = vunpack.c.h.b16 %v263
    %v1027 = vunpack.c.l.b16 %v264
    %v1028 = vunpack.c.h.b16 %v264
    %v1029 = vunpack.c.l.b16 %v265
    %v1030 = vunpack.c.h.b16 %v265
    %v1031 = vunpack.c.l.b16 %v266
    %v1032 = vunpack.c.h.b16 %v266
    %v1033 = vunpack.c.l.b16 %v267
    %v1034 = vunpack.c.h.b16 %v267
    %v1035 = vunpack.c.l.b16 %v268
    %v1036 = vunpack.c.h.b16 %v268
    %v1037 = vunpack.c.l.b16 %v269
    %v1038 = vunpack.c.h.b16 %v269
    %v1039 = vunpack.c.l.b16 %v270
    %v1040 = vunpack.c.h.b16 %v270
    %v1041 = vunpack.c.l.b16 %v271
    %v1042 = vunpack.c.h.b16 %v271
    %v1043 = vunpack.c.l.b16 %v272
    %v1044 = vunpack.c.h.b16 %v272
    %v1045 = vunpack.c.l.b16 %v273
    %v1046 = vunpack.c.h.b16 %v273
    %v1047 = vunpack.c.l.b16 %v274
    %v1048 = vunpack.c.h.b16 %v274
    %v1049 = vunpack.c.l.b16 %v275
    %v1050 = vunpack.c.h.b16 %v275
    %v1051 = vunpack.c.l.b16 %v276
    %v1052 = vunpack.c.h.b16 %v276
    %v1053 = vunpack.c.l.b16 %v277
    %v1054 = vunpack.c.h.b16 %v277
    %v1055 = vunpack.c.l.b16 %v278
    %v1056 = vunpack.c.h.b16 %v278
    %v1057 = vunpack.c.l.b16 %v279
    %v1058 = vunpack.c.h.b16 %v279
    %v1059 = vunpack.c.l.b16 %v280
    %v1060 = vunpack.c.h.b16 %v280
    %v1061 = vunpack.c.l.b16 %v281
    %v1062 = vunpack.c.h.b16 %v281
    %v1063 = vunpack.c.l.b16 %v282
    %v1064 = vunpack.c.h.b16 %v282
    %v1065 = vunpack.c.l.b16 %v283
    %v1066 = vunpack.c.h.b16 %v283
    %v1067 = vunpack.c.l.b16 %v284
    %v1068 = vunpack.c.h.b16 %v284
    %v1069 = vunpack.c.l.b16 %v285
    %v1070 = vunpack.c.h.b16 %v285
    %v1071 = vunpack.c.l.b16 %v286
    %v1072 = vunpack.c.h.b16 %v286
    %v1073 = vunpack.c.l.b16 %v287
    %v1074 = vunpack.c.h.b16 %v287
    %v1075 = vunpack.c.l.b16 %v288
    %v1076 = vunpack.c.h.b16 %v288
    %v1077 = vunpack.c.l.b16 %v289
    %v1078 = vunpack.c.h.b16 %v289
    %v1079 = vunpack.c.l.b16 %v290
    %v1080 = vunpack.c.h.b16 %v290
    %v1081 = vunpack.c.l.b16 %v291
    %v1082 = vunpack.c.h.b16 %v291
    %v1083 = vunpack.c.l.b16 %v292
    %v1084 = vunpack.c.h.b16 %v292
    %v1085 = vunpack.c.l.b16 %v293
    %v1086 = vunpack.c.h.b16 %v293
    %v1087 = vunpack.c.l.b16 %v294
    %v1088 = vunpack.c.h.b16 %v294
    %v1089 = vunpack.c.l.b16 %v295
    %v1090 = vunpack.c.h.b16 %v295
    %v1091 = vunpack.c.l.b16 %v296
    %v1092 = vunpack.c.h.b16 %v296
    %v1093 = vunpack.c.l.b16 %v297
    %v1094 = vunpack.c.h.b16 %v297
    %v1095 = vunpack.c.l.b16 %v298
    %v1096 = vunpack.c.h.b16 %v298
    %v1097 = vunpack.c.l.b16 %v299
    %v1098 = vunpack.c.h.b16 %v299
    %v1099 = vunpack.c.l.b16 %v300
    %v1100 = vunpack.c.h.b16 %v300
    %v1101 = vunpack.c.l.b16 %v301
    %v1102 = vunpack.c.h.b16 %v301
    %v1103 = vunpack.c.l.b16 %v302
    %v1104 = vunpack.c.h.b16 %v302
    %v1105 = vunpack.c.l.b16 %v303
    %v1106 = vunpack.c.h.b16 %v303
    %v1107 = vunpack.c.l.b16 %v304
    %v1108 = vunpack.c.h.b16 %v304
    %v1109 = vunpack.c.l.b16 %v305
    %v1110 = vunpack.c.h.b16 %v305
    %v1111 = vunpack.c.l.b16 %v306
    %v1112 = vunpack.c.h.b16 %v306
    %v1113 = vunpack.c.l.b16 %v307
    %v1114 = vunpack.c.h.b16 %v307
    %v1115 = vunpack.c.l.b16 %v308
    %v1116 = vunpack.c.h.b16 %v308
    %v1117 = vunpack.c.l.b16 %v309
    %v1118 = vunpack.c.h.b16 %v309
    %v1119 = vunpack.c.l.b16 %v310
    %v1120 = vunpack.c.h.b16 %v310
    %v1121 = vunpack.c.l.b16 %v311
    %v1122 = vunpack.c.h.b16 %v311
    %v1123 = vunpack.c.l.b16 %v312
    %v1124 = vunpack.c.h.b16 %v312
    %v1125 = vunpack.c.l.b16 %v313
    %v1126 = vunpack.c.h.b16 %v313
    %v1127 = vunpack.c.l.b16 %v314
    %v1128 = vunpack.c.h.b16 %v314
    %v1129 = vunpack.c.l.b16 %v315
    %v1130 = vunpack.c.h.b16 %v315
    %v1131 = vunpack.c.l.b16 %v316
    %v1132 = vunpack.c.h.b16 %v316
    %v1133 = vunpack.c.l.b16 %v317
    %v1134 = vunpack.c.h.b16 %v317
    %v1135 = vunpack.c.l.b16 %v318
    %v1136 = vunpack.c.h.b16 %v318
    %v1137 = vpack.c.b16 %v629, %v625
    %v1138 = vpack.c.b16 %v630, %v626
    %v1139 = vpack.c.b16 %v631, %v627
    %v1140 = vpack.c.b16 %v632, %v628
    %v1141 = vpack.c.b16 %v637, %v633
    %v1142 = vpack.c.b16 %v638, %v634
    %v1143 = vpack.c.b16 %v639, %v635
    %v1144 = vpack.c.b16 %v640, %v636
    %v1145 = vpack.c.b16 %v645, %v641
    %v1146 = vpack.c.b16 %v646, %v642
    %v1147 = vpack.c.b16 %v647, %v643
    %v1148 = vpack.c.b16 %v648, %v644
    %v1149 = vpack.c.b16 %v653, %v649
    %v1150 = vpack.c.b16 %v654, %v650
    %v1151 = vpack.c.b16 %v655, %v651
    %v1152 = vpack.c.b16 %v656, %v652
    %v1153 = vpack.c.b16 %v661, %v657
    %v1154 = vpack.c.b16 %v662, %v658
    %v1155 = vpack.c.b16 %v663, %v659
    %v1156 = vpack.c.b16 %v664, %v660
    %v1157 = vpack.c.b16 %v669, %v665
    %v1158 = vpack.c.b16 %v670, %v666
    %v1159 = vpack.c.b16 %v671, %v667
    %v1160 = vpack.c.b16 %v672, %v668
    %v1161 = vpack.c.b16 %v677, %v673
    %v1162 = vpack.c.b16 %v678, %v674
    %v1163 = vpack.c.b16 %v679, %v675
    %v1164 = vpack.c.b16 %v680, %v676
    %v1165 = vpack.c.b16 %v685, %v681
    %v1166 = vpack.c.b16 %v686, %v682
    %v1167 = vpack.c.b16 %v687, %v683
    %v1168 = vpack.c.b16 %v688, %v684
    %v1169 = vpack.c.b16 %v693, %v689
    %v1170 = vpack.c.b16 %v694, %v690
    %v1171 = vpack.c.b16 %v695, %v691
    %v1172 = vpack.c.b16 %v696, %v692
    %v1173 = vpack.c.b16 %v701, %v697
    %v1174 = vpack.c.b16 %v702, %v698
    %v1175 = vpack.c.b16 %v703, %v699
    %v1176 = vpack.c.b16 %v704, %v700
    %v1177 = vpack.c.b16 %v709, %v705
    %v1178 = vpack.c.b16 %v710, %v706
    %v1179 = vpack.c.b16 %v711, %v707
    %v1180 = vpack.c.b16 %v712, %v708
    %v1181 = vpack.c.b16 %v717, %v713
    %v1182 = vpack.c.b16 %v718, %v714
    %v1183 = vpack.c.b16 %v719, %v715
    %v1184 = vpack.c.b16 %v720, %v716
    %v1185 = vpack.c.b16 %v725, %v721
    %v1186 = vpack.c.b16 %v726, %v722
    %v1187 = vpack.c.b16 %v727, %v723
    %v1188 = vpack.c.b16 %v728, %v724
    %v1189 = vpack.c.b16 %v733, %v729
    %v1190 = vpack.c.b16 %v734, %v730
    %v1191 = vpack.c.b16 %v735, %v731
    %v1192 = vpack.c.b16 %v736, %v732
    %v1193 = vpack.c.b16 %v741, %v737
    %v1194 = vpack.c.b16 %v742, %v738
    %v1195 = vpack.c.b16 %v743, %v739
    %v1196 = vpack.c.b16 %v744, %v740
    %v1197 = vpack.c.b16 %v749, %v745
    %v1198 = vpack.c.b16 %v750, %v746
    %v1199 = vpack.c.b16 %v751, %v747
    %v1200 = vpack.c.b16 %v752, %v748
    %v1201 = vpack.c.b16 %v757, %v753
    %v1202 = vpack.c.b16 %v758, %v754
    %v1203 = vpack.c.b16 %v759, %v755
    %v1204 = vpack.c.b16 %v760, %v756
    %v1205 = vpack.c.b16 %v765, %v761
    %v1206 = vpack.c.b16 %v766, %v762
    %v1207 = vpack.c.b16 %v767, %v763
    %v1208 = vpack.c.b16 %v768, %v764
    %v1209 = vpack.c.b16 %v773, %v769
    %v1210 = vpack.c.b16 %v774, %v770
    %v1211 = vpack.c.b16 %v775, %v771
    %v1212 = vpack.c.b16 %v776, %v772
    %v1213 = vpack.c.b16 %v781, %v777
    %v1214 = vpack.c.b16 %v782, %v778
    %v1215 = vpack.c.b16 %v783, %v779
    %v1216 = vpack.c.b16 %v784, %v780
    %v1217 = vpack.c.b16 %v789, %v785
    %v1218 = vpack.c.b16 %v790, %v786
    %v1219 = vpack.c.b16 %v791, %v787
    %v1220 = vpack.c.b16 %v792, %v788
    %v1221 = vpack.c.b16 %v797, %v793
    %v1222 = vpack.c.b16 %v798, %v794
    %v1223 = vpack.c.b16 %v799, %v795
    %v1224 = vpack.c.b16 %v800, %v796
    %v1225 = vpack.c.b16 %v805, %v801
    %v1226 = vpack.c.b16 %v806, %v802
    %v1227 = vpack.c.b16 %v807, %v803
    %v1228 = vpack.c.b16 %v808, %v804
    %v1229 = vpack.c.b16 %v813, %v809
    %v1230 = vpack.c.b16 %v814, %v810
    %v1231 = vpack.c.b16 %v815, %v811
    %v1232 = vpack.c.b16 %v816, %v812
    %v1233 = vpack.c.b16 %v821, %v817
    %v1234 = vpack.c.b16 %v822, %v818
    %v1235 = vpack.c.b16 %v823, %v819
    %v1236 = vpack.c.b16 %v824, %v820
    %v1237 = vpack.c.b16 %v829, %v825
    %v1238 = vpack.c.b16 %v830, %v826
    %v1239 = vpack.c.b16 %v831, %v827
    %v1240 = vpack.c.b16 %v832, %v828
    %v1241 = vpack.c.b16 %v837, %v833
    %v1242 = vpack.c.b16 %v838, %v834
    %v1243 = vpack.c.b16 %v839, %v835
    %v1244 = vpack.c.b16 %v840, %v836
    %v1245 = vpack.c.b16 %v845, %v841
    %v1246 = vpack.c.b16 %v846, %v842
    %v1247 = vpack.c.b16 %v847, %v843
    %v1248 = vpack.c.b16 %v848, %v844
    %v1249 = vpack.c.b16 %v853, %v849
    %v1250 = vpack.c.b16 %v854, %v850
    %v1251 = vpack.c.b16 %v855, %v851
    %v1252 = vpack.c.b16 %v856, %v852
    %v1253 = vpack.c.b16 %v861, %v857
    %v1254 = vpack.c.b16 %v862, %v858
    %v1255 = vpack.c.b16 %v863, %v859
    %v1256 = vpack.c.b16 %v864, %v860
    %v1257 = vpack.c.b16 %v869, %v865
    %v1258 = vpack.c.b16 %v870, %v866
    %v1259 = vpack.c.b16 %v871, %v867
    %v1260 = vpack.c.b16 %v872, %v868
    %v1261 = vpack.c.b16 %v877, %v873
    %v1262 = vpack.c.b16 %v878, %v874
    %v1263 = vpack.c.b16 %v879, %v875
    %v1264 = vpack.c.b16 %v880, %v876
    %v1265 = vpack.c.b16 %v885, %v881
    %v1266 = vpack.c.b16 %v886, %v882
    %v1267 = vpack.c.b16 %v887, %v883
    %v1268 = vpack.c.b16 %v888, %v884
    %v1269 = vpack.c.b16 %v893, %v889
    %v1270 = vpack.c.b16 %v894, %v890
    %v1271 = vpack.c.b16 %v895, %v891
    %v1272 = vpack.c.b16 %v896, %v892
    %v1273 = vpack.c.b16 %v901, %v897
    %v1274 = vpack.c.b16 %v902, %v898
    %v1275 = vpack.c.b16 %v903, %v899
    %v1276 = vpack.c.b16 %v904, %v900
    %v1277 = vpack.c.b16 %v909, %v905
    %v1278 = vpack.c.b16 %v910, %v906
    %v1279 = vpack.c.b16 %v911, %v907
    %v1280 = vpack.c.b16 %v912, %v908
    %v1281 = vpack.c.b16 %v917, %v913
    %v1282 = vpack.c.b16 %v918, %v914
    %v1283 = vpack.c.b16 %v919, %v915
    %v1284 = vpack.c.b16 %v920, %v916
    %v1285 = vpack.c.b16 %v925, %v921
    %v1286 = vpack.c.b16 %v926, %v922
    %v1287 = vpack.c.b16 %v927, %v923
    %v1288 = vpack.c.b16 %v928, %v924
    %v1289 = vpack.c.b16 %v933, %v929
    %v1290 = vpack.c.b16 %v934, %v930
    %v1291 = vpack.c.b16 %v935, %v931
    %v1292 = vpack.c.b16 %v936, %v932
    %v1293 = vpack.c.b16 %v941, %v937
    %v1294 = vpack.c.b16 %v942, %v938
    %v1295 = vpack.c.b16 %v943, %v939
    %v1296 = vpack.c.b16 %v944, %v940
    %v1297 = vpack.c.b16 %v949, %v945
    %v1298 = vpack.c.b16 %v950, %v946
    %v1299 = vpack.c.b16 %v951, %v947
    %v1300 = vpack.c.b16 %v952, %v948
    %v1301 = vpack.c.b16 %v957, %v953
    %v1302 = vpack.c.b16 %v958, %v954
    %v1303 = vpack.c.b16 %v959, %v955
    %v1304 = vpack.c.b16 %v960, %v956
    %v1305 = vpack.c.b16 %v965, %v961
    %v1306 = vpack.c.b16 %v966, %v962
    %v1307 = vpack.c.b16 %v967, %v963
    %v1308 = vpack.c.b16 %v968, %v964
    %v1309 = vpack.c.b16 %v973, %v969
    %v1310 = vpack.c.b16 %v974, %v970
    %v1311 = vpack.c.b16 %v975, %v971
    %v1312 = vpack.c.b16 %v976, %v972
    %v1313 = vpack.c.b16 %v981, %v977
    %v1314 = vpack.c.b16 %v982, %v978
    %v1315 = vpack.c.b16 %v983, %v979
    %v1316 = vpack.c.b16 %v984, %v980
    %v1317 = vpack.c.b16 %v989, %v985
    %v1318 = vpack.c.b16 %v990, %v986
    %v1319 = vpack.c.b16 %v991, %v987
    %v1320 = vpack.c.b16 %v992, %v988
    %v1321 = vpack.c.b16 %v997, %v993
    %v1322 = vpack.c.b16 %v998, %v994
    %v1323 = vpack.c.b16 %v999, %v995
    %v1324 = vpack.c.b16 %v1000, %v996
    %v1325 = vpack.c.b16 %v1005, %v1001
    %v1326 = vpack.c.b16 %v1006, %v1002
    %v1327 = vpack.c.b16 %v1007, %v1003
    %v1328 = vpack.c.b16 %v1008, %v1004
    %v1329 = vpack.c.b16 %v1013, %v1009
    %v1330 = vpack.c.b16 %v1014, %v1010
    %v1331 = vpack.c.b16 %v1015, %v1011
    %v1332 = vpack.c.b16 %v1016, %v1012
    %v1333 = vpack.c.b16 %v1021, %v1017
    %v1334 = vpack.c.b16 %v1022, %v1018
    %v1335 = vpack.c.b16 %v1023, %v1019
    %v1336 = vpack.c.b16 %v1024, %v1020
    %v1337 = vpack.c.b16 %v1029, %v1025
    %v1338 = vpack.c.b16 %v1030, %v1026
    %v1339 = vpack.c.b16 %v1031, %v1027
    %v1340 = vpack.c.b16 %v1032, %v1028
    %v1341 = vpack.c.b16 %v1037, %v1033
    %v1342 = vpack.c.b16 %v1038, %v1034
    %v1343 = vpack.c.b16 %v1039, %v1035
    %v1344 = vpack.c.b16 %v1040, %v1036
    %v1345 = vpack.c.b16 %v1045, %v1041
    %v1346 = vpack.c.b16 %v1046, %v1042
    %v1347 = vpack.c.b16 %v1047, %v1043
    %v1348 = vpack.c.b16 %v1048, %v1044
    %v1349 = vpack.c.b16 %v1053, %v1049
    %v1350 = vpack.c.b16 %v1054, %v1050
    %v1351 = vpack.c.b16 %v1055, %v1051
    %v1352 = vpack.c.b16 %v1056, %v1052
    %v1353 = vpack.c.b16 %v1061, %v1057
    %v1354 = vpack.c.b16 %v1062, %v1058
    %v1355 = vpack.c.b16 %v1063, %v1059
    %v1356 = vpack.c.b16 %v1064, %v1060
    %v1357 = vpack.c.b16 %v1069, %v1065
    %v1358 = vpack.c.b16 %v1070, %v1066
    %v1359 = vpack.c.b16 %v1071, %v1067
    %v1360 = vpack.c.b16 %v1072, %v1068
    %v1361 = vpack.c.b16 %v1077, %v1073
    %v1362 = vpack.c.b16 %v1078, %v1074
    %v1363 = vpack.c.b16 %v1079, %v1075
    %v1364 = vpack.c.b16 %v1080, %v1076
    %v1365 = vpack.c.b16 %v1085, %v1081
    %v1366 = vpack.c.b16 %v1086, %v1082
    %v1367 = vpack.c.b16 %v1087, %v1083
    %v1368 = vpack.c.b16 %v1088, %v1084
    %v1369 = vpack.c.b16 %v1093, %v1089
    %v1370 = vpack.c.b16 %v1094, %v1090
    %v1371 = vpack.c.b16 %v1095, %v1091
    %v1372 = vpack.c.b16 %v1096, %v1092
    %v1373 = vpack.c.b16 %v1101, %v1097
    %v1374 = vpack.c.b16 %v1102, %v1098
    %v1375 = vpack.c.b16 %v1103, %v1099
    %v1376 = vpack.c.b16 %v1104, %v1100
    %v1377 = vpack.c.b16 %v1109, %v1105
    %v1378 = vpack.c.b16 %v1110, %v1106
    %v1379 = vpack.c.b16 %v1111, %v1107
    %v1380 = vpack.c.b16 %v1112, %v1108
    %v1381 = vpack.c.b16 %v1117, %v1113
    %v1382 = vpack.c.b16 %v1118, %v1114
    %v1383 = vpack.c.b16 %v1119, %v1115
    %v1384 = vpack.c.b16 %v1120, %v1116
    %v1385 = vpack.c.b16 %v1125, %v1121
    %v1386 = vpack.c.b16 %v1126, %v1122
    %v1387 = vpack.c.b16 %v1127, %v1123
    %v1388 = vpack.c.b16 %v1128, %v1124
    %v1389 = vpack.c.b16 %v1133, %v1129
    %v1390 = vpack.c.b16 %v1134, %v1130
    %v1391 = vpack.c.b16 %v1135, %v1131
    %v1392 = vpack.c.b16 %v1136, %v1132
    %1649 = vmatprep.subr.bf16.mxu0 %v1138
    %1650 = vmatpush1.bf16.msra.mxu0 %v1137
    %1651 = vmatprep.subr.bf16.mxu0 %v1142
    %1652 = vmatpush1.bf16.msra.mxu0 %v1141
    %1653 = vmatprep.subr.bf16.mxu0 %v1146
    %1654 = vmatpush1.bf16.msra.mxu0 %v1145
    %1655 = vmatprep.subr.bf16.mxu0 %v1150
    %1656 = vmatpush1.bf16.msra.mxu0 %v1149
    %1657 = vmatprep.subr.bf16.mxu0 %v1154
    %1658 = vmatpush1.bf16.msra.mxu0 %v1153
    %1659 = vmatprep.subr.bf16.mxu0 %v1158
    %1660 = vmatpush1.bf16.msra.mxu0 %v1157
    %1661 = vmatprep.subr.bf16.mxu0 %v1162
    %1662 = vmatpush1.bf16.msra.mxu0 %v1161
    %1663 = vmatprep.subr.bf16.mxu0 %v1166
    %1664 = vmatpush1.bf16.msra.mxu0 %v1165
    %1665 = vmatprep.subr.bf16.mxu0 %v1170
    %1666 = vmatpush1.bf16.msra.mxu0 %v1169
    %1667 = vmatprep.subr.bf16.mxu0 %v1174
    %1668 = vmatpush1.bf16.msra.mxu0 %v1173
    %1669 = vmatprep.subr.bf16.mxu0 %v1178
    %1670 = vmatpush1.bf16.msra.mxu0 %v1177
    %1671 = vmatprep.subr.bf16.mxu0 %v1182
    %1672 = vmatpush1.bf16.msra.mxu0 %v1181
    %1673 = vmatprep.subr.bf16.mxu0 %v1186
    %1674 = vmatpush1.bf16.msra.mxu0 %v1185
    %1675 = vmatprep.subr.bf16.mxu0 %v1190
    %1676 = vmatpush1.bf16.msra.mxu0 %v1189
    %1677 = vmatprep.subr.bf16.mxu0 %v1194
    %1678 = vmatpush1.bf16.msra.mxu0 %v1193
    %1679 = vmatprep.subr.bf16.mxu0 %v1198
    %1680 = vmatpush1.bf16.msra.mxu0 %v1197
    %1681 = vmatprep.mubr.bf16.mxu0 %v354
    %1682 = vmatmul.mubr.bf16.gmra.mrb[0].mxu0 %v353
    %v1683 = vpop.f32.mrb[0].mxu0
    %v1684 = vadd.f32 %v324, %v1683
    %v1685 = vpop.f32.mrb[0].mxu0
    %v1686 = vadd.f32 %v328, %v1685
    %v1687 = vpop.f32.mrb[0].mxu0
    %v1688 = vpop.f32.mrb[0].mxu0
    %1689 = vdwg.mxu0
    %1690 = vmatprep.subr.bf16.mxu0 %v1202
    %1691 = vmatpush1.bf16.msra.mxu0 %v1201
    %1692 = vmatprep.subr.bf16.mxu0 %v1206
    %1693 = vmatpush1.bf16.msra.mxu0 %v1205
    %1694 = vmatprep.subr.bf16.mxu0 %v1210
    %1695 = vmatpush1.bf16.msra.mxu0 %v1209
    %1696 = vmatprep.subr.bf16.mxu0 %v1214
    %1697 = vmatpush1.bf16.msra.mxu0 %v1213
    %1698 = vmatprep.subr.bf16.mxu0 %v1218
    %1699 = vmatpush1.bf16.msra.mxu0 %v1217
    %1700 = vmatprep.subr.bf16.mxu0 %v1222
    %1701 = vmatpush1.bf16.msra.mxu0 %v1221
    %1702 = vmatprep.subr.bf16.mxu0 %v1226
    %1703 = vmatpush1.bf16.msra.mxu0 %v1225
    %1704 = vmatprep.subr.bf16.mxu0 %v1230
    %1705 = vmatpush1.bf16.msra.mxu0 %v1229
    %1706 = vmatprep.subr.bf16.mxu0 %v1234
    %1707 = vmatpush1.bf16.msra.mxu0 %v1233
    %1708 = vmatprep.subr.bf16.mxu0 %v1238
    %1709 = vmatpush1.bf16.msra.mxu0 %v1237
    %1710 = vmatprep.subr.bf16.mxu0 %v1242
    %1711 = vmatpush1.bf16.msra.mxu0 %v1241
    %1712 = vmatprep.subr.bf16.mxu0 %v1246
    %1713 = vmatpush1.bf16.msra.mxu0 %v1245
    %1714 = vmatprep.subr.bf16.mxu0 %v1250
    %1715 = vmatpush1.bf16.msra.mxu0 %v1249
    %1716 = vmatprep.subr.bf16.mxu0 %v1254
    %1717 = vmatpush1.bf16.msra.mxu0 %v1253
    %1718 = vmatprep.subr.bf16.mxu0 %v1258
    %1719 = vmatpush1.bf16.msra.mxu0 %v1257
    %1720 = vmatprep.subr.bf16.mxu0 %v1262
    %1721 = vmatpush1.bf16.msra.mxu0 %v1261
    %1722 = vmatprep.mubr.bf16.mxu0 %v356
    %1723 = vmatmul.mubr.bf16.gmra.mrb[0].mxu0 %v355
    %v1724 = vpop.f32.mrb[0].mxu0
    %v1725 = vadd.f32 %v1684, %v1724
    %v1726 = vpop.f32.mrb[0].mxu0
    %v1727 = vadd.f32 %v1686, %v1726
    %v1728 = vpop.f32.mrb[0].mxu0
    %v1729 = vpop.f32.mrb[0].mxu0
    %1730 = vdwg.mxu0
    %1731 = vmatprep.subr.bf16.mxu0 %v1266
    %1732 = vmatpush1.bf16.msra.mxu0 %v1265
    %1733 = vmatprep.subr.bf16.mxu0 %v1270
    %1734 = vmatpush1.bf16.msra.mxu0 %v1269
    %1735 = vmatprep.subr.bf16.mxu0 %v1274
    %1736 = vmatpush1.bf16.msra.mxu0 %v1273
    %1737 = vmatprep.subr.bf16.mxu0 %v1278
    %1738 = vmatpush1.bf16.msra.mxu0 %v1277
    %1739 = vmatprep.subr.bf16.mxu0 %v1282
    %1740 = vmatpush1.bf16.msra.mxu0 %v1281
    %1741 = vmatprep.subr.bf16.mxu0 %v1286
    %1742 = vmatpush1.bf16.msra.mxu0 %v1285
    %1743 = vmatprep.subr.bf16.mxu0 %v1290
    %1744 = vmatpush1.bf16.msra.mxu0 %v1289
    %1745 = vmatprep.subr.bf16.mxu0 %v1294
    %1746 = vmatpush1.bf16.msra.mxu0 %v1293
    %1747 = vmatprep.subr.bf16.mxu0 %v1298
    %1748 = vmatpush1.bf16.msra.mxu0 %v1297
    %1749 = vmatprep.subr.bf16.mxu0 %v1302
    %1750 = vmatpush1.bf16.msra.mxu0 %v1301
    %1751 = vmatprep.subr.bf16.mxu0 %v1306
    %1752 = vmatpush1.bf16.msra.mxu0 %v1305
    %1753 = vmatprep.subr.bf16.mxu0 %v1310
    %1754 = vmatpush1.bf16.msra.mxu0 %v1309
    %1755 = vmatprep.subr.bf16.mxu0 %v1314
    %1756 = vmatpush1.bf16.msra.mxu0 %v1313
    %1757 = vmatprep.subr.bf16.mxu0 %v1318
    %1758 = vmatpush1.bf16.msra.mxu0 %v1317
    %1759 = vmatprep.subr.bf16.mxu0 %v1322
    %1760 = vmatpush1.bf16.msra.mxu0 %v1321
    %1761 = vmatprep.subr.bf16.mxu0 %v1326
    %1762 = vmatpush1.bf16.msra.mxu0 %v1325
    %1763 = vmatprep.mubr.bf16.mxu0 %v358
    %1764 = vmatmul.mubr.bf16.gmra.mrb[0].mxu0 %v357
    %v1765 = vpop.f32.mrb[0].mxu0
    %v1766 = vadd.f32 %v1725, %v1765
    %v1767 = vpop.f32.mrb[0].mxu0
    %v1768 = vadd.f32 %v1727, %v1767
    %v1769 = vpop.f32.mrb[0].mxu0
    %v1770 = vpop.f32.mrb[0].mxu0
    %1771 = vdwg.mxu0
    %1772 = vmatprep.subr.bf16.mxu0 %v1330
    %1773 = vmatpush1.bf16.msra.mxu0 %v1329
    %1774 = vmatprep.subr.bf16.mxu0 %v1334
    %1775 = vmatpush1.bf16.msra.mxu0 %v1333
    %1776 = vmatprep.subr.bf16.mxu0 %v1338
    %1777 = vmatpush1.bf16.msra.mxu0 %v1337
    %1778 = vmatprep.subr.bf16.mxu0 %v1342
    %1779 = vmatpush1.bf16.msra.mxu0 %v1341
    %1780 = vmatprep.subr.bf16.mxu0 %v1346
    %1781 = vmatpush1.bf16.msra.mxu0 %v1345
    %1782 = vmatprep.subr.bf16.mxu0 %v1350
    %1783 = vmatpush1.bf16.msra.mxu0 %v1349
    %1784 = vmatprep.subr.bf16.mxu0 %v1354
    %1785 = vmatpush1.bf16.msra.mxu0 %v1353
    %1786 = vmatprep.subr.bf16.mxu0 %v1358
    %1787 = vmatpush1.bf16.msra.mxu0 %v1357
    %1788 = vmatprep.subr.bf16.mxu0 %v1362
    %1789 = vmatpush1.bf16.msra.mxu0 %v1361
    %1790 = vmatprep.subr.bf16.mxu0 %v1366
    %1791 = vmatpush1.bf16.msra.mxu0 %v1365
    %1792 = vmatprep.subr.bf16.mxu0 %v1370
    %1793 = vmatpush1.bf16.msra.mxu0 %v1369
    %1794 = vmatprep.subr.bf16.mxu0 %v1374
    %1795 = vmatpush1.bf16.msra.mxu0 %v1373
    %1796 = vmatprep.subr.bf16.mxu0 %v1378
    %1797 = vmatpush1.bf16.msra.mxu0 %v1377
    %1798 = vmatprep.subr.bf16.mxu0 %v1382
    %1799 = vmatpush1.bf16.msra.mxu0 %v1381
    %1800 = vmatprep.subr.bf16.mxu0 %v1386
    %1801 = vmatpush1.bf16.msra.mxu0 %v1385
    %1802 = vmatprep.subr.bf16.mxu0 %v1390
    %1803 = vmatpush1.bf16.msra.mxu0 %v1389
    %1804 = vmatprep.mubr.bf16.mxu0 %v360
    %1805 = vmatmul.mubr.bf16.gmra.mrb[0].mxu0 %v359
    %v1806 = vpop.f32.mrb[0].mxu0
    %v1807 = vadd.f32 %v1766, %v1806
    %v1808 = vpop.f32.mrb[0].mxu0
    %v1809 = vadd.f32 %v1768, %v1808
    %v1810 = vpop.f32.mrb[0].mxu0
    %v1811 = vpop.f32.mrb[0].mxu0
    %1812 = vdwg.mxu0
    %1813 = vmatprep.subr.bf16.mxu0 %v1140
    %1814 = vmatpush1.bf16.msra.mxu0 %v1139
    %1815 = vmatprep.subr.bf16.mxu0 %v1144
    %1816 = vmatpush1.bf16.msra.mxu0 %v1143
    %1817 = vmatprep.subr.bf16.mxu0 %v1148
    %1818 = vmatpush1.bf16.msra.mxu0 %v1147
    %1819 = vmatprep.subr.bf16.mxu0 %v1152
    %1820 = vmatpush1.bf16.msra.mxu0 %v1151
    %1821 = vmatprep.subr.bf16.mxu0 %v1156
    %1822 = vmatpush1.bf16.msra.mxu0 %v1155
    %1823 = vmatprep.subr.bf16.mxu0 %v1160
    %1824 = vmatpush1.bf16.msra.mxu0 %v1159
    %1825 = vmatprep.subr.bf16.mxu0 %v1164
    %1826 = vmatpush1.bf16.msra.mxu0 %v1163
    %1827 = vmatprep.subr.bf16.mxu0 %v1168
    %1828 = vmatpush1.bf16.msra.mxu0 %v1167
    %1829 = vmatprep.subr.bf16.mxu0 %v1172
    %1830 = vmatpush1.bf16.msra.mxu0 %v1171
    %1831 = vmatprep.subr.bf16.mxu0 %v1176
    %1832 = vmatpush1.bf16.msra.mxu0 %v1175
    %1833 = vmatprep.subr.bf16.mxu0 %v1180
    %1834 = vmatpush1.bf16.msra.mxu0 %v1179
    %1835 = vmatprep.subr.bf16.mxu0 %v1184
    %1836 = vmatpush1.bf16.msra.mxu0 %v1183
    %1837 = vmatprep.subr.bf16.mxu0 %v1188
    %1838 = vmatpush1.bf16.msra.mxu0 %v1187
    %1839 = vmatprep.subr.bf16.mxu0 %v1192
    %1840 = vmatpush1.bf16.msra.mxu0 %v1191
    %1841 = vmatprep.subr.bf16.mxu0 %v1196
    %1842 = vmatpush1.bf16.msra.mxu0 %v1195
    %1843 = vmatprep.subr.bf16.mxu0 %v1200
    %1844 = vmatpush1.bf16.msra.mxu0 %v1199
    %1845 = vmatprep.mubr.bf16.mxu0 %v354
    %1846 = vmatmul.mubr.bf16.gmra.mrb[0].mxu0 %v353
    %v1847 = vpop.f32.mrb[0].mxu0
    %v1848 = vadd.f32 %v332, %v1847
    %v1849 = vpop.f32.mrb[0].mxu0
    %v1850 = vadd.f32 %v336, %v1849
    %v1851 = vpop.f32.mrb[0].mxu0
    %v1852 = vpop.f32.mrb[0].mxu0
    %1853 = vdwg.mxu0
    %1854 = vmatprep.subr.bf16.mxu0 %v1204
    %1855 = vmatpush1.bf16.msra.mxu0 %v1203
    %1856 = vmatprep.subr.bf16.mxu0 %v1208
    %1857 = vmatpush1.bf16.msra.mxu0 %v1207
    %1858 = vmatprep.subr.bf16.mxu0 %v1212
    %1859 = vmatpush1.bf16.msra.mxu0 %v1211
    %1860 = vmatprep.subr.bf16.mxu0 %v1216
    %1861 = vmatpush1.bf16.msra.mxu0 %v1215
    %1862 = vmatprep.subr.bf16.mxu0 %v1220
    %1863 = vmatpush1.bf16.msra.mxu0 %v1219
    %1864 = vmatprep.subr.bf16.mxu0 %v1224
    %1865 = vmatpush1.bf16.msra.mxu0 %v1223
    %1866 = vmatprep.subr.bf16.mxu0 %v1228
    %1867 = vmatpush1.bf16.msra.mxu0 %v1227
    %1868 = vmatprep.subr.bf16.mxu0 %v1232
    %1869 = vmatpush1.bf16.msra.mxu0 %v1231
    %1870 = vmatprep.subr.bf16.mxu0 %v1236
    %1871 = vmatpush1.bf16.msra.mxu0 %v1235
    %1872 = vmatprep.subr.bf16.mxu0 %v1240
    %1873 = vmatpush1.bf16.msra.mxu0 %v1239
    %1874 = vmatprep.subr.bf16.mxu0 %v1244
    %1875 = vmatpush1.bf16.msra.mxu0 %v1243
    %1876 = vmatprep.subr.bf16.mxu0 %v1248
    %1877 = vmatpush1.bf16.msra.mxu0 %v1247
    %1878 = vmatprep.subr.bf16.mxu0 %v1252
    %1879 = vmatpush1.bf16.msra.mxu0 %v1251
    %1880 = vmatprep.subr.bf16.mxu0 %v1256
    %1881 = vmatpush1.bf16.msra.mxu0 %v1255
    %1882 = vmatprep.subr.bf16.mxu0 %v1260
    %1883 = vmatpush1.bf16.msra.mxu0 %v1259
    %1884 = vmatprep.subr.bf16.mxu0 %v1264
    %1885 = vmatpush1.bf16.msra.mxu0 %v1263
    %1886 = vmatprep.mubr.bf16.mxu0 %v356
    %1887 = vmatmul.mubr.bf16.gmra.mrb[0].mxu0 %v355
    %v1888 = vpop.f32.mrb[0].mxu0
    %v1889 = vadd.f32 %v1848, %v1888
    %v1890 = vpop.f32.mrb[0].mxu0
    %v1891 = vadd.f32 %v1850, %v1890
    %v1892 = vpop.f32.mrb[0].mxu0
    %v1893 = vpop.f32.mrb[0].mxu0
    %1894 = vdwg.mxu0
    %1895 = vmatprep.subr.bf16.mxu0 %v1268
    %1896 = vmatpush1.bf16.msra.mxu0 %v1267
    %1897 = vmatprep.subr.bf16.mxu0 %v1272
    %1898 = vmatpush1.bf16.msra.mxu0 %v1271
    %1899 = vmatprep.subr.bf16.mxu0 %v1276
    %1900 = vmatpush1.bf16.msra.mxu0 %v1275
    %1901 = vmatprep.subr.bf16.mxu0 %v1280
    %1902 = vmatpush1.bf16.msra.mxu0 %v1279
    %1903 = vmatprep.subr.bf16.mxu0 %v1284
    %1904 = vmatpush1.bf16.msra.mxu0 %v1283
    %1905 = vmatprep.subr.bf16.mxu0 %v1288
    %1906 = vmatpush1.bf16.msra.mxu0 %v1287
    %1907 = vmatprep.subr.bf16.mxu0 %v1292
    %1908 = vmatpush1.bf16.msra.mxu0 %v1291
    %1909 = vmatprep.subr.bf16.mxu0 %v1296
    %1910 = vmatpush1.bf16.msra.mxu0 %v1295
    %1911 = vmatprep.subr.bf16.mxu0 %v1300
    %1912 = vmatpush1.bf16.msra.mxu0 %v1299
    %1913 = vmatprep.subr.bf16.mxu0 %v1304
    %1914 = vmatpush1.bf16.msra.mxu0 %v1303
    %1915 = vmatprep.subr.bf16.mxu0 %v1308
    %1916 = vmatpush1.bf16.msra.mxu0 %v1307
    %1917 = vmatprep.subr.bf16.mxu0 %v1312
    %1918 = vmatpush1.bf16.msra.mxu0 %v1311
    %1919 = vmatprep.subr.bf16.mxu0 %v1316
    %1920 = vmatpush1.bf16.msra.mxu0 %v1315
    %1921 = vmatprep.subr.bf16.mxu0 %v1320
    %1922 = vmatpush1.bf16.msra.mxu0 %v1319
    %1923 = vmatprep.subr.bf16.mxu0 %v1324
    %1924 = vmatpush1.bf16.msra.mxu0 %v1323
    %1925 = vmatprep.subr.bf16.mxu0 %v1328
    %1926 = vmatpush1.bf16.msra.mxu0 %v1327
    %1927 = vmatprep.mubr.bf16.mxu0 %v358
    %1928 = vmatmul.mubr.bf16.gmra.mrb[0].mxu0 %v357
    %v1929 = vpop.f32.mrb[0].mxu0
    %v1930 = vadd.f32 %v1889, %v1929
    %v1931 = vpop.f32.mrb[0].mxu0
    %v1932 = vadd.f32 %v1891, %v1931
    %v1933 = vpop.f32.mrb[0].mxu0
    %v1934 = vpop.f32.mrb[0].mxu0
    %1935 = vdwg.mxu0
    %1936 = vmatprep.subr.bf16.mxu0 %v1332
    %1937 = vmatpush1.bf16.msra.mxu0 %v1331
    %1938 = vmatprep.subr.bf16.mxu0 %v1336
    %1939 = vmatpush1.bf16.msra.mxu0 %v1335
    %1940 = vmatprep.subr.bf16.mxu0 %v1340
    %1941 = vmatpush1.bf16.msra.mxu0 %v1339
    %1942 = vmatprep.subr.bf16.mxu0 %v1344
    %1943 = vmatpush1.bf16.msra.mxu0 %v1343
    %1944 = vmatprep.subr.bf16.mxu0 %v1348
    %1945 = vmatpush1.bf16.msra.mxu0 %v1347
    %1946 = vmatprep.subr.bf16.mxu0 %v1352
    %1947 = vmatpush1.bf16.msra.mxu0 %v1351
    %1948 = vmatprep.subr.bf16.mxu0 %v1356
    %1949 = vmatpush1.bf16.msra.mxu0 %v1355
    %1950 = vmatprep.subr.bf16.mxu0 %v1360
    %1951 = vmatpush1.bf16.msra.mxu0 %v1359
    %1952 = vmatprep.subr.bf16.mxu0 %v1364
    %1953 = vmatpush1.bf16.msra.mxu0 %v1363
    %1954 = vmatprep.subr.bf16.mxu0 %v1368
    %1955 = vmatpush1.bf16.msra.mxu0 %v1367
    %1956 = vmatprep.subr.bf16.mxu0 %v1372
    %1957 = vmatpush1.bf16.msra.mxu0 %v1371
    %1958 = vmatprep.subr.bf16.mxu0 %v1376
    %1959 = vmatpush1.bf16.msra.mxu0 %v1375
    %1960 = vmatprep.subr.bf16.mxu0 %v1380
    %1961 = vmatpush1.bf16.msra.mxu0 %v1379
    %1962 = vmatprep.subr.bf16.mxu0 %v1384
    %1963 = vmatpush1.bf16.msra.mxu0 %v1383
    %1964 = vmatprep.subr.bf16.mxu0 %v1388
    %1965 = vmatpush1.bf16.msra.mxu0 %v1387
    %1966 = vmatprep.subr.bf16.mxu0 %v1392
    %1967 = vmatpush1.bf16.msra.mxu0 %v1391
    %1968 = vmatprep.mubr.bf16.mxu0 %v360
    %1969 = vmatmul.mubr.bf16.gmra.mrb[0].mxu0 %v359
    %v1970 = vpop.f32.mrb[0].mxu0
    %v1971 = vadd.f32 %v1930, %v1970
    %v1972 = vpop.f32.mrb[0].mxu0
    %v1973 = vadd.f32 %v1932, %v1972
    %v1974 = vpop.f32.mrb[0].mxu0
    %v1975 = vpop.f32.mrb[0].mxu0
    %1976 = vdwg.mxu0
    %v1977 = vxor.u32 %v1971, 2147483648
    %v1978 = vxor.u32 %v1973, 2147483648
    %v1979 = vmul.f32 %v1977, 1.442695
    %v1980 = vpow.pop %v1979
    %v1981 = vmul.f32 %v1978, 1.442695
    %v1982 = vpow.pop %v1981
    %v1983 = vadd.f32 %v1980, 1.0
    %v1984 = vadd.f32 %v1982, 1.0
    %v1985 = vrcp.pop %v1983
    %v1986 = vmul.f32 1.0, %v1985
    %v1987 = vrcp.pop %v1984
    %v1988 = vmul.f32 1.0, %v1987
    %v1989 = vmul.f32 %v1807, %v1986
    %v1990 = vmul.f32 %v1809, %v1988
    %v1991 = vld [vmem:[%s3] sm:$0xff]
    %v1992 = vmul.f32 %v1991, %v1990
    %v1993 = vadd.f32 %v1989, %v1992
    %1994 = vst [vmem:[#allocation8] sm:$0xff] %v1993
    %1995 = vst [vmem:[#allocation9] sm:$0xff] %v1989
    %1996 = vst [vmem:[#allocation11] sm:$0xff] %v1990
    // Predicated region
    $region30: #{tpu_custom_call.1} parent=1 // pred_check
      _
    $region31: #{tpu_custom_call.1} parent=1 // pred_check_branch
      %1998 = sbr.rel (0) target = $region33
    $region32: #{tpu_custom_call.1} parent=1 // pred_region
      %s2000 = ssub.s32 128, 128
      %2001 = vsyncadd [#allocation4], %s2000
      %s2003 = sshll.u32 [#allocation8], 4
      %s2004 = int_to_ptr.vmem [resolvable:$true] %s2003
      %2006 = dma.vmem_to_hbm [thread:$0]  %s2004, 128, %s4, [#allocation4]
    $region33: #{tpu_custom_call.1} parent=1 // pred_fallthru
      _
    // Predicated region
    $region34: #{tpu_custom_call.1} parent=1 // pred_check
      _
    $region35: #{tpu_custom_call.1} parent=1 // pred_check_branch
      %2008 = sbr.rel (0) target = $region37
    $region36: #{tpu_custom_call.1} parent=1 // pred_region
      %s2010 = ssub.s32 128, 128
      %2011 = vsyncadd [#allocation10], %s2010
      %s2013 = sshll.u32 [#allocation9], 4
      %s2014 = int_to_ptr.vmem [resolvable:$true] %s2013
      %2016 = dma.vmem_to_hbm [thread:$0]  %s2014, 128, %s5, [#allocation10]
    $region37: #{tpu_custom_call.1} parent=1 // pred_fallthru
      _
    // Predicated region
    $region38: #{tpu_custom_call.1} parent=1 // pred_check
      _
    $region39: #{tpu_custom_call.1} parent=1 // pred_check_branch
      %2018 = sbr.rel (0) target = $region41
    $region40: #{tpu_custom_call.1} parent=1 // pred_region
      %s2020 = ssub.s32 128, 128
      %2021 = vsyncadd [#allocation10], %s2020
      %s2023 = sshll.u32 [#allocation11], 4
      %s2024 = int_to_ptr.vmem [resolvable:$true] %s2023
      %2026 = dma.vmem_to_hbm [thread:$0]  %s2024, 128, %s6, [#allocation10]
    $region41: #{tpu_custom_call.1} parent=1 // pred_fallthru
      _
    // Predicated region
    $region42: #{tpu_custom_call.1} parent=1 // pred_check
      _
    $region43: #{tpu_custom_call.1} parent=1 // pred_check_branch
      %2028 = sbr.rel (0) target = $region45
    $region44: #{tpu_custom_call.1} parent=1 // pred_region
      %2029 = dma.done [#allocation4], 128
    $region45: #{tpu_custom_call.1} parent=1 // pred_fallthru
      _
    // Predicated region
    $region46: #{tpu_custom_call.1} parent=1 // pred_check
      _
    $region47: #{tpu_custom_call.1} parent=1 // pred_check_branch
      %2031 = sbr.rel (0) target = $region49
    $region48: #{tpu_custom_call.1} parent=1 // pred_region
      %2032 = dma.done [#allocation10], 128
    $region49: #{tpu_custom_call.1} parent=1 // pred_fallthru
      _
    // Predicated region
    $region50: #{tpu_custom_call.1} parent=1 // pred_check
      _
    $region51: #{tpu_custom_call.1} parent=1 // pred_check_branch
      %2034 = sbr.rel (0) target = $region53
    $region52: #{tpu_custom_call.1} parent=1 // pred_region
      %2035 = dma.done [#allocation10], 128
    $region53: #{tpu_custom_call.1} parent=1 // pred_fallthru
      _
    %2036 = vsyncpa [#allocation3], 1
    %2037 = vsyncpa [#allocation6], 1
    %2038 = vsyncpa [#allocation4], 1
    %2039 = vsyncpa [#allocation10], 1

</llo_original>
